<compile_context>
chip_gen: v7x
topology: tpu7x:2x2x1
jax: 0.10.0
libtpu: 0.0.40
codegen_flags: <defaults>
</compile_context>

<pallas_src>
import jax
import jax.numpy as jnp
import numpy as np
from jax.experimental import pallas as pl
from jax.experimental.pallas import tpu as pltpu


def _layer_norm(v, g, b, eps=1e-5):
    mu = jnp.mean(v, axis=-1, keepdims=True)
    var = jnp.mean(jnp.square(v - mu), axis=-1, keepdims=True)
    return (v - mu) * jax.lax.rsqrt(var + eps) * g + b       # rsqrt -> EUP, multiply not divide


def transformer_embedder(tokens, params, *, heads):
    """tokens: (B, S) int32  ->  embeddings z: (B, S, D) f32."""
    B, S = tokens.shape
    tok_emb = params["tok_emb"]                               # (V, D)  stays in the wrapper (HBM)
    D = tok_emb.shape[1]
    L, _, three_inner = params["wqkv"].shape
    inner = three_inner // 3
    dh = inner // heads
    dff = params["w1"].shape[2]
    scale = dh ** -0.5
    cdt = params["wqkv"].dtype                                # bf16 compute dtype for weight matmuls

    # Embedding gather + positional add in the wrapper (review: removes the serial in-kernel
    # gather and keeps the (V, D) table out of VMEM entirely).
    x0 = (tok_emb[tokens] + params["pos_emb"][:S][None]).astype(jnp.float32)   # (B, S, D)

    def kernel(x0_ref,
               ln1g_ref, ln1b_ref, wqkv_ref, wo_ref, bo_ref,
               ln2g_ref, ln2b_ref, w1_ref, b1_ref, w2_ref, b2_ref,
               lnfg_ref, lnfb_ref,
               out_ref,                                       # VMEM (S, D), written at l == L-1
               x_scr):                                        # VMEM (S, D) f32 carry across layers
        l = pl.program_id(1)

        @pl.when(l == 0)
        def _():
            x_scr[...] = x0_ref[...]

        x = x_scr[...]

        # ---- multi-head self-attention block (pre-norm) ------------------------------
        h = _layer_norm(x, ln1g_ref[...], ln1b_ref[...])
        qkv = jnp.dot(h.astype(cdt), wqkv_ref[...],
                      preferred_element_type=jnp.float32)      # (S, 3*inner), one fused MXU push
        q = qkv[:, 0 * inner:1 * inner].reshape(S, heads, dh)
        k = qkv[:, 1 * inner:2 * inner].reshape(S, heads, dh)
        v = qkv[:, 2 * inner:3 * inner].reshape(S, heads, dh)

        sc = jnp.einsum("qhd,khd->hqk", q, k,
                        preferred_element_type=jnp.float32) * scale          # (heads, S, S)
        sc = sc - jnp.max(sc, axis=-1, keepdims=True)
        p = jnp.exp(sc)
        p = p * pl.reciprocal(jnp.sum(p, axis=-1, keepdims=True), approx=True)
        o = jnp.einsum("hqk,khd->qhd", p, v,
                       preferred_element_type=jnp.float32).reshape(S, inner)  # (S, inner)

        attn = jnp.dot(o.astype(cdt), wo_ref[...],
                       preferred_element_type=jnp.float32) + bo_ref[...]
        x = x + attn

        # ---- feed-forward block (pre-norm) --------------------------------------------
        h = _layer_norm(x, ln2g_ref[...], ln2b_ref[...])
        u = jnp.dot(h.astype(cdt), w1_ref[...],
                    preferred_element_type=jnp.float32) + b1_ref[...]
        u = jax.nn.gelu(u, approximate=True)
        f = jnp.dot(u.astype(cdt), w2_ref[...],
                    preferred_element_type=jnp.float32) + b2_ref[...]
        x = x + f

        x_scr[...] = x

        # ---- final LayerNorm, one lane-dense (S, D) store per sequence ----------------
        @pl.when(l == pl.num_programs(1) - 1)
        def _():
            out_ref[...] = _layer_norm(x, lnfg_ref[...], lnfb_ref[...])

    batch_map = lambda b, l: (b, 0, 0)     # changes with b only (stays resident across layers)
    layer_map = lambda b, l: (l, 0, 0)     # streamed per layer (double-buffered by the pipeline)
    const_map = lambda b, l: (0, 0)        # replicated

    out = pl.pallas_call(
        kernel,
        out_shape=jax.ShapeDtypeStruct((B, S, D), jnp.float32),
        grid_spec=pltpu.PrefetchScalarGridSpec(
            num_scalar_prefetch=0,
            grid=(B, L),
            in_specs=[
                pl.BlockSpec((pl.Squeezed(), S, D), batch_map),            # x0
                pl.BlockSpec((pl.Squeezed(), 1, D), layer_map),            # ln1_g
                pl.BlockSpec((pl.Squeezed(), 1, D), layer_map),            # ln1_b
                pl.BlockSpec((pl.Squeezed(), D, 3 * inner), layer_map),    # wqkv (fused)
                pl.BlockSpec((pl.Squeezed(), inner, D), layer_map),        # wo
                pl.BlockSpec((pl.Squeezed(), 1, D), layer_map),            # bo
                pl.BlockSpec((pl.Squeezed(), 1, D), layer_map),            # ln2_g
                pl.BlockSpec((pl.Squeezed(), 1, D), layer_map),            # ln2_b
                pl.BlockSpec((pl.Squeezed(), D, dff), layer_map),          # w1
                pl.BlockSpec((pl.Squeezed(), 1, dff), layer_map),          # b1
                pl.BlockSpec((pl.Squeezed(), dff, D), layer_map),          # w2
                pl.BlockSpec((pl.Squeezed(), 1, D), layer_map),            # b2
                pl.BlockSpec((1, D), const_map),                           # lnf_g
                pl.BlockSpec((1, D), const_map),                           # lnf_b
            ],
            out_specs=pl.BlockSpec((pl.Squeezed(), S, D), batch_map),
            scratch_shapes=[pltpu.VMEM((S, D), jnp.float32)],
        ),
        compiler_params=pltpu.CompilerParams(
            dimension_semantics=("parallel", "arbitrary"),
            vmem_limit_bytes=48 * 1024 * 1024,
        ),
    )(x0,
      params["ln1_g"], params["ln1_b"], params["wqkv"], params["wo"], params["bo"],
      params["ln2_g"], params["ln2_b"], params["w1"], params["b1"], params["w2"], params["b2"],
      params["lnf_g"], params["lnf_b"])
    return out                                                           # (B, S, D)


def transformer_embedder_ref(tokens, params, *, heads):
    """Pure-JAX reference mirroring the PyTorch forward (same bf16 weight-matmul casting)."""
    B, S = tokens.shape
    L, D, three_inner = params["wqkv"].shape
    inner = three_inner // 3
    dh = inner // heads
    cdt = params["wqkv"].dtype
    x = (params["tok_emb"][tokens] + params["pos_emb"][:S][None]).astype(jnp.float32)
    for l in range(L):
        h = _layer_norm(x, params["ln1_g"][l], params["ln1_b"][l])
        qkv = jnp.dot(h.astype(cdt), params["wqkv"][l], preferred_element_type=jnp.float32)
        q = qkv[..., 0 * inner:1 * inner].reshape(B, S, heads, dh)
        k = qkv[..., 1 * inner:2 * inner].reshape(B, S, heads, dh)
        v = qkv[..., 2 * inner:3 * inner].reshape(B, S, heads, dh)
        sc = jnp.einsum("bihd,bjhd->bhij", q, k) * dh ** -0.5
        p = jax.nn.softmax(sc, axis=-1)
        o = jnp.einsum("bhij,bjhd->bihd", p, v).reshape(B, S, inner)
        x = x + (jnp.dot(o.astype(cdt), params["wo"][l],
                         preferred_element_type=jnp.float32) + params["bo"][l])
        h = _layer_norm(x, params["ln2_g"][l], params["ln2_b"][l])
        u = jax.nn.gelu(jnp.dot(h.astype(cdt), params["w1"][l],
                                preferred_element_type=jnp.float32) + params["b1"][l],
                        approximate=True)
        x = x + (jnp.dot(u.astype(cdt), params["w2"][l],
                         preferred_element_type=jnp.float32) + params["b2"][l])
    return _layer_norm(x, params["lnf_g"], params["lnf_b"])


if __name__ == "__main__":
    # Small but lane-dense shapes: D = 128 (one full lane width); x-transformers Attention
    # defaults heads=8, dim_head=64 -> inner = 512; FF inner = 4*D = 512.
    B, S = 2, 8
    vocab_size, max_seq_len = 100, 16
    n_embed, n_layer = 128, 2
    heads, dim_head = 8, 64
    inner = heads * dim_head
    dff = 4 * n_embed

    root = jax.random.PRNGKey(0)
    ks = jax.random.split(root, 16)

    tokens = jax.random.randint(ks[0], (B, S), 0, vocab_size, dtype=jnp.int32)

    def nrm(key, shape, s=0.1, dtype=jnp.float32):
        return (s * jax.random.normal(key, shape)).astype(dtype)

    L = n_layer
    params = {
        "tok_emb": nrm(ks[1], (vocab_size, n_embed), 1.0),
        "pos_emb": nrm(ks[2], (max_seq_len, n_embed), 0.02),
        "ln1_g": jnp.ones((L, 1, n_embed), jnp.float32) + nrm(ks[12], (L, 1, n_embed)),
        "ln1_b": nrm(ks[13], (L, 1, n_embed)),
        # fused Q/K/V projection (bias-free in x-transformers), bf16 for the MXU path
        "wqkv": nrm(ks[3], (L, n_embed, 3 * inner), dtype=jnp.bfloat16),
        "wo": nrm(ks[6], (L, inner, n_embed), dtype=jnp.bfloat16),
        "bo": nrm(ks[7], (L, 1, n_embed)),
        "ln2_g": jnp.ones((L, 1, n_embed), jnp.float32) + nrm(ks[14], (L, 1, n_embed)),
        "ln2_b": nrm(ks[15], (L, 1, n_embed)),
        "w1": nrm(ks[8], (L, n_embed, dff), dtype=jnp.bfloat16),
        "b1": nrm(ks[9], (L, 1, dff)),
        "w2": nrm(ks[10], (L, dff, n_embed), dtype=jnp.bfloat16),
        "b2": nrm(ks[11], (L, 1, n_embed)),
        "lnf_g": jnp.ones((1, n_embed), jnp.float32),
        "lnf_b": jnp.zeros((1, n_embed), jnp.float32),
    }

    out = transformer_embedder(tokens, params, heads=heads)
    out = jax.block_until_ready(out)

    ref = transformer_embedder_ref(tokens, params, heads=heads)
    np.testing.assert_allclose(np.asarray(out), np.asarray(ref), rtol=2e-2, atol=2e-2)
    assert out.shape == (B, S, n_embed)
    print("KERNEL_OK")
</pallas_src>

<mosaic_0001>
module attributes {stable_mosaic.version = 11 : i64} {
  func.func @kernel(%arg0: i32, %arg1: i32, %arg2: memref<1x8x128xf32, #tpu.memory_space<vmem>>, %arg3: memref<1x1x128xf32, #tpu.memory_space<vmem>>, %arg4: memref<1x1x128xf32, #tpu.memory_space<vmem>>, %arg5: memref<1x128x1536xbf16, #tpu.memory_space<vmem>>, %arg6: memref<1x512x128xbf16, #tpu.memory_space<vmem>>, %arg7: memref<1x1x128xf32, #tpu.memory_space<vmem>>, %arg8: memref<1x1x128xf32, #tpu.memory_space<vmem>>, %arg9: memref<1x1x128xf32, #tpu.memory_space<vmem>>, %arg10: memref<1x128x512xbf16, #tpu.memory_space<vmem>>, %arg11: memref<1x1x512xf32, #tpu.memory_space<vmem>>, %arg12: memref<1x512x128xbf16, #tpu.memory_space<vmem>>, %arg13: memref<1x1x128xf32, #tpu.memory_space<vmem>>, %arg14: memref<1x128xf32, #tpu.memory_space<vmem>>, %arg15: memref<1x128xf32, #tpu.memory_space<vmem>>, %arg16: memref<1x8x128xf32, #tpu.memory_space<vmem>>, %arg17: memref<8x128xf32, #tpu.memory_space<vmem>>) attributes {dimension_semantics = [#tpu.dimension_semantics<parallel>, #tpu.dimension_semantics<arbitrary>], iteration_bounds = array<i64: 2, 2>, scalar_prefetch = 0 : i64, scratch_operands = 1 : i64, tpu.core_type = #tpu.core_type<tc>, window_params = [{transform_indices = @transform_0, window_bounds = array<i64: 1, 8, 128>}, {transform_indices = @transform_1, window_bounds = array<i64: 1, 1, 128>}, {transform_indices = @transform_2, window_bounds = array<i64: 1, 1, 128>}, {transform_indices = @transform_3, window_bounds = array<i64: 1, 128, 1536>}, {transform_indices = @transform_4, window_bounds = array<i64: 1, 512, 128>}, {transform_indices = @transform_5, window_bounds = array<i64: 1, 1, 128>}, {transform_indices = @transform_6, window_bounds = array<i64: 1, 1, 128>}, {transform_indices = @transform_7, window_bounds = array<i64: 1, 1, 128>}, {transform_indices = @transform_8, window_bounds = array<i64: 1, 128, 512>}, {transform_indices = @transform_9, window_bounds = array<i64: 1, 1, 512>}, {transform_indices = @transform_10, window_bounds = array<i64: 1, 512, 128>}, {transform_indices = @transform_11, window_bounds = array<i64: 1, 1, 128>}, {pipeline_mode = #tpu.pipeline_mode<synchronous>, transform_indices = @transform_12, window_bounds = array<i64: 1, 128>}, {pipeline_mode = #tpu.pipeline_mode<synchronous>, transform_indices = @transform_13, window_bounds = array<i64: 1, 128>}, {transform_indices = @transform_14, window_bounds = array<i64: 1, 8, 128>}]} {
    %c0_i32 = arith.constant 0 : i32
    %0 = arith.cmpi eq, %arg1, %c0_i32 : i32
    %1 = arith.extui %0 : i1 to i32
    %c0_i32_0 = arith.constant 0 : i32
    %2 = arith.cmpi ne, %1, %c0_i32_0 : i32
    scf.if %2 {
      %c0_60 = arith.constant 0 : index
      %c0_61 = arith.constant 0 : index
      %c0_62 = arith.constant 0 : index
      %125 = vector.load %arg2[%c0_60, %c0_61, %c0_62] : memref<1x8x128xf32, #tpu.memory_space<vmem>>, vector<1x8x128xf32>
      %126 = vector.shape_cast %125 : vector<1x8x128xf32> to vector<8x128xf32>
      %c0_63 = arith.constant 0 : index
      %c0_64 = arith.constant 0 : index
      %127 = vector.load %arg17[%c0_63, %c0_64] : memref<8x128xf32, #tpu.memory_space<vmem>>, vector<8x128xf32>
      tpu.vector_store %arg17[%c0_63, %c0_64], %126 {strides = array<i32>} : memref<8x128xf32, #tpu.memory_space<vmem>>, vector<8x128xf32>,
    } else {
    }
    %c0 = arith.constant 0 : index
    %c0_1 = arith.constant 0 : index
    %3 = vector.load %arg17[%c0, %c0_1] : memref<8x128xf32, #tpu.memory_space<vmem>>, vector<8x128xf32>
    %c0_2 = arith.constant 0 : index
    %c0_3 = arith.constant 0 : index
    %c0_4 = arith.constant 0 : index
    %4 = vector.load %arg3[%c0_2, %c0_3, %c0_4] : memref<1x1x128xf32, #tpu.memory_space<vmem>>, vector<1x1x128xf32>
    %5 = vector.shape_cast %4 : vector<1x1x128xf32> to vector<1x128xf32>
    %c0_5 = arith.constant 0 : index
    %c0_6 = arith.constant 0 : index
    %c0_7 = arith.constant 0 : index
    %6 = vector.load %arg4[%c0_5, %c0_6, %c0_7] : memref<1x1x128xf32, #tpu.memory_space<vmem>>, vector<1x1x128xf32>
    %7 = vector.shape_cast %6 : vector<1x1x128xf32> to vector<1x128xf32>
    %cst = arith.constant dense<0.000000e+00> : vector<8xf32>
    %8 = vector.multi_reduction <add>, %3, %cst [1] : vector<8x128xf32> to vector<8xf32>
    %9 = vector.shape_cast %8 : vector<8xf32> to vector<8x1xf32>
    %cst_8 = arith.constant 1.280000e+02 : f32
    %10 = vector.broadcast %cst_8 : f32 to vector<8x1xf32>
    %11 = arith.divf %9, %10 : vector<8x1xf32>
    %12 = vector.broadcast %11 : vector<8x1xf32> to vector<8x128xf32>
    %13 = arith.subf %3, %12 : vector<8x128xf32>
    %14 = arith.mulf %13, %13 : vector<8x128xf32>
    %cst_9 = arith.constant dense<0.000000e+00> : vector<8xf32>
    %15 = vector.multi_reduction <add>, %14, %cst_9 [1] : vector<8x128xf32> to vector<8xf32>
    %16 = vector.shape_cast %15 : vector<8xf32> to vector<8x1xf32>
    %cst_10 = arith.constant 1.280000e+02 : f32
    %17 = vector.broadcast %cst_10 : f32 to vector<8x1xf32>
    %18 = arith.divf %16, %17 : vector<8x1xf32>
    %19 = vector.broadcast %11 : vector<8x1xf32> to vector<8x128xf32>
    %20 = arith.subf %3, %19 : vector<8x128xf32>
    %cst_11 = arith.constant 9.99999974E-6 : f32
    %21 = vector.broadcast %cst_11 : f32 to vector<8x1xf32>
    %22 = arith.addf %18, %21 : vector<8x1xf32>
    %23 = math.rsqrt %22 : vector<8x1xf32>
    %24 = vector.broadcast %23 : vector<8x1xf32> to vector<8x128xf32>
    %25 = arith.mulf %20, %24 : vector<8x128xf32>
    %26 = vector.broadcast %5 : vector<1x128xf32> to vector<8x128xf32>
    %27 = arith.mulf %25, %26 : vector<8x128xf32>
    %28 = vector.broadcast %7 : vector<1x128xf32> to vector<8x128xf32>
    %29 = arith.addf %27, %28 : vector<8x128xf32>
    %30 = arith.truncf %29 : vector<8x128xf32> to vector<8x128xbf16>
    %c0_12 = arith.constant 0 : index
    %c0_13 = arith.constant 0 : index
    %c0_14 = arith.constant 0 : index
    %31 = vector.load %arg5[%c0_12, %c0_13, %c0_14] : memref<1x128x1536xbf16, #tpu.memory_space<vmem>>, vector<1x128x1536xbf16>
    %32 = vector.shape_cast %31 : vector<1x128x1536xbf16> to vector<128x1536xbf16>
    %cst_15 = arith.constant dense<0.000000e+00> : vector<8x1536xf32>
    %33 = tpu.matmul %30, %32, %cst_15 {dimension_numbers = #tpu.dot_dimension_numbers<[1], [0], [0], [1], [0, 0, 1, 1], [], []>} : vector<8x128xbf16>, vector<128x1536xbf16>, vector<8x1536xf32> -> vector<8x1536xf32>
    %34 = vector.extract_strided_slice %33 {offsets = [0, 0], sizes = [8, 512], strides = [1, 1]} : vector<8x1536xf32> to vector<8x512xf32>
    %35 = vector.shape_cast %34 : vector<8x512xf32> to vector<8x8x64xf32>
    %36 = vector.extract_strided_slice %33 {offsets = [0, 512], sizes = [8, 512], strides = [1, 1]} : vector<8x1536xf32> to vector<8x512xf32>
    %37 = vector.shape_cast %36 : vector<8x512xf32> to vector<8x8x64xf32>
    %38 = vector.extract_strided_slice %33 {offsets = [0, 1024], sizes = [8, 512], strides = [1, 1]} : vector<8x1536xf32> to vector<8x512xf32>
    %39 = vector.shape_cast %38 : vector<8x512xf32> to vector<8x8x64xf32>
    "tpu.trace_start"() <{level = 10 : i32, message = "qhd,khd->hqk"}> : () -> ()
    %cst_16 = arith.constant dense<0.000000e+00> : vector<8x8x8xf32>
    %40 = tpu.matmul %35, %37, %cst_16 {dimension_numbers = #tpu.dot_dimension_numbers<[2], [2], [0], [0], [0, 1, 0, 0, 1, 0], [1], [1]>} : vector<8x8x64xf32>, vector<8x8x64xf32>, vector<8x8x8xf32> -> vector<8x8x8xf32>
    "tpu.trace_stop"() : () -> ()
    %cst_17 = arith.constant 1.250000e-01 : f32
    %41 = vector.broadcast %cst_17 : f32 to vector<8x8x8xf32>
    %42 = arith.mulf %40, %41 : vector<8x8x8xf32>
    %cst_18 = arith.constant dense<0xFF800000> : vector<8x8xf32>
    %43 = vector.multi_reduction <maximumf>, %42, %cst_18 [2] : vector<8x8x8xf32> to vector<8x8xf32>
    %44 = vector.shape_cast %43 : vector<8x8xf32> to vector<8x8x1xf32>
    %45 = vector.broadcast %44 : vector<8x8x1xf32> to vector<8x8x8xf32>
    %46 = arith.subf %42, %45 : vector<8x8x8xf32>
    %47 = math.exp %46 : vector<8x8x8xf32>
    %cst_19 = arith.constant dense<0.000000e+00> : vector<8x8xf32>
    %48 = vector.multi_reduction <add>, %47, %cst_19 [2] : vector<8x8x8xf32> to vector<8x8xf32>
    %49 = vector.shape_cast %48 : vector<8x8xf32> to vector<8x8x1xf32>
    %50 = tpu.reciprocal %49 {approx = true} : vector<8x8x1xf32> -> vector<8x8x1xf32>
    %51 = vector.broadcast %50 : vector<8x8x1xf32> to vector<8x8x8xf32>
    %52 = arith.mulf %47, %51 : vector<8x8x8xf32>
    "tpu.trace_start"() <{level = 10 : i32, message = "hqk,khd->qhd"}> : () -> ()
    %cst_20 = arith.constant dense<0.000000e+00> : vector<8x64x8xf32>
    %53 = tpu.matmul %39, %52, %cst_20 {dimension_numbers = #tpu.dot_dimension_numbers<[0], [2], [2], [1], [0, 1, 0, 2, 1, 1], [1], [0]>} : vector<8x8x64xf32>, vector<8x8x8xf32>, vector<8x64x8xf32> -> vector<8x64x8xf32>
    %54 = tpu.transpose %53, [2, 0, 1] : vector<8x64x8xf32> -> vector<8x8x64xf32>
    "tpu.trace_stop"() : () -> ()
    %55 = vector.shape_cast %54 : vector<8x8x64xf32> to vector<8x512xf32>
    %56 = arith.truncf %55 : vector<8x512xf32> to vector<8x512xbf16>
    %c0_21 = arith.constant 0 : index
    %c0_22 = arith.constant 0 : index
    %c0_23 = arith.constant 0 : index
    %57 = vector.load %arg6[%c0_21, %c0_22, %c0_23] : memref<1x512x128xbf16, #tpu.memory_space<vmem>>, vector<1x512x128xbf16>
    %58 = vector.shape_cast %57 : vector<1x512x128xbf16> to vector<512x128xbf16>
    %cst_24 = arith.constant dense<0.000000e+00> : vector<8x128xf32>
    %59 = tpu.matmul %56, %58, %cst_24 {dimension_numbers = #tpu.dot_dimension_numbers<[1], [0], [0], [1], [0, 0, 1, 1], [], []>} : vector<8x512xbf16>, vector<512x128xbf16>, vector<8x128xf32> -> vector<8x128xf32>
    %c0_25 = arith.constant 0 : index
    %c0_26 = arith.constant 0 : index
    %c0_27 = arith.constant 0 : index
    %60 = vector.load %arg7[%c0_25, %c0_26, %c0_27] : memref<1x1x128xf32, #tpu.memory_space<vmem>>, vector<1x1x128xf32>
    %61 = vector.shape_cast %60 : vector<1x1x128xf32> to vector<1x128xf32>
    %62 = vector.broadcast %61 : vector<1x128xf32> to vector<8x128xf32>
    %63 = arith.addf %59, %62 : vector<8x128xf32>
    %64 = arith.addf %3, %63 : vector<8x128xf32>
    %c0_28 = arith.constant 0 : index
    %c0_29 = arith.constant 0 : index
    %c0_30 = arith.constant 0 : index
    %65 = vector.load %arg8[%c0_28, %c0_29, %c0_30] : memref<1x1x128xf32, #tpu.memory_space<vmem>>, vector<1x1x128xf32>
    %66 = vector.shape_cast %65 : vector<1x1x128xf32> to vector<1x128xf32>
    %c0_31 = arith.constant 0 : index
    %c0_32 = arith.constant 0 : index
    %c0_33 = arith.constant 0 : index
    %67 = vector.load %arg9[%c0_31, %c0_32, %c0_33] : memref<1x1x128xf32, #tpu.memory_space<vmem>>, vector<1x1x128xf32>
    %68 = vector.shape_cast %67 : vector<1x1x128xf32> to vector<1x128xf32>
    %cst_34 = arith.constant dense<0.000000e+00> : vector<8xf32>
    %69 = vector.multi_reduction <add>, %64, %cst_34 [1] : vector<8x128xf32> to vector<8xf32>
    %70 = vector.shape_cast %69 : vector<8xf32> to vector<8x1xf32>
    %cst_35 = arith.constant 1.280000e+02 : f32
    %71 = vector.broadcast %cst_35 : f32 to vector<8x1xf32>
    %72 = arith.divf %70, %71 : vector<8x1xf32>
    %73 = vector.broadcast %72 : vector<8x1xf32> to vector<8x128xf32>
    %74 = arith.subf %64, %73 : vector<8x128xf32>
    %75 = arith.mulf %74, %74 : vector<8x128xf32>
    %cst_36 = arith.constant dense<0.000000e+00> : vector<8xf32>
    %76 = vector.multi_reduction <add>, %75, %cst_36 [1] : vector<8x128xf32> to vector<8xf32>
    %77 = vector.shape_cast %76 : vector<8xf32> to vector<8x1xf32>
    %cst_37 = arith.constant 1.280000e+02 : f32
    %78 = vector.broadcast %cst_37 : f32 to vector<8x1xf32>
    %79 = arith.divf %77, %78 : vector<8x1xf32>
    %80 = vector.broadcast %72 : vector<8x1xf32> to vector<8x128xf32>
    %81 = arith.subf %64, %80 : vector<8x128xf32>
    %cst_38 = arith.constant 9.99999974E-6 : f32
    %82 = vector.broadcast %cst_38 : f32 to vector<8x1xf32>
    %83 = arith.addf %79, %82 : vector<8x1xf32>
    %84 = math.rsqrt %83 : vector<8x1xf32>
    %85 = vector.broadcast %84 : vector<8x1xf32> to vector<8x128xf32>
    %86 = arith.mulf %81, %85 : vector<8x128xf32>
    %87 = vector.broadcast %66 : vector<1x128xf32> to vector<8x128xf32>
    %88 = arith.mulf %86, %87 : vector<8x128xf32>
    %89 = vector.broadcast %68 : vector<1x128xf32> to vector<8x128xf32>
    %90 = arith.addf %88, %89 : vector<8x128xf32>
    %91 = arith.truncf %90 : vector<8x128xf32> to vector<8x128xbf16>
    %c0_39 = arith.constant 0 : index
    %c0_40 = arith.constant 0 : index
    %c0_41 = arith.constant 0 : index
    %92 = vector.load %arg10[%c0_39, %c0_40, %c0_41] : memref<1x128x512xbf16, #tpu.memory_space<vmem>>, vector<1x128x512xbf16>
    %93 = vector.shape_cast %92 : vector<1x128x512xbf16> to vector<128x512xbf16>
    %cst_42 = arith.constant dense<0.000000e+00> : vector<8x512xf32>
    %94 = tpu.matmul %91, %93, %cst_42 {dimension_numbers = #tpu.dot_dimension_numbers<[1], [0], [0], [1], [0, 0, 1, 1], [], []>} : vector<8x128xbf16>, vector<128x512xbf16>, vector<8x512xf32> -> vector<8x512xf32>
    %c0_43 = arith.constant 0 : index
    %c0_44 = arith.constant 0 : index
    %c0_45 = arith.constant 0 : index
    %95 = vector.load %arg11[%c0_43, %c0_44, %c0_45] : memref<1x1x512xf32, #tpu.memory_space<vmem>>, vector<1x1x512xf32>
    %96 = vector.shape_cast %95 : vector<1x1x512xf32> to vector<1x512xf32>
    %97 = vector.broadcast %96 : vector<1x512xf32> to vector<8x512xf32>
    %98 = arith.addf %94, %97 : vector<8x512xf32>
    %99 = arith.mulf %98, %98 : vector<8x512xf32>
    %100 = arith.mulf %98, %99 : vector<8x512xf32>
    %cst_46 = arith.constant 4.471500e-02 : f32
    %101 = vector.broadcast %cst_46 : f32 to vector<8x512xf32>
    %102 = arith.mulf %101, %100 : vector<8x512xf32>
    %103 = arith.addf %98, %102 : vector<8x512xf32>
    %cst_47 = arith.constant 0.797884583 : f32
    %104 = vector.broadcast %cst_47 : f32 to vector<8x512xf32>
    %105 = arith.mulf %104, %103 : vector<8x512xf32>
    %106 = math.tanh %105 : vector<8x512xf32>
    %cst_48 = arith.constant 1.000000e+00 : f32
    %107 = vector.broadcast %cst_48 : f32 to vector<8x512xf32>
    %108 = arith.addf %107, %106 : vector<8x512xf32>
    %cst_49 = arith.constant 5.000000e-01 : f32
    %109 = vector.broadcast %cst_49 : f32 to vector<8x512xf32>
    %110 = arith.mulf %109, %108 : vector<8x512xf32>
    %111 = arith.mulf %98, %110 : vector<8x512xf32>
    %112 = arith.truncf %111 : vector<8x512xf32> to vector<8x512xbf16>
    %c0_50 = arith.constant 0 : index
    %c0_51 = arith.constant 0 : index
    %c0_52 = arith.constant 0 : index
    %113 = vector.load %arg12[%c0_50, %c0_51, %c0_52] : memref<1x512x128xbf16, #tpu.memory_space<vmem>>, vector<1x512x128xbf16>
    %114 = vector.shape_cast %113 : vector<1x512x128xbf16> to vector<512x128xbf16>
    %cst_53 = arith.constant dense<0.000000e+00> : vector<8x128xf32>
    %115 = tpu.matmul %112, %114, %cst_53 {dimension_numbers = #tpu.dot_dimension_numbers<[1], [0], [0], [1], [0, 0, 1, 1], [], []>} : vector<8x512xbf16>, vector<512x128xbf16>, vector<8x128xf32> -> vector<8x128xf32>
    %c0_54 = arith.constant 0 : index
    %c0_55 = arith.constant 0 : index
    %c0_56 = arith.constant 0 : index
    %116 = vector.load %arg13[%c0_54, %c0_55, %c0_56] : memref<1x1x128xf32, #tpu.memory_space<vmem>>, vector<1x1x128xf32>
    %117 = vector.shape_cast %116 : vector<1x1x128xf32> to vector<1x128xf32>
    %118 = vector.broadcast %117 : vector<1x128xf32> to vector<8x128xf32>
    %119 = arith.addf %115, %118 : vector<8x128xf32>
    %120 = arith.addf %64, %119 : vector<8x128xf32>
    %c0_57 = arith.constant 0 : index
    %c0_58 = arith.constant 0 : index
    %121 = vector.load %arg17[%c0_57, %c0_58] : memref<8x128xf32, #tpu.memory_space<vmem>>, vector<8x128xf32>
    tpu.vector_store %arg17[%c0_57, %c0_58], %120 {strides = array<i32>} : memref<8x128xf32, #tpu.memory_space<vmem>>, vector<8x128xf32>,
    %c1_i32 = arith.constant 1 : i32
    %122 = arith.cmpi eq, %arg1, %c1_i32 : i32
    %123 = arith.extui %122 : i1 to i32
    %c0_i32_59 = arith.constant 0 : i32
    %124 = arith.cmpi ne, %123, %c0_i32_59 : i32
    scf.if %124 {
      %c0_60 = arith.constant 0 : index
      %c0_61 = arith.constant 0 : index
      %125 = vector.load %arg14[%c0_60, %c0_61] : memref<1x128xf32, #tpu.memory_space<vmem>>, vector<1x128xf32>
      %c0_62 = arith.constant 0 : index
      %c0_63 = arith.constant 0 : index
      %126 = vector.load %arg15[%c0_62, %c0_63] : memref<1x128xf32, #tpu.memory_space<vmem>>, vector<1x128xf32>
      %cst_64 = arith.constant dense<0.000000e+00> : vector<8xf32>
      %127 = vector.multi_reduction <add>, %120, %cst_64 [1] : vector<8x128xf32> to vector<8xf32>
      %128 = vector.shape_cast %127 : vector<8xf32> to vector<8x1xf32>
      %cst_65 = arith.constant 1.280000e+02 : f32
      %129 = vector.broadcast %cst_65 : f32 to vector<8x1xf32>
      %130 = arith.divf %128, %129 : vector<8x1xf32>
      %131 = vector.broadcast %130 : vector<8x1xf32> to vector<8x128xf32>
      %132 = arith.subf %120, %131 : vector<8x128xf32>
      %133 = arith.mulf %132, %132 : vector<8x128xf32>
      %cst_66 = arith.constant dense<0.000000e+00> : vector<8xf32>
      %134 = vector.multi_reduction <add>, %133, %cst_66 [1] : vector<8x128xf32> to vector<8xf32>
      %135 = vector.shape_cast %134 : vector<8xf32> to vector<8x1xf32>
      %cst_67 = arith.constant 1.280000e+02 : f32
      %136 = vector.broadcast %cst_67 : f32 to vector<8x1xf32>
      %137 = arith.divf %135, %136 : vector<8x1xf32>
      %138 = vector.broadcast %130 : vector<8x1xf32> to vector<8x128xf32>
      %139 = arith.subf %120, %138 : vector<8x128xf32>
      %cst_68 = arith.constant 9.99999974E-6 : f32
      %140 = vector.broadcast %cst_68 : f32 to vector<8x1xf32>
      %141 = arith.addf %137, %140 : vector<8x1xf32>
      %142 = math.rsqrt %141 : vector<8x1xf32>
      %143 = vector.broadcast %142 : vector<8x1xf32> to vector<8x128xf32>
      %144 = arith.mulf %139, %143 : vector<8x128xf32>
      %145 = vector.broadcast %125 : vector<1x128xf32> to vector<8x128xf32>
      %146 = arith.mulf %144, %145 : vector<8x128xf32>
      %147 = vector.broadcast %126 : vector<1x128xf32> to vector<8x128xf32>
      %148 = arith.addf %146, %147 : vector<8x128xf32>
      %c0_69 = arith.constant 0 : index
      %c0_70 = arith.constant 0 : index
      %c0_71 = arith.constant 0 : index
      %149 = vector.load %arg16[%c0_69, %c0_70, %c0_71] : memref<1x8x128xf32, #tpu.memory_space<vmem>>, vector<1x8x128xf32>
      %150 = vector.shape_cast %149 : vector<1x8x128xf32> to vector<8x128xf32>
      %151 = vector.shape_cast %148 : vector<8x128xf32> to vector<1x8x128xf32>
      tpu.vector_store %arg16[%c0_69, %c0_70, %c0_71], %151 {strides = array<i32>} : memref<1x8x128xf32, #tpu.memory_space<vmem>>, vector<1x8x128xf32>,
    } else {
    }
    return
  }
  func.func @transform_0(%arg0: i32, %arg1: i32) -> (i32, i32, i32) {
    %c0_i32 = arith.constant 0 : i32
    %c0_i32_0 = arith.constant 0 : i32
    %c0_i32_1 = arith.constant 0 : i32
    return %arg0, %c0_i32, %c0_i32_0 : i32, i32, i32
  }
  func.func @transform_1(%arg0: i32, %arg1: i32) -> (i32, i32, i32) {
    %c0_i32 = arith.constant 0 : i32
    %c0_i32_0 = arith.constant 0 : i32
    %c0_i32_1 = arith.constant 0 : i32
    return %arg1, %c0_i32, %c0_i32_0 : i32, i32, i32
  }
  func.func @transform_2(%arg0: i32, %arg1: i32) -> (i32, i32, i32) {
    %c0_i32 = arith.constant 0 : i32
    %c0_i32_0 = arith.constant 0 : i32
    %c0_i32_1 = arith.constant 0 : i32
    return %arg1, %c0_i32, %c0_i32_0 : i32, i32, i32
  }
  func.func @transform_3(%arg0: i32, %arg1: i32) -> (i32, i32, i32) {
    %c0_i32 = arith.constant 0 : i32
    %c0_i32_0 = arith.constant 0 : i32
    %c0_i32_1 = arith.constant 0 : i32
    return %arg1, %c0_i32, %c0_i32_0 : i32, i32, i32
  }
  func.func @transform_4(%arg0: i32, %arg1: i32) -> (i32, i32, i32) {
    %c0_i32 = arith.constant 0 : i32
    %c0_i32_0 = arith.constant 0 : i32
    %c0_i32_1 = arith.constant 0 : i32
    return %arg1, %c0_i32, %c0_i32_0 : i32, i32, i32
  }
  func.func @transform_5(%arg0: i32, %arg1: i32) -> (i32, i32, i32) {
    %c0_i32 = arith.constant 0 : i32
    %c0_i32_0 = arith.constant 0 : i32
    %c0_i32_1 = arith.constant 0 : i32
    return %arg1, %c0_i32, %c0_i32_0 : i32, i32, i32
  }
  func.func @transform_6(%arg0: i32, %arg1: i32) -> (i32, i32, i32) {
    %c0_i32 = arith.constant 0 : i32
    %c0_i32_0 = arith.constant 0 : i32
    %c0_i32_1 = arith.constant 0 : i32
    return %arg1, %c0_i32, %c0_i32_0 : i32, i32, i32
  }
  func.func @transform_7(%arg0: i32, %arg1: i32) -> (i32, i32, i32) {
    %c0_i32 = arith.constant 0 : i32
    %c0_i32_0 = arith.constant 0 : i32
    %c0_i32_1 = arith.constant 0 : i32
    return %arg1, %c0_i32, %c0_i32_0 : i32, i32, i32
  }
  func.func @transform_8(%arg0: i32, %arg1: i32) -> (i32, i32, i32) {
    %c0_i32 = arith.constant 0 : i32
    %c0_i32_0 = arith.constant 0 : i32
    %c0_i32_1 = arith.constant 0 : i32
    return %arg1, %c0_i32, %c0_i32_0 : i32, i32, i32
  }
  func.func @transform_9(%arg0: i32, %arg1: i32) -> (i32, i32, i32) {
    %c0_i32 = arith.constant 0 : i32
    %c0_i32_0 = arith.constant 0 : i32
    %c0_i32_1 = arith.constant 0 : i32
    return %arg1, %c0_i32, %c0_i32_0 : i32, i32, i32
  }
  func.func @transform_10(%arg0: i32, %arg1: i32) -> (i32, i32, i32) {
    %c0_i32 = arith.constant 0 : i32
    %c0_i32_0 = arith.constant 0 : i32
    %c0_i32_1 = arith.constant 0 : i32
    return %arg1, %c0_i32, %c0_i32_0 : i32, i32, i32
  }
  func.func @transform_11(%arg0: i32, %arg1: i32) -> (i32, i32, i32) {
    %c0_i32 = arith.constant 0 : i32
    %c0_i32_0 = arith.constant 0 : i32
    %c0_i32_1 = arith.constant 0 : i32
    return %arg1, %c0_i32, %c0_i32_0 : i32, i32, i32
  }
  func.func @transform_12(%arg0: i32, %arg1: i32) -> (i32, i32) {
    %c0_i32 = arith.constant 0 : i32
    %c0_i32_0 = arith.constant 0 : i32
    %c0_i32_1 = arith.constant 0 : i32
    return %c0_i32, %c0_i32_0 : i32, i32
  }
  func.func @transform_13(%arg0: i32, %arg1: i32) -> (i32, i32) {
    %c0_i32 = arith.constant 0 : i32
    %c0_i32_0 = arith.constant 0 : i32
    %c0_i32_1 = arith.constant 0 : i32
    return %c0_i32, %c0_i32_0 : i32, i32
  }
  func.func @transform_14(%arg0: i32, %arg1: i32) -> (i32, i32, i32) {
    %c0_i32 = arith.constant 0 : i32
    %c0_i32_0 = arith.constant 0 : i32
    %c0_i32_1 = arith.constant 0 : i32
    return %arg0, %c0_i32, %c0_i32_0 : i32, i32, i32
  }
}

</mosaic_0001>

<llo_original>
// kernel: tpu_custom_call.1
$region0: #{tpu_custom_call.1}
  #allocation0 [shape = 'u32[]', space=smem, size = 0x4, offset = 0x4, fixed_abs, tag = 'smem constant byte address 0x4 - core index']
  #allocation1 [shape = 'u32[144,128]{1,0:T(1,128)}', space=vmem, size = 0x12000, scoped, tag = 'internal scratch']
  #allocation2 [shape = 'f32[8,128]{1,0:T(8,128)}', space=vmem, size = 0x1000, scoped, tag = 'scratch operand']
  %s0 = inlined_call_operand.hbm [shape: f32[2,8,128], index: 0, kind: input, shape index: {}]
  %s1 = inlined_call_operand.vmem [shape: f32[2,1,128], index: 1, kind: input, shape index: {}]
  %s2 = inlined_call_operand.vmem [shape: f32[2,1,128], index: 2, kind: input, shape index: {}]
  %s3 = inlined_call_operand.hbm [shape: bf16[2,128,1536], index: 3, kind: input, shape index: {}]
  %s4 = inlined_call_operand.hbm [shape: bf16[2,512,128], index: 4, kind: input, shape index: {}]
  %s5 = inlined_call_operand.vmem [shape: f32[2,1,128], index: 5, kind: input, shape index: {}]
  %s6 = inlined_call_operand.vmem [shape: f32[2,1,128], index: 6, kind: input, shape index: {}]
  %s7 = inlined_call_operand.vmem [shape: f32[2,1,128], index: 7, kind: input, shape index: {}]
  %s8 = inlined_call_operand.hbm [shape: bf16[2,128,512], index: 8, kind: input, shape index: {}]
  %s9 = inlined_call_operand.vmem [shape: f32[2,1,512], index: 9, kind: input, shape index: {}]
  %s10 = inlined_call_operand.hbm [shape: bf16[2,512,128], index: 10, kind: input, shape index: {}]
  %s11 = inlined_call_operand.vmem [shape: f32[2,1,128], index: 11, kind: input, shape index: {}]
  %s12 = inlined_call_operand.vmem [shape: f32[1,128], index: 12, kind: input, shape index: {}]
  %s13 = inlined_call_operand.vmem [shape: f32[1,128], index: 13, kind: input, shape index: {}]
  %s14 = inlined_call_operand.hbm [shape: f32[2,8,128], index: 14, kind: output, shape index: {}]
  %s15 = sld [smem:[#allocation0]]
  $region117: #{tpu_custom_call.1} parent=0
    _
  %s17 = ssub.s32 1, %s15
  %s18 = scalar_select 0, %s17, %s15
  $region1: #{tpu_custom_call.1} parent=0
    #allocation3 [shape = 'u8[8192]{0}', space=vmem, size = 0x2000, scoped, tag = 'input window, operand 0']
    #allocation4 [shape = 's32[2]{0}', space=sflag, size = 0x8, scoped, tag = 'scoped memory for tpu_custom_call.1']
    #allocation5 [shape = 's32[2]{0}', space=sflag, size = 0x8, scoped, tag = 'scoped memory for tpu_custom_call.1']
    #allocation6 [shape = 'u8[786432]{0}', space=vmem, size = 0xc0000, scoped, tag = 'input window, operand 3']
    #allocation7 [shape = 's32[2]{0}', space=sflag, size = 0x8, scoped, tag = 'scoped memory for tpu_custom_call.1']
    #allocation8 [shape = 'u8[262144]{0}', space=vmem, size = 0x40000, scoped, tag = 'input window, operand 4']
    #allocation9 [shape = 'u8[262144]{0}', space=vmem, size = 0x40000, scoped, tag = 'input window, operand 8']
    #allocation10 [shape = 's32[2]{0}', space=sflag, size = 0x8, scoped, tag = 'scoped memory for tpu_custom_call.1']
    #allocation11 [shape = 'u8[262144]{0}', space=vmem, size = 0x40000, scoped, tag = 'input window, operand 10']
    #allocation12 [shape = 'u8[8192]{0}', space=vmem, size = 0x2000, scoped, tag = 'output window, operand 0']
    %19 = vsyncpa [#allocation4], 0
    %s20 = scalar_lea.sflag [#allocation4], 1
    %21 = vsyncpa %s20, 0
    %22 = vsyncpa [#allocation7], 0
    %s23 = scalar_lea.sflag [#allocation7], 1
    %24 = vsyncpa %s23, 0
    %25 = vsyncpa [#allocation10], 0
    %s26 = scalar_lea.sflag [#allocation10], 1
    %27 = vsyncpa %s26, 0
    %28 = vsyncpa [#allocation5], 0
    %s29 = scalar_lea.sflag [#allocation5], 1
    %30 = vsyncpa %s29, 0
    loop: start=0, step=1, limit=6
    $region2: #{tpu_custom_call.1} parent=1 // loop_pre_header
      _
    $region3: #{tpu_custom_call.1} parent=1 // loop_header
      %s32 = sphi 0, %s36
      %p33 = scmp.ge.s32.totalorder %s32, 6
      %s39 = sphi 0, %s51
      %s40 = sphi 0, %s47
      %s41 = sphi 0, %s39
      %s42 = sphi 0, %s40
      %s43 = sphi 0, %s41
      %s44 = sphi 0, %s42
      %s54 = sphi 0, %s56
      %s57 = sphi 0, %s54
      %s58 = sphi 0, %s57
      %s74 = sphi 0, %s58
      %s80 = sphi 0, %s82
      %s83 = sphi 0, %s80
      %s84 = sphi 0, %s83
      %s100 = sphi 0, %s84
      %s106 = sphi 0, %s108
      %s109 = sphi 0, %s106
      %s110 = sphi 0, %s109
      %s126 = sphi 0, %s110
      %s132 = sphi 0, %s134
      %s135 = sphi 0, %s132
      %s136 = sphi 0, %s135
      %s152 = sphi 0, %s136
      %s158 = sphi 0, %s160
      %s161 = sphi 0, %s158
      %s162 = sphi 0, %s161
      %s178 = sphi 0, %s162
      %s184 = sphi 0, %s186
      %s187 = sphi 0, %s184
      %s188 = sphi 0, %s187
      %s204 = sphi 0, %s188
      %s210 = sphi 0, %s212
      %s213 = sphi 0, %s210
      %s214 = sphi 0, %s213
      %s230 = sphi 0, %s214
      %s236 = sphi 0, %s238
      %s239 = sphi 0, %s236
      %s240 = sphi 0, %s239
      %s256 = sphi 0, %s240
      %s262 = sphi 0, %s264
      %s265 = sphi 0, %s262
      %s266 = sphi 0, %s265
      %s282 = sphi 0, %s266
      %s288 = sphi 0, %s290
      %s291 = sphi 0, %s288
      %s292 = sphi 0, %s291
      %s308 = sphi 0, %s292
      %s314 = sphi 0, %s316
      %s317 = sphi 0, %s314
      %s318 = sphi 0, %s317
      %s334 = sphi 0, %s318
      %s340 = sphi 0, %s342
      %s343 = sphi 0, %s340
      %s344 = sphi 0, %s343
      %s360 = sphi 0, %s344
      %s364 = sphi 0, %s364
      %s366 = sphi 0, %s364
      %s367 = sphi 0, %s366
      %s381 = sphi 0, %s367
      %s385 = sphi 0, %s385
      %s387 = sphi 0, %s385
      %s388 = sphi 0, %s387
      %s402 = sphi 0, %s388
      %s408 = sphi 0, %s410
      %s411 = sphi 0, %s408
      %s412 = sphi 0, %s411
      %s428 = sphi 0, %s412
    $region4: #{tpu_custom_call.1} parent=1 // loop_header_branch
      %35 = sbr.rel (%p33) target = $region8
    $region5: #{tpu_custom_call.1} parent=1 // loop_body
      %s37 = ssub.s32 %s32, 1
      %s38 = ssub.s32 %s32, 2
      %s45 = sadd.s32 1, %s40
      %p46 = scmp.ge.s32.totalorder %s45, 2
      %s47 = scalar_select %p46, 0, %s45
      %s48 = sadd.s32 1, %s39
      %s49 = scalar_select %p46, %s48, %s39
      %p50 = scmp.ge.s32.totalorder %s49, 2
      %s51 = scalar_select %p50, 0, %s49
      %s52 = ssub.s32 %s39, %s51
      %p53 = scmp.eq.s32.totalorder %s52, 0
      %s55 = sadd.s32 %s54, 1
      %s56 = scalar_select %p53, %s54, %s55
      %p59 = pneg %p53
      %p60 = scmp.eq.s32.totalorder %s32, 3
      %p61 = por %p59, %p60
      %p62 = scmp.ne.s32.totalorder %s54, %s57
      %p63 = scmp.eq.s32.totalorder %s32, 0
      %p64 = por %p62, %p63
      %p65 = scmp.ne.s32.totalorder %s54, %s57
      %p66 = scmp.eq.s32.totalorder %s37, 3
      %p67 = por %p65, %p66
      %p68 = scmp.ne.s32.totalorder %s57, %s58
      %p69 = scmp.eq.s32.totalorder %s37, 0
      %p70 = por %p68, %p69
      %p71 = scmp.ne.s32.totalorder %s57, %s58
      %p72 = scmp.eq.s32.totalorder %s38, 3
      %p73 = por %p71, %p72
      %p75 = scmp.ne.s32.totalorder %s58, %s74
      %p76 = scmp.eq.s32.totalorder %s38, 0
      %p77 = por %p75, %p76
      %s78 = ssub.s32 %s40, %s47
      %p79 = scmp.eq.s32.totalorder %s78, 0
      %s81 = sadd.s32 %s80, 1
      %s82 = scalar_select %p79, %s80, %s81
      %p85 = pneg %p79
      %p86 = scmp.eq.s32.totalorder %s32, 3
      %p87 = por %p85, %p86
      %p88 = scmp.ne.s32.totalorder %s80, %s83
      %p89 = scmp.eq.s32.totalorder %s32, 0
      %p90 = por %p88, %p89
      %p91 = scmp.ne.s32.totalorder %s80, %s83
      %p92 = scmp.eq.s32.totalorder %s37, 3
      %p93 = por %p91, %p92
      %p94 = scmp.ne.s32.totalorder %s83, %s84
      %p95 = scmp.eq.s32.totalorder %s37, 0
      %p96 = por %p94, %p95
      %p97 = scmp.ne.s32.totalorder %s83, %s84
      %p98 = scmp.eq.s32.totalorder %s38, 3
      %p99 = por %p97, %p98
      %p101 = scmp.ne.s32.totalorder %s84, %s100
      %p102 = scmp.eq.s32.totalorder %s38, 0
      %p103 = por %p101, %p102
      %s104 = ssub.s32 %s40, %s47
      %p105 = scmp.eq.s32.totalorder %s104, 0
      %s107 = sadd.s32 %s106, 1
      %s108 = scalar_select %p105, %s106, %s107
      %p111 = pneg %p105
      %p112 = scmp.eq.s32.totalorder %s32, 3
      %p113 = por %p111, %p112
      %p114 = scmp.ne.s32.totalorder %s106, %s109
      %p115 = scmp.eq.s32.totalorder %s32, 0
      %p116 = por %p114, %p115
      %p117 = scmp.ne.s32.totalorder %s106, %s109
      %p118 = scmp.eq.s32.totalorder %s37, 3
      %p119 = por %p117, %p118
      %p120 = scmp.ne.s32.totalorder %s109, %s110
      %p121 = scmp.eq.s32.totalorder %s37, 0
      %p122 = por %p120, %p121
      %p123 = scmp.ne.s32.totalorder %s109, %s110
      %p124 = scmp.eq.s32.totalorder %s38, 3
      %p125 = por %p123, %p124
      %p127 = scmp.ne.s32.totalorder %s110, %s126
      %p128 = scmp.eq.s32.totalorder %s38, 0
      %p129 = por %p127, %p128
      %s130 = ssub.s32 %s40, %s47
      %p131 = scmp.eq.s32.totalorder %s130, 0
      %s133 = sadd.s32 %s132, 1
      %s134 = scalar_select %p131, %s132, %s133
      %p137 = pneg %p131
      %p138 = scmp.eq.s32.totalorder %s32, 3
      %p139 = por %p137, %p138
      %p140 = scmp.ne.s32.totalorder %s132, %s135
      %p141 = scmp.eq.s32.totalorder %s32, 0
      %p142 = por %p140, %p141
      %p143 = scmp.ne.s32.totalorder %s132, %s135
      %p144 = scmp.eq.s32.totalorder %s37, 3
      %p145 = por %p143, %p144
      %p146 = scmp.ne.s32.totalorder %s135, %s136
      %p147 = scmp.eq.s32.totalorder %s37, 0
      %p148 = por %p146, %p147
      %p149 = scmp.ne.s32.totalorder %s135, %s136
      %p150 = scmp.eq.s32.totalorder %s38, 3
      %p151 = por %p149, %p150
      %p153 = scmp.ne.s32.totalorder %s136, %s152
      %p154 = scmp.eq.s32.totalorder %s38, 0
      %p155 = por %p153, %p154
      %s156 = ssub.s32 %s40, %s47
      %p157 = scmp.eq.s32.totalorder %s156, 0
      %s159 = sadd.s32 %s158, 1
      %s160 = scalar_select %p157, %s158, %s159
      %p163 = pneg %p157
      %p164 = scmp.eq.s32.totalorder %s32, 3
      %p165 = por %p163, %p164
      %p166 = scmp.ne.s32.totalorder %s158, %s161
      %p167 = scmp.eq.s32.totalorder %s32, 0
      %p168 = por %p166, %p167
      %p169 = scmp.ne.s32.totalorder %s158, %s161
      %p170 = scmp.eq.s32.totalorder %s37, 3
      %p171 = por %p169, %p170
      %p172 = scmp.ne.s32.totalorder %s161, %s162
      %p173 = scmp.eq.s32.totalorder %s37, 0
      %p174 = por %p172, %p173
      %p175 = scmp.ne.s32.totalorder %s161, %s162
      %p176 = scmp.eq.s32.totalorder %s38, 3
      %p177 = por %p175, %p176
      %p179 = scmp.ne.s32.totalorder %s162, %s178
      %p180 = scmp.eq.s32.totalorder %s38, 0
      %p181 = por %p179, %p180
      %s182 = ssub.s32 %s40, %s47
      %p183 = scmp.eq.s32.totalorder %s182, 0
      %s185 = sadd.s32 %s184, 1
      %s186 = scalar_select %p183, %s184, %s185
      %p189 = pneg %p183
      %p190 = scmp.eq.s32.totalorder %s32, 3
      %p191 = por %p189, %p190
      %p192 = scmp.ne.s32.totalorder %s184, %s187
      %p193 = scmp.eq.s32.totalorder %s32, 0
      %p194 = por %p192, %p193
      %p195 = scmp.ne.s32.totalorder %s184, %s187
      %p196 = scmp.eq.s32.totalorder %s37, 3
      %p197 = por %p195, %p196
      %p198 = scmp.ne.s32.totalorder %s187, %s188
      %p199 = scmp.eq.s32.totalorder %s37, 0
      %p200 = por %p198, %p199
      %p201 = scmp.ne.s32.totalorder %s187, %s188
      %p202 = scmp.eq.s32.totalorder %s38, 3
      %p203 = por %p201, %p202
      %p205 = scmp.ne.s32.totalorder %s188, %s204
      %p206 = scmp.eq.s32.totalorder %s38, 0
      %p207 = por %p205, %p206
      %s208 = ssub.s32 %s40, %s47
      %p209 = scmp.eq.s32.totalorder %s208, 0
      %s211 = sadd.s32 %s210, 1
      %s212 = scalar_select %p209, %s210, %s211
      %p215 = pneg %p209
      %p216 = scmp.eq.s32.totalorder %s32, 3
      %p217 = por %p215, %p216
      %p218 = scmp.ne.s32.totalorder %s210, %s213
      %p219 = scmp.eq.s32.totalorder %s32, 0
      %p220 = por %p218, %p219
      %p221 = scmp.ne.s32.totalorder %s210, %s213
      %p222 = scmp.eq.s32.totalorder %s37, 3
      %p223 = por %p221, %p222
      %p224 = scmp.ne.s32.totalorder %s213, %s214
      %p225 = scmp.eq.s32.totalorder %s37, 0
      %p226 = por %p224, %p225
      %p227 = scmp.ne.s32.totalorder %s213, %s214
      %p228 = scmp.eq.s32.totalorder %s38, 3
      %p229 = por %p227, %p228
      %p231 = scmp.ne.s32.totalorder %s214, %s230
      %p232 = scmp.eq.s32.totalorder %s38, 0
      %p233 = por %p231, %p232
      %s234 = ssub.s32 %s40, %s47
      %p235 = scmp.eq.s32.totalorder %s234, 0
      %s237 = sadd.s32 %s236, 1
      %s238 = scalar_select %p235, %s236, %s237
      %p241 = pneg %p235
      %p242 = scmp.eq.s32.totalorder %s32, 3
      %p243 = por %p241, %p242
      %p244 = scmp.ne.s32.totalorder %s236, %s239
      %p245 = scmp.eq.s32.totalorder %s32, 0
      %p246 = por %p244, %p245
      %p247 = scmp.ne.s32.totalorder %s236, %s239
      %p248 = scmp.eq.s32.totalorder %s37, 3
      %p249 = por %p247, %p248
      %p250 = scmp.ne.s32.totalorder %s239, %s240
      %p251 = scmp.eq.s32.totalorder %s37, 0
      %p252 = por %p250, %p251
      %p253 = scmp.ne.s32.totalorder %s239, %s240
      %p254 = scmp.eq.s32.totalorder %s38, 3
      %p255 = por %p253, %p254
      %p257 = scmp.ne.s32.totalorder %s240, %s256
      %p258 = scmp.eq.s32.totalorder %s38, 0
      %p259 = por %p257, %p258
      %s260 = ssub.s32 %s40, %s47
      %p261 = scmp.eq.s32.totalorder %s260, 0
      %s263 = sadd.s32 %s262, 1
      %s264 = scalar_select %p261, %s262, %s263
      %p267 = pneg %p261
      %p268 = scmp.eq.s32.totalorder %s32, 3
      %p269 = por %p267, %p268
      %p270 = scmp.ne.s32.totalorder %s262, %s265
      %p271 = scmp.eq.s32.totalorder %s32, 0
      %p272 = por %p270, %p271
      %p273 = scmp.ne.s32.totalorder %s262, %s265
      %p274 = scmp.eq.s32.totalorder %s37, 3
      %p275 = por %p273, %p274
      %p276 = scmp.ne.s32.totalorder %s265, %s266
      %p277 = scmp.eq.s32.totalorder %s37, 0
      %p278 = por %p276, %p277
      %p279 = scmp.ne.s32.totalorder %s265, %s266
      %p280 = scmp.eq.s32.totalorder %s38, 3
      %p281 = por %p279, %p280
      %p283 = scmp.ne.s32.totalorder %s266, %s282
      %p284 = scmp.eq.s32.totalorder %s38, 0
      %p285 = por %p283, %p284
      %s286 = ssub.s32 %s40, %s47
      %p287 = scmp.eq.s32.totalorder %s286, 0
      %s289 = sadd.s32 %s288, 1
      %s290 = scalar_select %p287, %s288, %s289
      %p293 = pneg %p287
      %p294 = scmp.eq.s32.totalorder %s32, 3
      %p295 = por %p293, %p294
      %p296 = scmp.ne.s32.totalorder %s288, %s291
      %p297 = scmp.eq.s32.totalorder %s32, 0
      %p298 = por %p296, %p297
      %p299 = scmp.ne.s32.totalorder %s288, %s291
      %p300 = scmp.eq.s32.totalorder %s37, 3
      %p301 = por %p299, %p300
      %p302 = scmp.ne.s32.totalorder %s291, %s292
      %p303 = scmp.eq.s32.totalorder %s37, 0
      %p304 = por %p302, %p303
      %p305 = scmp.ne.s32.totalorder %s291, %s292
      %p306 = scmp.eq.s32.totalorder %s38, 3
      %p307 = por %p305, %p306
      %p309 = scmp.ne.s32.totalorder %s292, %s308
      %p310 = scmp.eq.s32.totalorder %s38, 0
      %p311 = por %p309, %p310
      %s312 = ssub.s32 %s40, %s47
      %p313 = scmp.eq.s32.totalorder %s312, 0
      %s315 = sadd.s32 %s314, 1
      %s316 = scalar_select %p313, %s314, %s315
      %p319 = pneg %p313
      %p320 = scmp.eq.s32.totalorder %s32, 3
      %p321 = por %p319, %p320
      %p322 = scmp.ne.s32.totalorder %s314, %s317
      %p323 = scmp.eq.s32.totalorder %s32, 0
      %p324 = por %p322, %p323
      %p325 = scmp.ne.s32.totalorder %s314, %s317
      %p326 = scmp.eq.s32.totalorder %s37, 3
      %p327 = por %p325, %p326
      %p328 = scmp.ne.s32.totalorder %s317, %s318
      %p329 = scmp.eq.s32.totalorder %s37, 0
      %p330 = por %p328, %p329
      %p331 = scmp.ne.s32.totalorder %s317, %s318
      %p332 = scmp.eq.s32.totalorder %s38, 3
      %p333 = por %p331, %p332
      %p335 = scmp.ne.s32.totalorder %s318, %s334
      %p336 = scmp.eq.s32.totalorder %s38, 0
      %p337 = por %p335, %p336
      %s338 = ssub.s32 %s40, %s47
      %p339 = scmp.eq.s32.totalorder %s338, 0
      %s341 = sadd.s32 %s340, 1
      %s342 = scalar_select %p339, %s340, %s341
      %p345 = pneg %p339
      %p346 = scmp.eq.s32.totalorder %s32, 3
      %p347 = por %p345, %p346
      %p348 = scmp.ne.s32.totalorder %s340, %s343
      %p349 = scmp.eq.s32.totalorder %s32, 0
      %p350 = por %p348, %p349
      %p351 = scmp.ne.s32.totalorder %s340, %s343
      %p352 = scmp.eq.s32.totalorder %s37, 3
      %p353 = por %p351, %p352
      %p354 = scmp.ne.s32.totalorder %s343, %s344
      %p355 = scmp.eq.s32.totalorder %s37, 0
      %p356 = por %p354, %p355
      %p357 = scmp.ne.s32.totalorder %s343, %s344
      %p358 = scmp.eq.s32.totalorder %s38, 3
      %p359 = por %p357, %p358
      %p361 = scmp.ne.s32.totalorder %s344, %s360
      %p362 = scmp.eq.s32.totalorder %s38, 0
      %p363 = por %p361, %p362
      %s365 = sadd.s32 %s364, 1
      %p368 = scmp.eq.s32.totalorder %s32, 3
      %p369 = scmp.ne.s32.totalorder %s364, %s366
      %p370 = scmp.eq.s32.totalorder %s32, 0
      %p371 = por %p369, %p370
      %p372 = scmp.ne.s32.totalorder %s364, %s366
      %p373 = scmp.eq.s32.totalorder %s37, 3
      %p374 = por %p372, %p373
      %p375 = scmp.ne.s32.totalorder %s366, %s367
      %p376 = scmp.eq.s32.totalorder %s37, 0
      %p377 = por %p375, %p376
      %p378 = scmp.ne.s32.totalorder %s366, %s367
      %p379 = scmp.eq.s32.totalorder %s38, 3
      %p380 = por %p378, %p379
      %p382 = scmp.ne.s32.totalorder %s367, %s381
      %p383 = scmp.eq.s32.totalorder %s38, 0
      %p384 = por %p382, %p383
      %s386 = sadd.s32 %s385, 1
      %p389 = scmp.eq.s32.totalorder %s32, 3
      %p390 = scmp.ne.s32.totalorder %s385, %s387
      %p391 = scmp.eq.s32.totalorder %s32, 0
      %p392 = por %p390, %p391
      %p393 = scmp.ne.s32.totalorder %s385, %s387
      %p394 = scmp.eq.s32.totalorder %s37, 3
      %p395 = por %p393, %p394
      %p396 = scmp.ne.s32.totalorder %s387, %s388
      %p397 = scmp.eq.s32.totalorder %s37, 0
      %p398 = por %p396, %p397
      %p399 = scmp.ne.s32.totalorder %s387, %s388
      %p400 = scmp.eq.s32.totalorder %s38, 3
      %p401 = por %p399, %p400
      %p403 = scmp.ne.s32.totalorder %s388, %s402
      %p404 = scmp.eq.s32.totalorder %s38, 0
      %p405 = por %p403, %p404
      %s406 = ssub.s32 %s39, %s51
      %p407 = scmp.eq.s32.totalorder %s406, 0
      %s409 = sadd.s32 %s408, 1
      %s410 = scalar_select %p407, %s408, %s409
      %p413 = pneg %p407
      %p414 = scmp.eq.s32.totalorder %s32, 3
      %p415 = por %p413, %p414
      %p416 = scmp.ne.s32.totalorder %s408, %s411
      %p417 = scmp.eq.s32.totalorder %s32, 0
      %p418 = por %p416, %p417
      %p419 = scmp.ne.s32.totalorder %s408, %s411
      %p420 = scmp.eq.s32.totalorder %s37, 3
      %p421 = por %p419, %p420
      %p422 = scmp.ne.s32.totalorder %s411, %s412
      %p423 = scmp.eq.s32.totalorder %s37, 0
      %p424 = por %p422, %p423
      %p425 = scmp.ne.s32.totalorder %s411, %s412
      %p426 = scmp.eq.s32.totalorder %s38, 3
      %p427 = por %p425, %p426
      %p429 = scmp.ne.s32.totalorder %s412, %s428
      %p430 = scmp.eq.s32.totalorder %s38, 0
      %p431 = por %p429, %p430
      %p432 = scmp.le.s32.totalorder 1, %s32
      %p433 = scmp.lt.s32.totalorder %s32, 5
      %p434 = pnand %p432, %p433
      %p435 = pneg %p434
      // Predicated region
      $region9: #{tpu_custom_call.1} parent=5 // pred_check
        _
      $region10: #{tpu_custom_call.1} parent=5 // pred_check_branch
        %437 = sbr.rel (%p434) target = $region12
      $region11: #{tpu_custom_call.1} parent=5 // pred_region
        %s438 = ssub.s32 %s32, 1
        // Predicated region
        $region13: #{tpu_custom_call.1} parent=11 // pred_check
          %p439 = pneg %p377
        $region14: #{tpu_custom_call.1} parent=11 // pred_check_branch
          %441 = sbr.rel (%p439) target = $region16
        $region15: #{tpu_custom_call.1} parent=11 // pred_region
          _
        $region16: #{tpu_custom_call.1} parent=11 // pred_fallthru
          _
        // Predicated region
        $region17: #{tpu_custom_call.1} parent=11 // pred_check
          %p442 = pneg %p398
        $region18: #{tpu_custom_call.1} parent=11 // pred_check_branch
          %444 = sbr.rel (%p442) target = $region20
        $region19: #{tpu_custom_call.1} parent=11 // pred_region
          _
        $region20: #{tpu_custom_call.1} parent=11 // pred_fallthru
          _
      $region12: #{tpu_custom_call.1} parent=5 // pred_fallthru
        _
      %p445 = scmp.lt.s32.totalorder %s32, 4
      // Predicated region
      $region21: #{tpu_custom_call.1} parent=5 // pred_check
        %p446 = pneg %p445
      $region22: #{tpu_custom_call.1} parent=5 // pred_check_branch
        %448 = sbr.rel (%p446) target = $region24
      $region23: #{tpu_custom_call.1} parent=5 // pred_region
        // Predicated region
        $region25: #{tpu_custom_call.1} parent=23 // pred_check
          %p449 = pneg %p64
        $region26: #{tpu_custom_call.1} parent=23 // pred_check_branch
          %451 = sbr.rel (%p449) target = $region28
        $region27: #{tpu_custom_call.1} parent=23 // pred_region
          %s452 = sand.u32 %s54, 1
          %s453 = scalar_lea.sflag [#allocation4], %s452
          %s454 = sand.u32 %s54, 1
          %s455 = smul.addr %s454, 8
          %s456 = scalar_lea.vmem [#allocation3], %s455
          %s458 = ssub.s32 128, 128
          %459 = vsyncadd %s453, %s458
          %s460 = smul.addr %s39, 128
          %s461 = scalar_lea.hbm %s0, %s460
          %s463 = sshll.u32 %s456, 4
          %s464 = int_to_ptr.vmem [resolvable:$true] %s463
          %466 = dma.hbm_to_vmem [thread:$0]  %s461, 128, %s464, %s453
        $region28: #{tpu_custom_call.1} parent=23 // pred_fallthru
          _
        // Predicated region
        $region29: #{tpu_custom_call.1} parent=23 // pred_check
          %p467 = pneg %p90
        $region30: #{tpu_custom_call.1} parent=23 // pred_check_branch
          %469 = sbr.rel (%p467) target = $region32
        $region31: #{tpu_custom_call.1} parent=23 // pred_region
          %p470 = scmp.lt.s32.totalorder %s40, 1
          %s471 = scalar_select %p470, %s40, 1
          %s472 = scalar_lea.vmem %s1, %s471
        $region32: #{tpu_custom_call.1} parent=23 // pred_fallthru
          _
        // Predicated region
        $region33: #{tpu_custom_call.1} parent=23 // pred_check
          %p473 = pneg %p116
        $region34: #{tpu_custom_call.1} parent=23 // pred_check_branch
          %475 = sbr.rel (%p473) target = $region36
        $region35: #{tpu_custom_call.1} parent=23 // pred_region
          %p476 = scmp.lt.s32.totalorder %s40, 1
          %s477 = scalar_select %p476, %s40, 1
          %s478 = scalar_lea.vmem %s2, %s477
        $region36: #{tpu_custom_call.1} parent=23 // pred_fallthru
          _
        // Predicated region
        $region37: #{tpu_custom_call.1} parent=23 // pred_check
          %p479 = pneg %p142
        $region38: #{tpu_custom_call.1} parent=23 // pred_check_branch
          %481 = sbr.rel (%p479) target = $region40
        $region39: #{tpu_custom_call.1} parent=23 // pred_region
          %s482 = sand.u32 %s32, 1
          %s483 = scalar_lea.sflag [#allocation7], %s482
          %s484 = sand.u32 %s132, 1
          %s485 = smul.addr %s484, 768
          %s486 = scalar_lea.vmem [#allocation6], %s485
          %s488 = ssub.s32 12288, 12288
          %489 = vsyncadd %s483, %s488
          %s490 = smul.addr %s40, 192
          %s491 = smul.addr %s490, 64
          %s492 = scalar_lea.hbm %s3, %s491
          %s493 = sshll.u32 %s486, 4
          %s494 = int_to_ptr.vmem [resolvable:$true] %s493
          %499 = dma.hbm_to_vmem [thread:$0]  %s492, 12288, %s494, %s483, 768, 768, 48
        $region40: #{tpu_custom_call.1} parent=23 // pred_fallthru
          _
        // Predicated region
        $region41: #{tpu_custom_call.1} parent=23 // pred_check
          %p500 = pneg %p168
        $region42: #{tpu_custom_call.1} parent=23 // pred_check_branch
          %502 = sbr.rel (%p500) target = $region44
        $region43: #{tpu_custom_call.1} parent=23 // pred_region
          %s503 = sand.u32 %s32, 1
          %s504 = scalar_lea.sflag [#allocation7], %s503
          %s505 = sand.u32 %s158, 1
          %s506 = smul.addr %s505, 256
          %s507 = scalar_lea.vmem [#allocation8], %s506
          %s509 = ssub.s32 4096, 4096
          %510 = vsyncadd %s504, %s509
          %s511 = smul.addr %s40, 64
          %s512 = smul.addr %s511, 64
          %s513 = scalar_lea.hbm %s4, %s512
          %s514 = sshll.u32 %s507, 4
          %s515 = int_to_ptr.vmem [resolvable:$true] %s514
          %520 = dma.hbm_to_vmem [thread:$0]  %s513, 4096, %s515, %s504, 64, 64, 4
        $region44: #{tpu_custom_call.1} parent=23 // pred_fallthru
          _
        // Predicated region
        $region45: #{tpu_custom_call.1} parent=23 // pred_check
          %p521 = pneg %p194
        $region46: #{tpu_custom_call.1} parent=23 // pred_check_branch
          %523 = sbr.rel (%p521) target = $region48
        $region47: #{tpu_custom_call.1} parent=23 // pred_region
          %p524 = scmp.lt.s32.totalorder %s40, 1
          %s525 = scalar_select %p524, %s40, 1
          %s526 = scalar_lea.vmem %s5, %s525
        $region48: #{tpu_custom_call.1} parent=23 // pred_fallthru
          _
        // Predicated region
        $region49: #{tpu_custom_call.1} parent=23 // pred_check
          %p527 = pneg %p220
        $region50: #{tpu_custom_call.1} parent=23 // pred_check_branch
          %529 = sbr.rel (%p527) target = $region52
        $region51: #{tpu_custom_call.1} parent=23 // pred_region
          %p530 = scmp.lt.s32.totalorder %s40, 1
          %s531 = scalar_select %p530, %s40, 1
          %s532 = scalar_lea.vmem %s6, %s531
        $region52: #{tpu_custom_call.1} parent=23 // pred_fallthru
          _
        // Predicated region
        $region53: #{tpu_custom_call.1} parent=23 // pred_check
          %p533 = pneg %p246
        $region54: #{tpu_custom_call.1} parent=23 // pred_check_branch
          %535 = sbr.rel (%p533) target = $region56
        $region55: #{tpu_custom_call.1} parent=23 // pred_region
          %p536 = scmp.lt.s32.totalorder %s40, 1
          %s537 = scalar_select %p536, %s40, 1
          %s538 = scalar_lea.vmem %s7, %s537
        $region56: #{tpu_custom_call.1} parent=23 // pred_fallthru
          _
        // Predicated region
        $region57: #{tpu_custom_call.1} parent=23 // pred_check
          %p539 = pneg %p272
        $region58: #{tpu_custom_call.1} parent=23 // pred_check_branch
          %541 = sbr.rel (%p539) target = $region60
        $region59: #{tpu_custom_call.1} parent=23 // pred_region
          %s542 = sand.u32 %s32, 1
          %s543 = scalar_lea.sflag [#allocation10], %s542
          %s544 = sand.u32 %s262, 1
          %s545 = smul.addr %s544, 256
          %s546 = scalar_lea.vmem [#allocation9], %s545
          %s548 = ssub.s32 4096, 4096
          %549 = vsyncadd %s543, %s548
          %s550 = smul.addr %s40, 64
          %s551 = smul.addr %s550, 64
          %s552 = scalar_lea.hbm %s8, %s551
          %s553 = sshll.u32 %s546, 4
          %s554 = int_to_ptr.vmem [resolvable:$true] %s553
          %559 = dma.hbm_to_vmem [thread:$0]  %s552, 4096, %s554, %s543, 256, 256, 16
        $region60: #{tpu_custom_call.1} parent=23 // pred_fallthru
          _
        // Predicated region
        $region61: #{tpu_custom_call.1} parent=23 // pred_check
          %p560 = pneg %p298
        $region62: #{tpu_custom_call.1} parent=23 // pred_check_branch
          %562 = sbr.rel (%p560) target = $region64
        $region63: #{tpu_custom_call.1} parent=23 // pred_region
          %p563 = scmp.lt.s32.totalorder %s40, 1
          %s564 = scalar_select %p563, %s40, 1
          %s565 = smul.addr %s564, 4
          %s566 = scalar_lea.vmem %s9, %s565
        $region64: #{tpu_custom_call.1} parent=23 // pred_fallthru
          _
        // Predicated region
        $region65: #{tpu_custom_call.1} parent=23 // pred_check
          %p567 = pneg %p324
        $region66: #{tpu_custom_call.1} parent=23 // pred_check_branch
          %569 = sbr.rel (%p567) target = $region68
        $region67: #{tpu_custom_call.1} parent=23 // pred_region
          %s570 = sand.u32 %s32, 1
          %s571 = scalar_lea.sflag [#allocation10], %s570
          %s572 = sand.u32 %s314, 1
          %s573 = smul.addr %s572, 256
          %s574 = scalar_lea.vmem [#allocation11], %s573
          %s576 = ssub.s32 4096, 4096
          %577 = vsyncadd %s571, %s576
          %s578 = smul.addr %s40, 64
          %s579 = smul.addr %s578, 64
          %s580 = scalar_lea.hbm %s10, %s579
          %s581 = sshll.u32 %s574, 4
          %s582 = int_to_ptr.vmem [resolvable:$true] %s581
          %587 = dma.hbm_to_vmem [thread:$0]  %s580, 4096, %s582, %s571, 64, 64, 4
        $region68: #{tpu_custom_call.1} parent=23 // pred_fallthru
          _
        // Predicated region
        $region69: #{tpu_custom_call.1} parent=23 // pred_check
          %p588 = pneg %p350
        $region70: #{tpu_custom_call.1} parent=23 // pred_check_branch
          %590 = sbr.rel (%p588) target = $region72
        $region71: #{tpu_custom_call.1} parent=23 // pred_region
          %p591 = scmp.lt.s32.totalorder %s40, 1
          %s592 = scalar_select %p591, %s40, 1
          %s593 = scalar_lea.vmem %s11, %s592
        $region72: #{tpu_custom_call.1} parent=23 // pred_fallthru
          _
      $region24: #{tpu_custom_call.1} parent=5 // pred_fallthru
        _
      %p594 = scmp.le.s32.totalorder 1, %s32
      %p595 = scmp.lt.s32.totalorder %s32, 5
      %p596 = pnand %p594, %p595
      %p597 = pneg %p596
      // Predicated region
      $region73: #{tpu_custom_call.1} parent=5 // pred_check
        _
      $region74: #{tpu_custom_call.1} parent=5 // pred_check_branch
        %599 = sbr.rel (%p596) target = $region76
      $region75: #{tpu_custom_call.1} parent=5 // pred_region
        %s600 = ssub.s32 %s32, 1
        %s601 = sand.u32 %s57, 1
        %s602 = scalar_lea.sflag [#allocation4], %s601
        %s603 = sand.u32 %s57, 1
        %s604 = smul.addr %s603, 8
        %s605 = scalar_lea.vmem [#allocation3], %s604
        // Predicated region
        $region77: #{tpu_custom_call.1} parent=75 // pred_check
          %p606 = pneg %p70
        $region78: #{tpu_custom_call.1} parent=75 // pred_check_branch
          %608 = sbr.rel (%p606) target = $region80
        $region79: #{tpu_custom_call.1} parent=75 // pred_region
          %609 = dma.done %s602, 128
        $region80: #{tpu_custom_call.1} parent=75 // pred_fallthru
          _
        %s610 = sand.u32 %s37, 1
        %s611 = scalar_lea.sflag [#allocation7], %s610
        %s612 = sand.u32 %s135, 1
        %s613 = smul.addr %s612, 768
        %s614 = scalar_lea.vmem [#allocation6], %s613
        // Predicated region
        $region81: #{tpu_custom_call.1} parent=75 // pred_check
          %p615 = pneg %p148
        $region82: #{tpu_custom_call.1} parent=75 // pred_check_branch
          %617 = sbr.rel (%p615) target = $region84
        $region83: #{tpu_custom_call.1} parent=75 // pred_region
          %618 = dma.done %s611, 12288
        $region84: #{tpu_custom_call.1} parent=75 // pred_fallthru
          _
        %s619 = sand.u32 %s37, 1
        %s620 = scalar_lea.sflag [#allocation7], %s619
        %s621 = sand.u32 %s161, 1
        %s622 = smul.addr %s621, 256
        %s623 = scalar_lea.vmem [#allocation8], %s622
        // Predicated region
        $region85: #{tpu_custom_call.1} parent=75 // pred_check
          %p624 = pneg %p174
        $region86: #{tpu_custom_call.1} parent=75 // pred_check_branch
          %626 = sbr.rel (%p624) target = $region88
        $region87: #{tpu_custom_call.1} parent=75 // pred_region
          %627 = dma.done %s620, 4096
        $region88: #{tpu_custom_call.1} parent=75 // pred_fallthru
          _
        %s628 = sand.u32 %s37, 1
        %s629 = scalar_lea.sflag [#allocation10], %s628
        %s630 = sand.u32 %s265, 1
        %s631 = smul.addr %s630, 256
        %s632 = scalar_lea.vmem [#allocation9], %s631
        // Predicated region
        $region89: #{tpu_custom_call.1} parent=75 // pred_check
          %p633 = pneg %p278
        $region90: #{tpu_custom_call.1} parent=75 // pred_check_branch
          %635 = sbr.rel (%p633) target = $region92
        $region91: #{tpu_custom_call.1} parent=75 // pred_region
          %636 = dma.done %s629, 4096
        $region92: #{tpu_custom_call.1} parent=75 // pred_fallthru
          _
        %s637 = sand.u32 %s37, 1
        %s638 = scalar_lea.sflag [#allocation10], %s637
        %s639 = sand.u32 %s317, 1
        %s640 = smul.addr %s639, 256
        %s641 = scalar_lea.vmem [#allocation11], %s640
        // Predicated region
        $region93: #{tpu_custom_call.1} parent=75 // pred_check
          %p642 = pneg %p330
        $region94: #{tpu_custom_call.1} parent=75 // pred_check_branch
          %644 = sbr.rel (%p642) target = $region96
        $region95: #{tpu_custom_call.1} parent=75 // pred_region
          %645 = dma.done %s638, 4096
        $region96: #{tpu_custom_call.1} parent=75 // pred_fallthru
          _
        %s646 = sand.u32 %s57, 1
        %s647 = scalar_lea.sflag [#allocation4], %s646
        %s648 = sand.u32 %s57, 1
        %s649 = smul.addr %s648, 8
        %s650 = scalar_lea.vmem [#allocation3], %s649
        %p651 = pneg %p70
        %p652 = pneg %p67
        %p653 = scmp.lt.s32.totalorder %s42, 1
        %s654 = scalar_select %p653, %s42, 1
        %s655 = scalar_lea.vmem %s1, %s654
        %p656 = pneg %p96
        %p657 = pneg %p93
        %p658 = scmp.lt.s32.totalorder %s42, 1
        %s659 = scalar_select %p658, %s42, 1
        %s660 = scalar_lea.vmem %s2, %s659
        %p661 = pneg %p122
        %p662 = pneg %p119
        %s663 = sand.u32 %s37, 1
        %s664 = scalar_lea.sflag [#allocation7], %s663
        %s665 = sand.u32 %s135, 1
        %s666 = smul.addr %s665, 768
        %s667 = scalar_lea.vmem [#allocation6], %s666
        %p668 = pneg %p148
        %p669 = pneg %p145
        %s670 = sand.u32 %s37, 1
        %s671 = scalar_lea.sflag [#allocation7], %s670
        %s672 = sand.u32 %s161, 1
        %s673 = smul.addr %s672, 256
        %s674 = scalar_lea.vmem [#allocation8], %s673
        %p675 = pneg %p174
        %p676 = pneg %p171
        %p677 = scmp.lt.s32.totalorder %s42, 1
        %s678 = scalar_select %p677, %s42, 1
        %s679 = scalar_lea.vmem %s5, %s678
        %p680 = pneg %p200
        %p681 = pneg %p197
        %p682 = scmp.lt.s32.totalorder %s42, 1
        %s683 = scalar_select %p682, %s42, 1
        %s684 = scalar_lea.vmem %s6, %s683
        %p685 = pneg %p226
        %p686 = pneg %p223
        %p687 = scmp.lt.s32.totalorder %s42, 1
        %s688 = scalar_select %p687, %s42, 1
        %s689 = scalar_lea.vmem %s7, %s688
        %p690 = pneg %p252
        %p691 = pneg %p249
        %s692 = sand.u32 %s37, 1
        %s693 = scalar_lea.sflag [#allocation10], %s692
        %s694 = sand.u32 %s265, 1
        %s695 = smul.addr %s694, 256
        %s696 = scalar_lea.vmem [#allocation9], %s695
        %p697 = pneg %p278
        %p698 = pneg %p275
        %p699 = scmp.lt.s32.totalorder %s42, 1
        %s700 = scalar_select %p699, %s42, 1
        %s701 = smul.addr %s700, 4
        %s702 = scalar_lea.vmem %s9, %s701
        %p703 = pneg %p304
        %p704 = pneg %p301
        %s705 = sand.u32 %s37, 1
        %s706 = scalar_lea.sflag [#allocation10], %s705
        %s707 = sand.u32 %s317, 1
        %s708 = smul.addr %s707, 256
        %s709 = scalar_lea.vmem [#allocation11], %s708
        %p710 = pneg %p330
        %p711 = pneg %p327
        %p712 = scmp.lt.s32.totalorder %s42, 1
        %s713 = scalar_select %p712, %s42, 1
        %s714 = scalar_lea.vmem %s11, %s713
        %p715 = pneg %p356
        %p716 = pneg %p353
        %p717 = pneg %p377
        %p718 = pneg %p374
        %p719 = pneg %p398
        %p720 = pneg %p395
        %p721 = pneg %p424
        %p722 = pneg %p421
        %s723 = sand.u32 %s411, 1
        %s724 = scalar_lea.sflag [#allocation5], %s723
        %s725 = sand.u32 %s411, 1
        %s726 = smul.addr %s725, 8
        %s727 = scalar_lea.vmem [#allocation12], %s726
        %p728 = scmp.lt.s32.totalorder %s42, 1
        %s729 = scalar_select %p728, %s42, 1
        %s730 = scalar_lea.vmem %s1, %s729
        %p731 = scmp.lt.s32.totalorder %s42, 1
        %s732 = scalar_select %p731, %s42, 1
        %s733 = scalar_lea.vmem %s2, %s732
        %p734 = scmp.lt.s32.totalorder %s42, 1
        %s735 = scalar_select %p734, %s42, 1
        %s736 = scalar_lea.vmem %s5, %s735
        %p737 = scmp.lt.s32.totalorder %s42, 1
        %s738 = scalar_select %p737, %s42, 1
        %s739 = scalar_lea.vmem %s6, %s738
        %p740 = scmp.lt.s32.totalorder %s42, 1
        %s741 = scalar_select %p740, %s42, 1
        %s742 = scalar_lea.vmem %s7, %s741
        %p743 = scmp.lt.s32.totalorder %s42, 1
        %s744 = scalar_select %p743, %s42, 1
        %s745 = smul.addr %s744, 4
        %s746 = scalar_lea.vmem %s9, %s745
        %p747 = scmp.lt.s32.totalorder %s42, 1
        %s748 = scalar_select %p747, %s42, 1
        %s749 = scalar_lea.vmem %s11, %s748
        %p751 = scmp.eq.s32.totalorder %s42, 0
        // Predicated region
        $region97: #{tpu_custom_call.1} parent=75 // pred_check
          %p752 = pneg %p751
        $region98: #{tpu_custom_call.1} parent=75 // pred_check_branch
          %754 = sbr.rel (%p752) target = $region100
        $region99: #{tpu_custom_call.1} parent=75 // pred_region
          %v755 = vld [vmem:[%s605] sm:$0xff]
          %756 = vst [vmem:[#allocation2] sm:$0xff] %v755
        $region100: #{tpu_custom_call.1} parent=75 // pred_fallthru
          _
        %v757 = vld [vmem:[#allocation2] sm:$0xff]
        %v758 = vld [vmem:[%s730] sm:$0x1]
        %v759 = vld [vmem:[%s733] sm:$0x1]
        %760 = vadd.xlane.f32.xlu0 %v757
        %v761 = vpop.xlane.xlu0 %760
        %v762 = vrcp.pop 128.0
        %v763 = vmul.f32 %v761, %v762
        %v764 = vsub.f32 %v757, %v763
        %v765 = vmul.f32 %v764, %v764
        %766 = vadd.xlane.f32.xlu0 %v765
        %v767 = vpop.xlane.xlu0 %766
        %v768 = vmul.f32 %v767, %v762
        %v769 = vadd.f32 %v768, 1e-05
        %v770 = vrsqrt.pop %v769
        %v771 = vmul.f32 %v764, %v770
        %v773 = vlaneseq
        %v774 = vshrl.u32 %v773, 7
        %v775 = vsub.s32 0, %v774
        %v776 = vrot.slane %v758, %v775
        %v778 = vmul.f32 %v771, %v776
        %v780 = vlaneseq
        %v781 = vshrl.u32 %v780, 7
        %v782 = vsub.s32 0, %v781
        %v783 = vrot.slane %v759, %v782
        %v785 = vadd.f32 %v778, %v783
        %v786 = vpack.c.bf16 %v785, %v785
        %v787 = vld [vmem:[%s614] sm:$0xff]
        %v788 = vld [vmem:[%s614 + $0x8] sm:$0xff]
        %v789 = vld [vmem:[%s614 + $0x10] sm:$0xff]
        %v790 = vld [vmem:[%s614 + $0x18] sm:$0xff]
        %v791 = vld [vmem:[%s614 + $0x20] sm:$0xff]
        %v792 = vld [vmem:[%s614 + $0x28] sm:$0xff]
        %v793 = vld [vmem:[%s614 + $0x30] sm:$0xff]
        %v794 = vld [vmem:[%s614 + $0x38] sm:$0xff]
        %v795 = vld [vmem:[%s614 + $0x40] sm:$0xff]
        %v796 = vld [vmem:[%s614 + $0x48] sm:$0xff]
        %v797 = vld [vmem:[%s614 + $0x50] sm:$0xff]
        %v798 = vld [vmem:[%s614 + $0x58] sm:$0xff]
        %v799 = vld [vmem:[%s614 + $0x60] sm:$0xff]
        %v800 = vld [vmem:[%s614 + $0x68] sm:$0xff]
        %v801 = vld [vmem:[%s614 + $0x70] sm:$0xff]
        %v802 = vld [vmem:[%s614 + $0x78] sm:$0xff]
        %v803 = vld [vmem:[%s614 + $0x80] sm:$0xff]
        %v804 = vld [vmem:[%s614 + $0x88] sm:$0xff]
        %v805 = vld [vmem:[%s614 + $0x90] sm:$0xff]
        %v806 = vld [vmem:[%s614 + $0x98] sm:$0xff]
        %v807 = vld [vmem:[%s614 + $0xa0] sm:$0xff]
        %v808 = vld [vmem:[%s614 + $0xa8] sm:$0xff]
        %v809 = vld [vmem:[%s614 + $0xb0] sm:$0xff]
        %v810 = vld [vmem:[%s614 + $0xb8] sm:$0xff]
        %v811 = vld [vmem:[%s614 + $0xc0] sm:$0xff]
        %v812 = vld [vmem:[%s614 + $0xc8] sm:$0xff]
        %v813 = vld [vmem:[%s614 + $0xd0] sm:$0xff]
        %v814 = vld [vmem:[%s614 + $0xd8] sm:$0xff]
        %v815 = vld [vmem:[%s614 + $0xe0] sm:$0xff]
        %v816 = vld [vmem:[%s614 + $0xe8] sm:$0xff]
        %v817 = vld [vmem:[%s614 + $0xf0] sm:$0xff]
        %v818 = vld [vmem:[%s614 + $0xf8] sm:$0xff]
        %v819 = vld [vmem:[%s614 + $0x100] sm:$0xff]
        %v820 = vld [vmem:[%s614 + $0x108] sm:$0xff]
        %v821 = vld [vmem:[%s614 + $0x110] sm:$0xff]
        %v822 = vld [vmem:[%s614 + $0x118] sm:$0xff]
        %v823 = vld [vmem:[%s614 + $0x120] sm:$0xff]
        %v824 = vld [vmem:[%s614 + $0x128] sm:$0xff]
        %v825 = vld [vmem:[%s614 + $0x130] sm:$0xff]
        %v826 = vld [vmem:[%s614 + $0x138] sm:$0xff]
        %v827 = vld [vmem:[%s614 + $0x140] sm:$0xff]
        %v828 = vld [vmem:[%s614 + $0x148] sm:$0xff]
        %v829 = vld [vmem:[%s614 + $0x150] sm:$0xff]
        %v830 = vld [vmem:[%s614 + $0x158] sm:$0xff]
        %v831 = vld [vmem:[%s614 + $0x160] sm:$0xff]
        %v832 = vld [vmem:[%s614 + $0x168] sm:$0xff]
        %v833 = vld [vmem:[%s614 + $0x170] sm:$0xff]
        %v834 = vld [vmem:[%s614 + $0x178] sm:$0xff]
        %v835 = vld [vmem:[%s614 + $0x180] sm:$0xff]
        %v836 = vld [vmem:[%s614 + $0x188] sm:$0xff]
        %v837 = vld [vmem:[%s614 + $0x190] sm:$0xff]
        %v838 = vld [vmem:[%s614 + $0x198] sm:$0xff]
        %v839 = vld [vmem:[%s614 + $0x1a0] sm:$0xff]
        %v840 = vld [vmem:[%s614 + $0x1a8] sm:$0xff]
        %v841 = vld [vmem:[%s614 + $0x1b0] sm:$0xff]
        %v842 = vld [vmem:[%s614 + $0x1b8] sm:$0xff]
        %v843 = vld [vmem:[%s614 + $0x1c0] sm:$0xff]
        %v844 = vld [vmem:[%s614 + $0x1c8] sm:$0xff]
        %v845 = vld [vmem:[%s614 + $0x1d0] sm:$0xff]
        %v846 = vld [vmem:[%s614 + $0x1d8] sm:$0xff]
        %v847 = vld [vmem:[%s614 + $0x1e0] sm:$0xff]
        %v848 = vld [vmem:[%s614 + $0x1e8] sm:$0xff]
        %v849 = vld [vmem:[%s614 + $0x1f0] sm:$0xff]
        %v850 = vld [vmem:[%s614 + $0x1f8] sm:$0xff]
        %v851 = vld [vmem:[%s614 + $0x200] sm:$0xff]
        %v852 = vld [vmem:[%s614 + $0x208] sm:$0xff]
        %v853 = vld [vmem:[%s614 + $0x210] sm:$0xff]
        %v854 = vld [vmem:[%s614 + $0x218] sm:$0xff]
        %v855 = vld [vmem:[%s614 + $0x220] sm:$0xff]
        %v856 = vld [vmem:[%s614 + $0x228] sm:$0xff]
        %v857 = vld [vmem:[%s614 + $0x230] sm:$0xff]
        %v858 = vld [vmem:[%s614 + $0x238] sm:$0xff]
        %v859 = vld [vmem:[%s614 + $0x240] sm:$0xff]
        %v860 = vld [vmem:[%s614 + $0x248] sm:$0xff]
        %v861 = vld [vmem:[%s614 + $0x250] sm:$0xff]
        %v862 = vld [vmem:[%s614 + $0x258] sm:$0xff]
        %v863 = vld [vmem:[%s614 + $0x260] sm:$0xff]
        %v864 = vld [vmem:[%s614 + $0x268] sm:$0xff]
        %v865 = vld [vmem:[%s614 + $0x270] sm:$0xff]
        %v866 = vld [vmem:[%s614 + $0x278] sm:$0xff]
        %v867 = vld [vmem:[%s614 + $0x280] sm:$0xff]
        %v868 = vld [vmem:[%s614 + $0x288] sm:$0xff]
        %v869 = vld [vmem:[%s614 + $0x290] sm:$0xff]
        %v870 = vld [vmem:[%s614 + $0x298] sm:$0xff]
        %v871 = vld [vmem:[%s614 + $0x2a0] sm:$0xff]
        %v872 = vld [vmem:[%s614 + $0x2a8] sm:$0xff]
        %v873 = vld [vmem:[%s614 + $0x2b0] sm:$0xff]
        %v874 = vld [vmem:[%s614 + $0x2b8] sm:$0xff]
        %v875 = vld [vmem:[%s614 + $0x2c0] sm:$0xff]
        %v876 = vld [vmem:[%s614 + $0x2c8] sm:$0xff]
        %v877 = vld [vmem:[%s614 + $0x2d0] sm:$0xff]
        %v878 = vld [vmem:[%s614 + $0x2d8] sm:$0xff]
        %v879 = vld [vmem:[%s614 + $0x2e0] sm:$0xff]
        %v880 = vld [vmem:[%s614 + $0x2e8] sm:$0xff]
        %v881 = vld [vmem:[%s614 + $0x2f0] sm:$0xff]
        %v882 = vld [vmem:[%s614 + $0x2f8] sm:$0xff]
        %v979 = vunpack.c.l.b16 %v787
        %v980 = vunpack.c.h.b16 %v787
        %v981 = vunpack.c.l.b16 %v788
        %v982 = vunpack.c.h.b16 %v788
        %v983 = vunpack.c.l.b16 %v789
        %v984 = vunpack.c.h.b16 %v789
        %v985 = vunpack.c.l.b16 %v790
        %v986 = vunpack.c.h.b16 %v790
        %v987 = vunpack.c.l.b16 %v791
        %v988 = vunpack.c.h.b16 %v791
        %v989 = vunpack.c.l.b16 %v792
        %v990 = vunpack.c.h.b16 %v792
        %v991 = vunpack.c.l.b16 %v793
        %v992 = vunpack.c.h.b16 %v793
        %v993 = vunpack.c.l.b16 %v794
        %v994 = vunpack.c.h.b16 %v794
        %v995 = vunpack.c.l.b16 %v795
        %v996 = vunpack.c.h.b16 %v795
        %v997 = vunpack.c.l.b16 %v796
        %v998 = vunpack.c.h.b16 %v796
        %v999 = vunpack.c.l.b16 %v797
        %v1000 = vunpack.c.h.b16 %v797
        %v1001 = vunpack.c.l.b16 %v798
        %v1002 = vunpack.c.h.b16 %v798
        %v1003 = vunpack.c.l.b16 %v799
        %v1004 = vunpack.c.h.b16 %v799
        %v1005 = vunpack.c.l.b16 %v800
        %v1006 = vunpack.c.h.b16 %v800
        %v1007 = vunpack.c.l.b16 %v801
        %v1008 = vunpack.c.h.b16 %v801
        %v1009 = vunpack.c.l.b16 %v802
        %v1010 = vunpack.c.h.b16 %v802
        %v1011 = vunpack.c.l.b16 %v803
        %v1012 = vunpack.c.h.b16 %v803
        %v1013 = vunpack.c.l.b16 %v804
        %v1014 = vunpack.c.h.b16 %v804
        %v1015 = vunpack.c.l.b16 %v805
        %v1016 = vunpack.c.h.b16 %v805
        %v1017 = vunpack.c.l.b16 %v806
        %v1018 = vunpack.c.h.b16 %v806
        %v1019 = vunpack.c.l.b16 %v807
        %v1020 = vunpack.c.h.b16 %v807
        %v1021 = vunpack.c.l.b16 %v808
        %v1022 = vunpack.c.h.b16 %v808
        %v1023 = vunpack.c.l.b16 %v809
        %v1024 = vunpack.c.h.b16 %v809
        %v1025 = vunpack.c.l.b16 %v810
        %v1026 = vunpack.c.h.b16 %v810
        %v1027 = vunpack.c.l.b16 %v811
        %v1028 = vunpack.c.h.b16 %v811
        %v1029 = vunpack.c.l.b16 %v812
        %v1030 = vunpack.c.h.b16 %v812
        %v1031 = vunpack.c.l.b16 %v813
        %v1032 = vunpack.c.h.b16 %v813
        %v1033 = vunpack.c.l.b16 %v814
        %v1034 = vunpack.c.h.b16 %v814
        %v1035 = vunpack.c.l.b16 %v815
        %v1036 = vunpack.c.h.b16 %v815
        %v1037 = vunpack.c.l.b16 %v816
        %v1038 = vunpack.c.h.b16 %v816
        %v1039 = vunpack.c.l.b16 %v817
        %v1040 = vunpack.c.h.b16 %v817
        %v1041 = vunpack.c.l.b16 %v818
        %v1042 = vunpack.c.h.b16 %v818
        %v1043 = vunpack.c.l.b16 %v819
        %v1044 = vunpack.c.h.b16 %v819
        %v1045 = vunpack.c.l.b16 %v820
        %v1046 = vunpack.c.h.b16 %v820
        %v1047 = vunpack.c.l.b16 %v821
        %v1048 = vunpack.c.h.b16 %v821
        %v1049 = vunpack.c.l.b16 %v822
        %v1050 = vunpack.c.h.b16 %v822
        %v1051 = vunpack.c.l.b16 %v823
        %v1052 = vunpack.c.h.b16 %v823
        %v1053 = vunpack.c.l.b16 %v824
        %v1054 = vunpack.c.h.b16 %v824
        %v1055 = vunpack.c.l.b16 %v825
        %v1056 = vunpack.c.h.b16 %v825
        %v1057 = vunpack.c.l.b16 %v826
        %v1058 = vunpack.c.h.b16 %v826
        %v1059 = vunpack.c.l.b16 %v827
        %v1060 = vunpack.c.h.b16 %v827
        %v1061 = vunpack.c.l.b16 %v828
        %v1062 = vunpack.c.h.b16 %v828
        %v1063 = vunpack.c.l.b16 %v829
        %v1064 = vunpack.c.h.b16 %v829
        %v1065 = vunpack.c.l.b16 %v830
        %v1066 = vunpack.c.h.b16 %v830
        %v1067 = vunpack.c.l.b16 %v831
        %v1068 = vunpack.c.h.b16 %v831
        %v1069 = vunpack.c.l.b16 %v832
        %v1070 = vunpack.c.h.b16 %v832
        %v1071 = vunpack.c.l.b16 %v833
        %v1072 = vunpack.c.h.b16 %v833
        %v1073 = vunpack.c.l.b16 %v834
        %v1074 = vunpack.c.h.b16 %v834
        %v1075 = vunpack.c.l.b16 %v835
        %v1076 = vunpack.c.h.b16 %v835
        %v1077 = vunpack.c.l.b16 %v836
        %v1078 = vunpack.c.h.b16 %v836
        %v1079 = vunpack.c.l.b16 %v837
        %v1080 = vunpack.c.h.b16 %v837
        %v1081 = vunpack.c.l.b16 %v838
        %v1082 = vunpack.c.h.b16 %v838
        %v1083 = vunpack.c.l.b16 %v839
        %v1084 = vunpack.c.h.b16 %v839
        %v1085 = vunpack.c.l.b16 %v840
        %v1086 = vunpack.c.h.b16 %v840
        %v1087 = vunpack.c.l.b16 %v841
        %v1088 = vunpack.c.h.b16 %v841
        %v1089 = vunpack.c.l.b16 %v842
        %v1090 = vunpack.c.h.b16 %v842
        %v1091 = vunpack.c.l.b16 %v843
        %v1092 = vunpack.c.h.b16 %v843
        %v1093 = vunpack.c.l.b16 %v844
        %v1094 = vunpack.c.h.b16 %v844
        %v1095 = vunpack.c.l.b16 %v845
        %v1096 = vunpack.c.h.b16 %v845
        %v1097 = vunpack.c.l.b16 %v846
        %v1098 = vunpack.c.h.b16 %v846
        %v1099 = vunpack.c.l.b16 %v847
        %v1100 = vunpack.c.h.b16 %v847
        %v1101 = vunpack.c.l.b16 %v848
        %v1102 = vunpack.c.h.b16 %v848
        %v1103 = vunpack.c.l.b16 %v849
        %v1104 = vunpack.c.h.b16 %v849
        %v1105 = vunpack.c.l.b16 %v850
        %v1106 = vunpack.c.h.b16 %v850
        %v1107 = vunpack.c.l.b16 %v851
        %v1108 = vunpack.c.h.b16 %v851
        %v1109 = vunpack.c.l.b16 %v852
        %v1110 = vunpack.c.h.b16 %v852
        %v1111 = vunpack.c.l.b16 %v853
        %v1112 = vunpack.c.h.b16 %v853
        %v1113 = vunpack.c.l.b16 %v854
        %v1114 = vunpack.c.h.b16 %v854
        %v1115 = vunpack.c.l.b16 %v855
        %v1116 = vunpack.c.h.b16 %v855
        %v1117 = vunpack.c.l.b16 %v856
        %v1118 = vunpack.c.h.b16 %v856
        %v1119 = vunpack.c.l.b16 %v857
        %v1120 = vunpack.c.h.b16 %v857
        %v1121 = vunpack.c.l.b16 %v858
        %v1122 = vunpack.c.h.b16 %v858
        %v1123 = vunpack.c.l.b16 %v859
        %v1124 = vunpack.c.h.b16 %v859
        %v1125 = vunpack.c.l.b16 %v860
        %v1126 = vunpack.c.h.b16 %v860
        %v1127 = vunpack.c.l.b16 %v861
        %v1128 = vunpack.c.h.b16 %v861
        %v1129 = vunpack.c.l.b16 %v862
        %v1130 = vunpack.c.h.b16 %v862
        %v1131 = vunpack.c.l.b16 %v863
        %v1132 = vunpack.c.h.b16 %v863
        %v1133 = vunpack.c.l.b16 %v864
        %v1134 = vunpack.c.h.b16 %v864
        %v1135 = vunpack.c.l.b16 %v865
        %v1136 = vunpack.c.h.b16 %v865
        %v1137 = vunpack.c.l.b16 %v866
        %v1138 = vunpack.c.h.b16 %v866
        %v1139 = vunpack.c.l.b16 %v867
        %v1140 = vunpack.c.h.b16 %v867
        %v1141 = vunpack.c.l.b16 %v868
        %v1142 = vunpack.c.h.b16 %v868
        %v1143 = vunpack.c.l.b16 %v869
        %v1144 = vunpack.c.h.b16 %v869
        %v1145 = vunpack.c.l.b16 %v870
        %v1146 = vunpack.c.h.b16 %v870
        %v1147 = vunpack.c.l.b16 %v871
        %v1148 = vunpack.c.h.b16 %v871
        %v1149 = vunpack.c.l.b16 %v872
        %v1150 = vunpack.c.h.b16 %v872
        %v1151 = vunpack.c.l.b16 %v873
        %v1152 = vunpack.c.h.b16 %v873
        %v1153 = vunpack.c.l.b16 %v874
        %v1154 = vunpack.c.h.b16 %v874
        %v1155 = vunpack.c.l.b16 %v875
        %v1156 = vunpack.c.h.b16 %v875
        %v1157 = vunpack.c.l.b16 %v876
        %v1158 = vunpack.c.h.b16 %v876
        %v1159 = vunpack.c.l.b16 %v877
        %v1160 = vunpack.c.h.b16 %v877
        %v1161 = vunpack.c.l.b16 %v878
        %v1162 = vunpack.c.h.b16 %v878
        %v1163 = vunpack.c.l.b16 %v879
        %v1164 = vunpack.c.h.b16 %v879
        %v1165 = vunpack.c.l.b16 %v880
        %v1166 = vunpack.c.h.b16 %v880
        %v1167 = vunpack.c.l.b16 %v881
        %v1168 = vunpack.c.h.b16 %v881
        %v1169 = vunpack.c.l.b16 %v882
        %v1170 = vunpack.c.h.b16 %v882
        %v1171 = vpack.c.b16 %v991, %v979
        %v1172 = vpack.c.b16 %v992, %v980
        %v1173 = vpack.c.b16 %v993, %v981
        %v1174 = vpack.c.b16 %v994, %v982
        %v1175 = vpack.c.b16 %v995, %v983
        %v1176 = vpack.c.b16 %v996, %v984
        %v1177 = vpack.c.b16 %v997, %v985
        %v1178 = vpack.c.b16 %v998, %v986
        %v1179 = vpack.c.b16 %v999, %v987
        %v1180 = vpack.c.b16 %v1000, %v988
        %v1181 = vpack.c.b16 %v1001, %v989
        %v1182 = vpack.c.b16 %v1002, %v990
        %v1183 = vpack.c.b16 %v1015, %v1003
        %v1184 = vpack.c.b16 %v1016, %v1004
        %v1185 = vpack.c.b16 %v1017, %v1005
        %v1186 = vpack.c.b16 %v1018, %v1006
        %v1187 = vpack.c.b16 %v1019, %v1007
        %v1188 = vpack.c.b16 %v1020, %v1008
        %v1189 = vpack.c.b16 %v1021, %v1009
        %v1190 = vpack.c.b16 %v1022, %v1010
        %v1191 = vpack.c.b16 %v1023, %v1011
        %v1192 = vpack.c.b16 %v1024, %v1012
        %v1193 = vpack.c.b16 %v1025, %v1013
        %v1194 = vpack.c.b16 %v1026, %v1014
        %v1195 = vpack.c.b16 %v1039, %v1027
        %v1196 = vpack.c.b16 %v1040, %v1028
        %v1197 = vpack.c.b16 %v1041, %v1029
        %v1198 = vpack.c.b16 %v1042, %v1030
        %v1199 = vpack.c.b16 %v1043, %v1031
        %v1200 = vpack.c.b16 %v1044, %v1032
        %v1201 = vpack.c.b16 %v1045, %v1033
        %v1202 = vpack.c.b16 %v1046, %v1034
        %v1203 = vpack.c.b16 %v1047, %v1035
        %v1204 = vpack.c.b16 %v1048, %v1036
        %v1205 = vpack.c.b16 %v1049, %v1037
        %v1206 = vpack.c.b16 %v1050, %v1038
        %v1207 = vpack.c.b16 %v1063, %v1051
        %v1208 = vpack.c.b16 %v1064, %v1052
        %v1209 = vpack.c.b16 %v1065, %v1053
        %v1210 = vpack.c.b16 %v1066, %v1054
        %v1211 = vpack.c.b16 %v1067, %v1055
        %v1212 = vpack.c.b16 %v1068, %v1056
        %v1213 = vpack.c.b16 %v1069, %v1057
        %v1214 = vpack.c.b16 %v1070, %v1058
        %v1215 = vpack.c.b16 %v1071, %v1059
        %v1216 = vpack.c.b16 %v1072, %v1060
        %v1217 = vpack.c.b16 %v1073, %v1061
        %v1218 = vpack.c.b16 %v1074, %v1062
        %v1219 = vpack.c.b16 %v1087, %v1075
        %v1220 = vpack.c.b16 %v1088, %v1076
        %v1221 = vpack.c.b16 %v1089, %v1077
        %v1222 = vpack.c.b16 %v1090, %v1078
        %v1223 = vpack.c.b16 %v1091, %v1079
        %v1224 = vpack.c.b16 %v1092, %v1080
        %v1225 = vpack.c.b16 %v1093, %v1081
        %v1226 = vpack.c.b16 %v1094, %v1082
        %v1227 = vpack.c.b16 %v1095, %v1083
        %v1228 = vpack.c.b16 %v1096, %v1084
        %v1229 = vpack.c.b16 %v1097, %v1085
        %v1230 = vpack.c.b16 %v1098, %v1086
        %v1231 = vpack.c.b16 %v1111, %v1099
        %v1232 = vpack.c.b16 %v1112, %v1100
        %v1233 = vpack.c.b16 %v1113, %v1101
        %v1234 = vpack.c.b16 %v1114, %v1102
        %v1235 = vpack.c.b16 %v1115, %v1103
        %v1236 = vpack.c.b16 %v1116, %v1104
        %v1237 = vpack.c.b16 %v1117, %v1105
        %v1238 = vpack.c.b16 %v1118, %v1106
        %v1239 = vpack.c.b16 %v1119, %v1107
        %v1240 = vpack.c.b16 %v1120, %v1108
        %v1241 = vpack.c.b16 %v1121, %v1109
        %v1242 = vpack.c.b16 %v1122, %v1110
        %v1243 = vpack.c.b16 %v1135, %v1123
        %v1244 = vpack.c.b16 %v1136, %v1124
        %v1245 = vpack.c.b16 %v1137, %v1125
        %v1246 = vpack.c.b16 %v1138, %v1126
        %v1247 = vpack.c.b16 %v1139, %v1127
        %v1248 = vpack.c.b16 %v1140, %v1128
        %v1249 = vpack.c.b16 %v1141, %v1129
        %v1250 = vpack.c.b16 %v1142, %v1130
        %v1251 = vpack.c.b16 %v1143, %v1131
        %v1252 = vpack.c.b16 %v1144, %v1132
        %v1253 = vpack.c.b16 %v1145, %v1133
        %v1254 = vpack.c.b16 %v1146, %v1134
        %v1255 = vpack.c.b16 %v1159, %v1147
        %v1256 = vpack.c.b16 %v1160, %v1148
        %v1257 = vpack.c.b16 %v1161, %v1149
        %v1258 = vpack.c.b16 %v1162, %v1150
        %v1259 = vpack.c.b16 %v1163, %v1151
        %v1260 = vpack.c.b16 %v1164, %v1152
        %v1261 = vpack.c.b16 %v1165, %v1153
        %v1262 = vpack.c.b16 %v1166, %v1154
        %v1263 = vpack.c.b16 %v1167, %v1155
        %v1264 = vpack.c.b16 %v1168, %v1156
        %v1265 = vpack.c.b16 %v1169, %v1157
        %v1266 = vpack.c.b16 %v1170, %v1158
        %1363 = vmatprep.subr.bf16.mxu0 %v1172
        %1364 = vmatpush1.bf16.msra.mxu0 %v1171
        %1365 = vmatprep.subr.bf16.mxu0 %v1184
        %1366 = vmatpush1.bf16.msra.mxu0 %v1183
        %1367 = vmatprep.subr.bf16.mxu0 %v1196
        %1368 = vmatpush1.bf16.msra.mxu0 %v1195
        %1369 = vmatprep.subr.bf16.mxu0 %v1208
        %1370 = vmatpush1.bf16.msra.mxu0 %v1207
        %1371 = vmatprep.subr.bf16.mxu0 %v1220
        %1372 = vmatpush1.bf16.msra.mxu0 %v1219
        %1373 = vmatprep.subr.bf16.mxu0 %v1232
        %1374 = vmatpush1.bf16.msra.mxu0 %v1231
        %1375 = vmatprep.subr.bf16.mxu0 %v1244
        %1376 = vmatpush1.bf16.msra.mxu0 %v1243
        %1377 = vmatprep.subr.bf16.mxu0 %v1256
        %1378 = vmatpush1.bf16.msra.mxu0 %v1255
        %1379 = vmatprep.subr.bf16.mxu0 0
        %1380 = vmatpush1.bf16.msra.mxu0 0
        %1381 = vmatprep.subr.bf16.mxu0 0
        %1382 = vmatpush1.bf16.msra.mxu0 0
        %1383 = vmatprep.subr.bf16.mxu0 0
        %1384 = vmatpush1.bf16.msra.mxu0 0
        %1385 = vmatprep.subr.bf16.mxu0 0
        %1386 = vmatpush1.bf16.msra.mxu0 0
        %1387 = vmatprep.subr.bf16.mxu0 0
        %1388 = vmatpush1.bf16.msra.mxu0 0
        %1389 = vmatprep.subr.bf16.mxu0 0
        %1390 = vmatpush1.bf16.msra.mxu0 0
        %1391 = vmatprep.subr.bf16.mxu0 0
        %1392 = vmatpush1.bf16.msra.mxu0 0
        %1393 = vmatprep.subr.bf16.mxu0 0
        %1394 = vmatpush1.bf16.msra.mxu0 0
        %1395 = vmatprep.mubr.bf16.mxu0 0
        %1396 = vmatmul.mubr.bf16.gmra.mrb[0].mxu0 %v786
        %v1397 = vpop.f32.mrb[0].mxu0
        %v1398 = vadd.f32 0.0, %v1397
        %v1399 = vpop.f32.mrb[0].mxu0
        %v1400 = vadd.f32 0.0, %v1399
        %v1401 = vpop.f32.mrb[0].mxu0
        %v1402 = vpop.f32.mrb[0].mxu0
        %1403 = vdwg.mxu0
        %1404 = vmatprep.subr.bf16.mxu0 %v1174
        %1405 = vmatpush1.bf16.msra.mxu0 %v1173
        %1406 = vmatprep.subr.bf16.mxu0 %v1186
        %1407 = vmatpush1.bf16.msra.mxu0 %v1185
        %1408 = vmatprep.subr.bf16.mxu0 %v1198
        %1409 = vmatpush1.bf16.msra.mxu0 %v1197
        %1410 = vmatprep.subr.bf16.mxu0 %v1210
        %1411 = vmatpush1.bf16.msra.mxu0 %v1209
        %1412 = vmatprep.subr.bf16.mxu0 %v1222
        %1413 = vmatpush1.bf16.msra.mxu0 %v1221
        %1414 = vmatprep.subr.bf16.mxu0 %v1234
        %1415 = vmatpush1.bf16.msra.mxu0 %v1233
        %1416 = vmatprep.subr.bf16.mxu0 %v1246
        %1417 = vmatpush1.bf16.msra.mxu0 %v1245
        %1418 = vmatprep.subr.bf16.mxu0 %v1258
        %1419 = vmatpush1.bf16.msra.mxu0 %v1257
        %1420 = vmatprep.subr.bf16.mxu0 0
        %1421 = vmatpush1.bf16.msra.mxu0 0
        %1422 = vmatprep.subr.bf16.mxu0 0
        %1423 = vmatpush1.bf16.msra.mxu0 0
        %1424 = vmatprep.subr.bf16.mxu0 0
        %1425 = vmatpush1.bf16.msra.mxu0 0
        %1426 = vmatprep.subr.bf16.mxu0 0
        %1427 = vmatpush1.bf16.msra.mxu0 0
        %1428 = vmatprep.subr.bf16.mxu0 0
        %1429 = vmatpush1.bf16.msra.mxu0 0
        %1430 = vmatprep.subr.bf16.mxu0 0
        %1431 = vmatpush1.bf16.msra.mxu0 0
        %1432 = vmatprep.subr.bf16.mxu0 0
        %1433 = vmatpush1.bf16.msra.mxu0 0
        %1434 = vmatprep.subr.bf16.mxu0 0
        %1435 = vmatpush1.bf16.msra.mxu0 0
        %1436 = vmatprep.mubr.bf16.mxu0 0
        %1437 = vmatmul.mubr.bf16.gmra.mrb[0].mxu0 %v786
        %v1438 = vpop.f32.mrb[0].mxu0
        %v1439 = vadd.f32 0.0, %v1438
        %v1440 = vpop.f32.mrb[0].mxu0
        %v1441 = vadd.f32 0.0, %v1440
        %v1442 = vpop.f32.mrb[0].mxu0
        %v1443 = vpop.f32.mrb[0].mxu0
        %1444 = vdwg.mxu0
        %1445 = vmatprep.subr.bf16.mxu0 %v1176
        %1446 = vmatpush1.bf16.msra.mxu0 %v1175
        %1447 = vmatprep.subr.bf16.mxu0 %v1188
        %1448 = vmatpush1.bf16.msra.mxu0 %v1187
        %1449 = vmatprep.subr.bf16.mxu0 %v1200
        %1450 = vmatpush1.bf16.msra.mxu0 %v1199
        %1451 = vmatprep.subr.bf16.mxu0 %v1212
        %1452 = vmatpush1.bf16.msra.mxu0 %v1211
        %1453 = vmatprep.subr.bf16.mxu0 %v1224
        %1454 = vmatpush1.bf16.msra.mxu0 %v1223
        %1455 = vmatprep.subr.bf16.mxu0 %v1236
        %1456 = vmatpush1.bf16.msra.mxu0 %v1235
        %1457 = vmatprep.subr.bf16.mxu0 %v1248
        %1458 = vmatpush1.bf16.msra.mxu0 %v1247
        %1459 = vmatprep.subr.bf16.mxu0 %v1260
        %1460 = vmatpush1.bf16.msra.mxu0 %v1259
        %1461 = vmatprep.subr.bf16.mxu0 0
        %1462 = vmatpush1.bf16.msra.mxu0 0
        %1463 = vmatprep.subr.bf16.mxu0 0
        %1464 = vmatpush1.bf16.msra.mxu0 0
        %1465 = vmatprep.subr.bf16.mxu0 0
        %1466 = vmatpush1.bf16.msra.mxu0 0
        %1467 = vmatprep.subr.bf16.mxu0 0
        %1468 = vmatpush1.bf16.msra.mxu0 0
        %1469 = vmatprep.subr.bf16.mxu0 0
        %1470 = vmatpush1.bf16.msra.mxu0 0
        %1471 = vmatprep.subr.bf16.mxu0 0
        %1472 = vmatpush1.bf16.msra.mxu0 0
        %1473 = vmatprep.subr.bf16.mxu0 0
        %1474 = vmatpush1.bf16.msra.mxu0 0
        %1475 = vmatprep.subr.bf16.mxu0 0
        %1476 = vmatpush1.bf16.msra.mxu0 0
        %1477 = vmatprep.mubr.bf16.mxu0 0
        %1478 = vmatmul.mubr.bf16.gmra.mrb[0].mxu0 %v786
        %v1479 = vpop.f32.mrb[0].mxu0
        %v1480 = vadd.f32 0.0, %v1479
        %v1481 = vpop.f32.mrb[0].mxu0
        %v1482 = vadd.f32 0.0, %v1481
        %v1483 = vpop.f32.mrb[0].mxu0
        %v1484 = vpop.f32.mrb[0].mxu0
        %1485 = vdwg.mxu0
        %1486 = vmatprep.subr.bf16.mxu0 %v1178
        %1487 = vmatpush1.bf16.msra.mxu0 %v1177
        %1488 = vmatprep.subr.bf16.mxu0 %v1190
        %1489 = vmatpush1.bf16.msra.mxu0 %v1189
        %1490 = vmatprep.subr.bf16.mxu0 %v1202
        %1491 = vmatpush1.bf16.msra.mxu0 %v1201
        %1492 = vmatprep.subr.bf16.mxu0 %v1214
        %1493 = vmatpush1.bf16.msra.mxu0 %v1213
        %1494 = vmatprep.subr.bf16.mxu0 %v1226
        %1495 = vmatpush1.bf16.msra.mxu0 %v1225
        %1496 = vmatprep.subr.bf16.mxu0 %v1238
        %1497 = vmatpush1.bf16.msra.mxu0 %v1237
        %1498 = vmatprep.subr.bf16.mxu0 %v1250
        %1499 = vmatpush1.bf16.msra.mxu0 %v1249
        %1500 = vmatprep.subr.bf16.mxu0 %v1262
        %1501 = vmatpush1.bf16.msra.mxu0 %v1261
        %1502 = vmatprep.subr.bf16.mxu0 0
        %1503 = vmatpush1.bf16.msra.mxu0 0
        %1504 = vmatprep.subr.bf16.mxu0 0
        %1505 = vmatpush1.bf16.msra.mxu0 0
        %1506 = vmatprep.subr.bf16.mxu0 0
        %1507 = vmatpush1.bf16.msra.mxu0 0
        %1508 = vmatprep.subr.bf16.mxu0 0
        %1509 = vmatpush1.bf16.msra.mxu0 0
        %1510 = vmatprep.subr.bf16.mxu0 0
        %1511 = vmatpush1.bf16.msra.mxu0 0
        %1512 = vmatprep.subr.bf16.mxu0 0
        %1513 = vmatpush1.bf16.msra.mxu0 0
        %1514 = vmatprep.subr.bf16.mxu0 0
        %1515 = vmatpush1.bf16.msra.mxu0 0
        %1516 = vmatprep.subr.bf16.mxu0 0
        %1517 = vmatpush1.bf16.msra.mxu0 0
        %1518 = vmatprep.mubr.bf16.mxu0 0
        %1519 = vmatmul.mubr.bf16.gmra.mrb[0].mxu0 %v786
        %v1520 = vpop.f32.mrb[0].mxu0
        %v1521 = vadd.f32 0.0, %v1520
        %v1522 = vpop.f32.mrb[0].mxu0
        %v1523 = vadd.f32 0.0, %v1522
        %v1524 = vpop.f32.mrb[0].mxu0
        %v1525 = vpop.f32.mrb[0].mxu0
        %1526 = vdwg.mxu0
        %1527 = vmatprep.subr.bf16.mxu0 %v1180
        %1528 = vmatpush1.bf16.msra.mxu0 %v1179
        %1529 = vmatprep.subr.bf16.mxu0 %v1192
        %1530 = vmatpush1.bf16.msra.mxu0 %v1191
        %1531 = vmatprep.subr.bf16.mxu0 %v1204
        %1532 = vmatpush1.bf16.msra.mxu0 %v1203
        %1533 = vmatprep.subr.bf16.mxu0 %v1216
        %1534 = vmatpush1.bf16.msra.mxu0 %v1215
        %1535 = vmatprep.subr.bf16.mxu0 %v1228
        %1536 = vmatpush1.bf16.msra.mxu0 %v1227
        %1537 = vmatprep.subr.bf16.mxu0 %v1240
        %1538 = vmatpush1.bf16.msra.mxu0 %v1239
        %1539 = vmatprep.subr.bf16.mxu0 %v1252
        %1540 = vmatpush1.bf16.msra.mxu0 %v1251
        %1541 = vmatprep.subr.bf16.mxu0 %v1264
        %1542 = vmatpush1.bf16.msra.mxu0 %v1263
        %1543 = vmatprep.subr.bf16.mxu0 0
        %1544 = vmatpush1.bf16.msra.mxu0 0
        %1545 = vmatprep.subr.bf16.mxu0 0
        %1546 = vmatpush1.bf16.msra.mxu0 0
        %1547 = vmatprep.subr.bf16.mxu0 0
        %1548 = vmatpush1.bf16.msra.mxu0 0
        %1549 = vmatprep.subr.bf16.mxu0 0
        %1550 = vmatpush1.bf16.msra.mxu0 0
        %1551 = vmatprep.subr.bf16.mxu0 0
        %1552 = vmatpush1.bf16.msra.mxu0 0
        %1553 = vmatprep.subr.bf16.mxu0 0
        %1554 = vmatpush1.bf16.msra.mxu0 0
        %1555 = vmatprep.subr.bf16.mxu0 0
        %1556 = vmatpush1.bf16.msra.mxu0 0
        %1557 = vmatprep.subr.bf16.mxu0 0
        %1558 = vmatpush1.bf16.msra.mxu0 0
        %1559 = vmatprep.mubr.bf16.mxu0 0
        %1560 = vmatmul.mubr.bf16.gmra.mrb[0].mxu0 %v786
        %v1561 = vpop.f32.mrb[0].mxu0
        %v1562 = vadd.f32 0.0, %v1561
        %v1563 = vpop.f32.mrb[0].mxu0
        %v1564 = vadd.f32 0.0, %v1563
        %v1565 = vpop.f32.mrb[0].mxu0
        %v1566 = vpop.f32.mrb[0].mxu0
        %1567 = vdwg.mxu0
        %1568 = vmatprep.subr.bf16.mxu0 %v1182
        %1569 = vmatpush1.bf16.msra.mxu0 %v1181
        %1570 = vmatprep.subr.bf16.mxu0 %v1194
        %1571 = vmatpush1.bf16.msra.mxu0 %v1193
        %1572 = vmatprep.subr.bf16.mxu0 %v1206
        %1573 = vmatpush1.bf16.msra.mxu0 %v1205
        %1574 = vmatprep.subr.bf16.mxu0 %v1218
        %1575 = vmatpush1.bf16.msra.mxu0 %v1217
        %1576 = vmatprep.subr.bf16.mxu0 %v1230
        %1577 = vmatpush1.bf16.msra.mxu0 %v1229
        %1578 = vmatprep.subr.bf16.mxu0 %v1242
        %1579 = vmatpush1.bf16.msra.mxu0 %v1241
        %1580 = vmatprep.subr.bf16.mxu0 %v1254
        %1581 = vmatpush1.bf16.msra.mxu0 %v1253
        %1582 = vmatprep.subr.bf16.mxu0 %v1266
        %1583 = vmatpush1.bf16.msra.mxu0 %v1265
        %1584 = vmatprep.subr.bf16.mxu0 0
        %1585 = vmatpush1.bf16.msra.mxu0 0
        %1586 = vmatprep.subr.bf16.mxu0 0
        %1587 = vmatpush1.bf16.msra.mxu0 0
        %1588 = vmatprep.subr.bf16.mxu0 0
        %1589 = vmatpush1.bf16.msra.mxu0 0
        %1590 = vmatprep.subr.bf16.mxu0 0
        %1591 = vmatpush1.bf16.msra.mxu0 0
        %1592 = vmatprep.subr.bf16.mxu0 0
        %1593 = vmatpush1.bf16.msra.mxu0 0
        %1594 = vmatprep.subr.bf16.mxu0 0
        %1595 = vmatpush1.bf16.msra.mxu0 0
        %1596 = vmatprep.subr.bf16.mxu0 0
        %1597 = vmatpush1.bf16.msra.mxu0 0
        %1598 = vmatprep.subr.bf16.mxu0 0
        %1599 = vmatpush1.bf16.msra.mxu0 0
        %1600 = vmatprep.mubr.bf16.mxu0 0
        %1601 = vmatmul.mubr.bf16.gmra.mrb[0].mxu0 %v786
        %v1602 = vpop.f32.mrb[0].mxu0
        %v1603 = vadd.f32 0.0, %v1602
        %v1604 = vpop.f32.mrb[0].mxu0
        %v1605 = vadd.f32 0.0, %v1604
        %v1606 = vpop.f32.mrb[0].mxu0
        %v1607 = vpop.f32.mrb[0].mxu0
        %1608 = vdwg.mxu0
        %1610 = vrot.lane.b32.xlu0 %v1398, 64
        %v1611 = vpop.permute.xlu0 %1610
        %1613 = vrot.lane.b32.xlu0 %v1400, 64
        %v1614 = vpop.permute.xlu0 %1613
        %1616 = vrot.lane.b32.xlu0 %v1439, 64
        %v1617 = vpop.permute.xlu0 %1616
        %1619 = vrot.lane.b32.xlu0 %v1441, 64
        %v1620 = vpop.permute.xlu0 %1619
        %1622 = vrot.lane.b32.xlu0 %v1480, 64
        %v1623 = vpop.permute.xlu0 %1622
        %1626 = vrot.lane.b32.xlu0 %v1482, 64
        %v1627 = vpop.permute.xlu0 %1626
        %1630 = vrot.lane.b32.xlu0 %v1521, 64
        %v1631 = vpop.permute.xlu0 %1630
        %1634 = vrot.lane.b32.xlu0 %v1523, 64
        %v1635 = vpop.permute.xlu0 %1634
        %1638 = vrot.lane.b32.xlu0 %v1562, 64
        %v1639 = vpop.permute.xlu0 %1638
        %1642 = vrot.lane.b32.xlu0 %v1564, 64
        %v1643 = vpop.permute.xlu0 %1642
        %1646 = vrot.lane.b32.xlu0 %v1603, 64
        %v1647 = vpop.permute.xlu0 %1646
        %1650 = vrot.lane.b32.xlu0 %v1605, 64
        %v1651 = vpop.permute.xlu0 %1650
        %1653 = vxpose.xlu0.b32.start [1/16] %v1480, 128
        %1654 = vxpose.xlu0.b32.cont [2/16] 0.0, 128
        %1655 = vxpose.xlu0.b32.cont [3/16] 0.0, 128
        %1656 = vxpose.xlu0.b32.cont [4/16] 0.0, 128
        %1657 = vxpose.xlu0.b32.cont [5/16] 0.0, 128
        %1658 = vxpose.xlu0.b32.cont [6/16] 0.0, 128
        %1659 = vxpose.xlu0.b32.cont [7/16] 0.0, 128
        %1660 = vxpose.xlu0.b32.cont [8/16] 0.0, 128
        %1661 = vxpose.xlu0.b32.cont [9/16] 0.0, 128
        %1662 = vxpose.xlu0.b32.cont [10/16] 0.0, 128
        %1663 = vxpose.xlu0.b32.cont [11/16] 0.0, 128
        %1664 = vxpose.xlu0.b32.cont [12/16] 0.0, 128
        %1665 = vxpose.xlu0.b32.cont [13/16] 0.0, 128
        %1666 = vxpose.xlu0.b32.cont [14/16] 0.0, 128
        %1667 = vxpose.xlu0.b32.cont [15/16] 0.0, 128
        %1668 = vxpose.xlu0.b32.end [16/16] 0.0, 128
        %v1669 = vpop.trf.xlu0
        %v1670 = vpop.trf.xlu0
        %v1671 = vpop.trf.xlu0
        %v1672 = vpop.trf.xlu0
        %v1673 = vpop.trf.xlu0
        %v1674 = vpop.trf.xlu0
        %v1675 = vpop.trf.xlu0
        %v1676 = vpop.trf.xlu0
        %v1677 = vpop.trf.xlu0
        %v1678 = vpop.trf.xlu0
        %v1679 = vpop.trf.xlu0
        %v1680 = vpop.trf.xlu0
        %v1681 = vpop.trf.xlu0
        %v1682 = vpop.trf.xlu0
        %v1683 = vpop.trf.xlu0
        %v1684 = vpop.trf.xlu0
        %1685 = vxpose.xlu0.b32.start [1/16] %v1623, 128
        %1686 = vxpose.xlu0.b32.cont [2/16] 0.0, 128
        %1687 = vxpose.xlu0.b32.cont [3/16] 0.0, 128
        %1688 = vxpose.xlu0.b32.cont [4/16] 0.0, 128
        %1689 = vxpose.xlu0.b32.cont [5/16] 0.0, 128
        %1690 = vxpose.xlu0.b32.cont [6/16] 0.0, 128
        %1691 = vxpose.xlu0.b32.cont [7/16] 0.0, 128
        %1692 = vxpose.xlu0.b32.cont [8/16] 0.0, 128
        %1693 = vxpose.xlu0.b32.cont [9/16] 0.0, 128
        %1694 = vxpose.xlu0.b32.cont [10/16] 0.0, 128
        %1695 = vxpose.xlu0.b32.cont [11/16] 0.0, 128
        %1696 = vxpose.xlu0.b32.cont [12/16] 0.0, 128
        %1697 = vxpose.xlu0.b32.cont [13/16] 0.0, 128
        %1698 = vxpose.xlu0.b32.cont [14/16] 0.0, 128
        %1699 = vxpose.xlu0.b32.cont [15/16] 0.0, 128
        %1700 = vxpose.xlu0.b32.end [16/16] 0.0, 128
        %v1701 = vpop.trf.xlu0
        %v1702 = vpop.trf.xlu0
        %v1703 = vpop.trf.xlu0
        %v1704 = vpop.trf.xlu0
        %v1705 = vpop.trf.xlu0
        %v1706 = vpop.trf.xlu0
        %v1707 = vpop.trf.xlu0
        %v1708 = vpop.trf.xlu0
        %v1709 = vpop.trf.xlu0
        %v1710 = vpop.trf.xlu0
        %v1711 = vpop.trf.xlu0
        %v1712 = vpop.trf.xlu0
        %v1713 = vpop.trf.xlu0
        %v1714 = vpop.trf.xlu0
        %v1715 = vpop.trf.xlu0
        %v1716 = vpop.trf.xlu0
        %1717 = vxpose.xlu0.b32.start [1/16] %v1482, 128
        %1718 = vxpose.xlu0.b32.cont [2/16] 0.0, 128
        %1719 = vxpose.xlu0.b32.cont [3/16] 0.0, 128
        %1720 = vxpose.xlu0.b32.cont [4/16] 0.0, 128
        %1721 = vxpose.xlu0.b32.cont [5/16] 0.0, 128
        %1722 = vxpose.xlu0.b32.cont [6/16] 0.0, 128
        %1723 = vxpose.xlu0.b32.cont [7/16] 0.0, 128
        %1724 = vxpose.xlu0.b32.cont [8/16] 0.0, 128
        %1725 = vxpose.xlu0.b32.cont [9/16] 0.0, 128
        %1726 = vxpose.xlu0.b32.cont [10/16] 0.0, 128
        %1727 = vxpose.xlu0.b32.cont [11/16] 0.0, 128
        %1728 = vxpose.xlu0.b32.cont [12/16] 0.0, 128
        %1729 = vxpose.xlu0.b32.cont [13/16] 0.0, 128
        %1730 = vxpose.xlu0.b32.cont [14/16] 0.0, 128
        %1731 = vxpose.xlu0.b32.cont [15/16] 0.0, 128
        %1732 = vxpose.xlu0.b32.end [16/16] 0.0, 128
        %v1733 = vpop.trf.xlu0
        %v1734 = vpop.trf.xlu0
        %v1735 = vpop.trf.xlu0
        %v1736 = vpop.trf.xlu0
        %v1737 = vpop.trf.xlu0
        %v1738 = vpop.trf.xlu0
        %v1739 = vpop.trf.xlu0
        %v1740 = vpop.trf.xlu0
        %v1741 = vpop.trf.xlu0
        %v1742 = vpop.trf.xlu0
        %v1743 = vpop.trf.xlu0
        %v1744 = vpop.trf.xlu0
        %v1745 = vpop.trf.xlu0
        %v1746 = vpop.trf.xlu0
        %v1747 = vpop.trf.xlu0
        %v1748 = vpop.trf.xlu0
        %1749 = vxpose.xlu0.b32.start [1/16] %v1627, 128
        %1750 = vxpose.xlu0.b32.cont [2/16] 0.0, 128
        %1751 = vxpose.xlu0.b32.cont [3/16] 0.0, 128
        %1752 = vxpose.xlu0.b32.cont [4/16] 0.0, 128
        %1753 = vxpose.xlu0.b32.cont [5/16] 0.0, 128
        %1754 = vxpose.xlu0.b32.cont [6/16] 0.0, 128
        %1755 = vxpose.xlu0.b32.cont [7/16] 0.0, 128
        %1756 = vxpose.xlu0.b32.cont [8/16] 0.0, 128
        %1757 = vxpose.xlu0.b32.cont [9/16] 0.0, 128
        %1758 = vxpose.xlu0.b32.cont [10/16] 0.0, 128
        %1759 = vxpose.xlu0.b32.cont [11/16] 0.0, 128
        %1760 = vxpose.xlu0.b32.cont [12/16] 0.0, 128
        %1761 = vxpose.xlu0.b32.cont [13/16] 0.0, 128
        %1762 = vxpose.xlu0.b32.cont [14/16] 0.0, 128
        %1763 = vxpose.xlu0.b32.cont [15/16] 0.0, 128
        %1764 = vxpose.xlu0.b32.end [16/16] 0.0, 128
        %v1765 = vpop.trf.xlu0
        %v1766 = vpop.trf.xlu0
        %v1767 = vpop.trf.xlu0
        %v1768 = vpop.trf.xlu0
        %v1769 = vpop.trf.xlu0
        %v1770 = vpop.trf.xlu0
        %v1771 = vpop.trf.xlu0
        %v1772 = vpop.trf.xlu0
        %v1773 = vpop.trf.xlu0
        %v1774 = vpop.trf.xlu0
        %v1775 = vpop.trf.xlu0
        %v1776 = vpop.trf.xlu0
        %v1777 = vpop.trf.xlu0
        %v1778 = vpop.trf.xlu0
        %v1779 = vpop.trf.xlu0
        %v1780 = vpop.trf.xlu0
        %1781 = vxpose.xlu0.b32.start [1/16] %v1521, 128
        %1782 = vxpose.xlu0.b32.cont [2/16] 0.0, 128
        %1783 = vxpose.xlu0.b32.cont [3/16] 0.0, 128
        %1784 = vxpose.xlu0.b32.cont [4/16] 0.0, 128
        %1785 = vxpose.xlu0.b32.cont [5/16] 0.0, 128
        %1786 = vxpose.xlu0.b32.cont [6/16] 0.0, 128
        %1787 = vxpose.xlu0.b32.cont [7/16] 0.0, 128
        %1788 = vxpose.xlu0.b32.cont [8/16] 0.0, 128
        %1789 = vxpose.xlu0.b32.cont [9/16] 0.0, 128
        %1790 = vxpose.xlu0.b32.cont [10/16] 0.0, 128
        %1791 = vxpose.xlu0.b32.cont [11/16] 0.0, 128
        %1792 = vxpose.xlu0.b32.cont [12/16] 0.0, 128
        %1793 = vxpose.xlu0.b32.cont [13/16] 0.0, 128
        %1794 = vxpose.xlu0.b32.cont [14/16] 0.0, 128
        %1795 = vxpose.xlu0.b32.cont [15/16] 0.0, 128
        %1796 = vxpose.xlu0.b32.end [16/16] 0.0, 128
        %v1797 = vpop.trf.xlu0
        %v1798 = vpop.trf.xlu0
        %v1799 = vpop.trf.xlu0
        %v1800 = vpop.trf.xlu0
        %v1801 = vpop.trf.xlu0
        %v1802 = vpop.trf.xlu0
        %v1803 = vpop.trf.xlu0
        %v1804 = vpop.trf.xlu0
        %v1805 = vpop.trf.xlu0
        %v1806 = vpop.trf.xlu0
        %v1807 = vpop.trf.xlu0
        %v1808 = vpop.trf.xlu0
        %v1809 = vpop.trf.xlu0
        %v1810 = vpop.trf.xlu0
        %v1811 = vpop.trf.xlu0
        %v1812 = vpop.trf.xlu0
        %1813 = vxpose.xlu0.b32.start [1/16] %v1631, 128
        %1814 = vxpose.xlu0.b32.cont [2/16] 0.0, 128
        %1815 = vxpose.xlu0.b32.cont [3/16] 0.0, 128
        %1816 = vxpose.xlu0.b32.cont [4/16] 0.0, 128
        %1817 = vxpose.xlu0.b32.cont [5/16] 0.0, 128
        %1818 = vxpose.xlu0.b32.cont [6/16] 0.0, 128
        %1819 = vxpose.xlu0.b32.cont [7/16] 0.0, 128
        %1820 = vxpose.xlu0.b32.cont [8/16] 0.0, 128
        %1821 = vxpose.xlu0.b32.cont [9/16] 0.0, 128
        %1822 = vxpose.xlu0.b32.cont [10/16] 0.0, 128
        %1823 = vxpose.xlu0.b32.cont [11/16] 0.0, 128
        %1824 = vxpose.xlu0.b32.cont [12/16] 0.0, 128
        %1825 = vxpose.xlu0.b32.cont [13/16] 0.0, 128
        %1826 = vxpose.xlu0.b32.cont [14/16] 0.0, 128
        %1827 = vxpose.xlu0.b32.cont [15/16] 0.0, 128
        %1828 = vxpose.xlu0.b32.end [16/16] 0.0, 128
        %v1829 = vpop.trf.xlu0
        %v1830 = vpop.trf.xlu0
        %v1831 = vpop.trf.xlu0
        %v1832 = vpop.trf.xlu0
        %v1833 = vpop.trf.xlu0
        %v1834 = vpop.trf.xlu0
        %v1835 = vpop.trf.xlu0
        %v1836 = vpop.trf.xlu0
        %v1837 = vpop.trf.xlu0
        %v1838 = vpop.trf.xlu0
        %v1839 = vpop.trf.xlu0
        %v1840 = vpop.trf.xlu0
        %v1841 = vpop.trf.xlu0
        %v1842 = vpop.trf.xlu0
        %v1843 = vpop.trf.xlu0
        %v1844 = vpop.trf.xlu0
        %1845 = vxpose.xlu0.b32.start [1/16] %v1523, 128
        %1846 = vxpose.xlu0.b32.cont [2/16] 0.0, 128
        %1847 = vxpose.xlu0.b32.cont [3/16] 0.0, 128
        %1848 = vxpose.xlu0.b32.cont [4/16] 0.0, 128
        %1849 = vxpose.xlu0.b32.cont [5/16] 0.0, 128
        %1850 = vxpose.xlu0.b32.cont [6/16] 0.0, 128
        %1851 = vxpose.xlu0.b32.cont [7/16] 0.0, 128
        %1852 = vxpose.xlu0.b32.cont [8/16] 0.0, 128
        %1853 = vxpose.xlu0.b32.cont [9/16] 0.0, 128
        %1854 = vxpose.xlu0.b32.cont [10/16] 0.0, 128
        %1855 = vxpose.xlu0.b32.cont [11/16] 0.0, 128
        %1856 = vxpose.xlu0.b32.cont [12/16] 0.0, 128
        %1857 = vxpose.xlu0.b32.cont [13/16] 0.0, 128
        %1858 = vxpose.xlu0.b32.cont [14/16] 0.0, 128
        %1859 = vxpose.xlu0.b32.cont [15/16] 0.0, 128
        %1860 = vxpose.xlu0.b32.end [16/16] 0.0, 128
        %v1861 = vpop.trf.xlu0
        %v1862 = vpop.trf.xlu0
        %v1863 = vpop.trf.xlu0
        %v1864 = vpop.trf.xlu0
        %v1865 = vpop.trf.xlu0
        %v1866 = vpop.trf.xlu0
        %v1867 = vpop.trf.xlu0
        %v1868 = vpop.trf.xlu0
        %v1869 = vpop.trf.xlu0
        %v1870 = vpop.trf.xlu0
        %v1871 = vpop.trf.xlu0
        %v1872 = vpop.trf.xlu0
        %v1873 = vpop.trf.xlu0
        %v1874 = vpop.trf.xlu0
        %v1875 = vpop.trf.xlu0
        %v1876 = vpop.trf.xlu0
        %1877 = vxpose.xlu0.b32.start [1/16] %v1635, 128
        %1878 = vxpose.xlu0.b32.cont [2/16] 0.0, 128
        %1879 = vxpose.xlu0.b32.cont [3/16] 0.0, 128
        %1880 = vxpose.xlu0.b32.cont [4/16] 0.0, 128
        %1881 = vxpose.xlu0.b32.cont [5/16] 0.0, 128
        %1882 = vxpose.xlu0.b32.cont [6/16] 0.0, 128
        %1883 = vxpose.xlu0.b32.cont [7/16] 0.0, 128
        %1884 = vxpose.xlu0.b32.cont [8/16] 0.0, 128
        %1885 = vxpose.xlu0.b32.cont [9/16] 0.0, 128
        %1886 = vxpose.xlu0.b32.cont [10/16] 0.0, 128
        %1887 = vxpose.xlu0.b32.cont [11/16] 0.0, 128
        %1888 = vxpose.xlu0.b32.cont [12/16] 0.0, 128
        %1889 = vxpose.xlu0.b32.cont [13/16] 0.0, 128
        %1890 = vxpose.xlu0.b32.cont [14/16] 0.0, 128
        %1891 = vxpose.xlu0.b32.cont [15/16] 0.0, 128
        %1892 = vxpose.xlu0.b32.end [16/16] 0.0, 128
        %v1893 = vpop.trf.xlu0
        %v1894 = vpop.trf.xlu0
        %v1895 = vpop.trf.xlu0
        %v1896 = vpop.trf.xlu0
        %v1897 = vpop.trf.xlu0
        %v1898 = vpop.trf.xlu0
        %v1899 = vpop.trf.xlu0
        %v1900 = vpop.trf.xlu0
        %v1901 = vpop.trf.xlu0
        %v1902 = vpop.trf.xlu0
        %v1903 = vpop.trf.xlu0
        %v1904 = vpop.trf.xlu0
        %v1905 = vpop.trf.xlu0
        %v1906 = vpop.trf.xlu0
        %v1907 = vpop.trf.xlu0
        %v1908 = vpop.trf.xlu0
        %vm1909 = vcmask 523264
        %v1910 = vsel %vm1909, %v1398, 0
        %1912 = vmatprep.subr.mxu0 0.0
        %1913 = vmatpush1.msra.mxu0 %v1669
        %1914 = vmatprep.subr.mxu0 0.0
        %1915 = vmatpush1.msra.mxu0 %v1670
        %1916 = vmatprep.subr.mxu0 0.0
        %1917 = vmatpush1.msra.mxu0 %v1671
        %1918 = vmatprep.subr.mxu0 0.0
        %1919 = vmatpush1.msra.mxu0 %v1672
        %1920 = vmatprep.subr.mxu0 0.0
        %1921 = vmatpush1.msra.mxu0 %v1673
        %1922 = vmatprep.subr.mxu0 0.0
        %1923 = vmatpush1.msra.mxu0 %v1674
        %1924 = vmatprep.subr.mxu0 0.0
        %1925 = vmatpush1.msra.mxu0 %v1675
        %1926 = vmatprep.subr.mxu0 0.0
        %1927 = vmatpush1.msra.mxu0 %v1676
        %1928 = vmatprep.subr.mxu0 0.0
        %1929 = vmatpush1.msra.mxu0 0.0
        %1930 = vmatprep.subr.mxu0 0.0
        %1931 = vmatpush1.msra.mxu0 0.0
        %1932 = vmatprep.subr.mxu0 0.0
        %1933 = vmatpush1.msra.mxu0 0.0
        %1934 = vmatprep.subr.mxu0 0.0
        %1935 = vmatpush1.msra.mxu0 0.0
        %1936 = vmatprep.subr.mxu0 0.0
        %1937 = vmatpush1.msra.mxu0 0.0
        %1938 = vmatprep.subr.mxu0 0.0
        %1939 = vmatpush1.msra.mxu0 0.0
        %1940 = vmatprep.subr.mxu0 0.0
        %1941 = vmatpush1.msra.mxu0 0.0
        %1942 = vmatprep.subr.mxu0 0.0
        %1943 = vmatpush1.msra.mxu0 0.0
        %1944 = vmatprep.subr.mxu0 0.0
        %1945 = vmatpush1.msra.mxu0 0.0
        %1946 = vmatprep.subr.mxu0 0.0
        %1947 = vmatpush1.msra.mxu0 0.0
        %1948 = vmatprep.subr.mxu0 0.0
        %1949 = vmatpush1.msra.mxu0 0.0
        %1950 = vmatprep.subr.mxu0 0.0
        %1951 = vmatpush1.msra.mxu0 0.0
        %1952 = vmatprep.subr.mxu0 0.0
        %1953 = vmatpush1.msra.mxu0 0.0
        %1954 = vmatprep.subr.mxu0 0.0
        %1955 = vmatpush1.msra.mxu0 0.0
        %1956 = vmatprep.subr.mxu0 0.0
        %1957 = vmatpush1.msra.mxu0 0.0
        %1958 = vmatprep.subr.mxu0 0.0
        %1959 = vmatpush1.msra.mxu0 0.0
        %1960 = vmatprep.subr.mxu0 0.0
        %1961 = vmatpush1.msra.mxu0 0.0
        %1962 = vmatprep.subr.mxu0 0.0
        %1963 = vmatpush1.msra.mxu0 0.0
        %1964 = vmatprep.subr.mxu0 0.0
        %1965 = vmatpush1.msra.mxu0 0.0
        %1966 = vmatprep.subr.mxu0 0.0
        %1967 = vmatpush1.msra.mxu0 0.0
        %1968 = vmatprep.subr.mxu0 0.0
        %1969 = vmatpush1.msra.mxu0 0.0
        %1970 = vmatprep.subr.mxu0 0.0
        %1971 = vmatpush1.msra.mxu0 0.0
        %1972 = vmatprep.subr.mxu0 0.0
        %1973 = vmatpush1.msra.mxu0 0.0
        %1974 = vmatprep.subr.mxu0 0.0
        %1975 = vmatpush1.msra.mxu0 0.0
        %1976 = vmatprep.mubr.f32.mxu0 0.0
        %1977 = vmatmul.mubr.f32.gmra.mrb[0].mxu0 %v1910
        %v1978 = vpop.f32.mrb[0].mxu0
        %v1979 = vadd.f32 0.0, %v1978
        %v1980 = vpop.f32.mrb[0].mxu0
        %1981 = vdwg.mxu0
        %v1982 = vsel %vm1909, %v1611, 0
        %1984 = vmatprep.subr.mxu0 0.0
        %1985 = vmatpush1.msra.mxu0 %v1701
        %1986 = vmatprep.subr.mxu0 0.0
        %1987 = vmatpush1.msra.mxu0 %v1702
        %1988 = vmatprep.subr.mxu0 0.0
        %1989 = vmatpush1.msra.mxu0 %v1703
        %1990 = vmatprep.subr.mxu0 0.0
        %1991 = vmatpush1.msra.mxu0 %v1704
        %1992 = vmatprep.subr.mxu0 0.0
        %1993 = vmatpush1.msra.mxu0 %v1705
        %1994 = vmatprep.subr.mxu0 0.0
        %1995 = vmatpush1.msra.mxu0 %v1706
        %1996 = vmatprep.subr.mxu0 0.0
        %1997 = vmatpush1.msra.mxu0 %v1707
        %1998 = vmatprep.subr.mxu0 0.0
        %1999 = vmatpush1.msra.mxu0 %v1708
        %2000 = vmatprep.subr.mxu0 0.0
        %2001 = vmatpush1.msra.mxu0 0.0
        %2002 = vmatprep.subr.mxu0 0.0
        %2003 = vmatpush1.msra.mxu0 0.0
        %2004 = vmatprep.subr.mxu0 0.0
        %2005 = vmatpush1.msra.mxu0 0.0
        %2006 = vmatprep.subr.mxu0 0.0
        %2007 = vmatpush1.msra.mxu0 0.0
        %2008 = vmatprep.subr.mxu0 0.0
        %2009 = vmatpush1.msra.mxu0 0.0
        %2010 = vmatprep.subr.mxu0 0.0
        %2011 = vmatpush1.msra.mxu0 0.0
        %2012 = vmatprep.subr.mxu0 0.0
        %2013 = vmatpush1.msra.mxu0 0.0
        %2014 = vmatprep.subr.mxu0 0.0
        %2015 = vmatpush1.msra.mxu0 0.0
        %2016 = vmatprep.subr.mxu0 0.0
        %2017 = vmatpush1.msra.mxu0 0.0
        %2018 = vmatprep.subr.mxu0 0.0
        %2019 = vmatpush1.msra.mxu0 0.0
        %2020 = vmatprep.subr.mxu0 0.0
        %2021 = vmatpush1.msra.mxu0 0.0
        %2022 = vmatprep.subr.mxu0 0.0
        %2023 = vmatpush1.msra.mxu0 0.0
        %2024 = vmatprep.subr.mxu0 0.0
        %2025 = vmatpush1.msra.mxu0 0.0
        %2026 = vmatprep.subr.mxu0 0.0
        %2027 = vmatpush1.msra.mxu0 0.0
        %2028 = vmatprep.subr.mxu0 0.0
        %2029 = vmatpush1.msra.mxu0 0.0
        %2030 = vmatprep.subr.mxu0 0.0
        %2031 = vmatpush1.msra.mxu0 0.0
        %2032 = vmatprep.subr.mxu0 0.0
        %2033 = vmatpush1.msra.mxu0 0.0
        %2034 = vmatprep.subr.mxu0 0.0
        %2035 = vmatpush1.msra.mxu0 0.0
        %2036 = vmatprep.subr.mxu0 0.0
        %2037 = vmatpush1.msra.mxu0 0.0
        %2038 = vmatprep.subr.mxu0 0.0
        %2039 = vmatpush1.msra.mxu0 0.0
        %2040 = vmatprep.subr.mxu0 0.0
        %2041 = vmatpush1.msra.mxu0 0.0
        %2042 = vmatprep.subr.mxu0 0.0
        %2043 = vmatpush1.msra.mxu0 0.0
        %2044 = vmatprep.subr.mxu0 0.0
        %2045 = vmatpush1.msra.mxu0 0.0
        %2046 = vmatprep.subr.mxu0 0.0
        %2047 = vmatpush1.msra.mxu0 0.0
        %2048 = vmatprep.mubr.f32.mxu0 0.0
        %2049 = vmatmul.mubr.f32.gmra.mrb[0].mxu0 %v1982
        %v2050 = vpop.f32.mrb[0].mxu0
        %v2051 = vadd.f32 0.0, %v2050
        %v2052 = vpop.f32.mrb[0].mxu0
        %2053 = vdwg.mxu0
        %v2054 = vsel %vm1909, %v1400, 0
        %2056 = vmatprep.subr.mxu0 0.0
        %2057 = vmatpush1.msra.mxu0 %v1733
        %2058 = vmatprep.subr.mxu0 0.0
        %2059 = vmatpush1.msra.mxu0 %v1734
        %2060 = vmatprep.subr.mxu0 0.0
        %2061 = vmatpush1.msra.mxu0 %v1735
        %2062 = vmatprep.subr.mxu0 0.0
        %2063 = vmatpush1.msra.mxu0 %v1736
        %2064 = vmatprep.subr.mxu0 0.0
        %2065 = vmatpush1.msra.mxu0 %v1737
        %2066 = vmatprep.subr.mxu0 0.0
        %2067 = vmatpush1.msra.mxu0 %v1738
        %2068 = vmatprep.subr.mxu0 0.0
        %2069 = vmatpush1.msra.mxu0 %v1739
        %2070 = vmatprep.subr.mxu0 0.0
        %2071 = vmatpush1.msra.mxu0 %v1740
        %2072 = vmatprep.subr.mxu0 0.0
        %2073 = vmatpush1.msra.mxu0 0.0
        %2074 = vmatprep.subr.mxu0 0.0
        %2075 = vmatpush1.msra.mxu0 0.0
        %2076 = vmatprep.subr.mxu0 0.0
        %2077 = vmatpush1.msra.mxu0 0.0
        %2078 = vmatprep.subr.mxu0 0.0
        %2079 = vmatpush1.msra.mxu0 0.0
        %2080 = vmatprep.subr.mxu0 0.0
        %2081 = vmatpush1.msra.mxu0 0.0
        %2082 = vmatprep.subr.mxu0 0.0
        %2083 = vmatpush1.msra.mxu0 0.0
        %2084 = vmatprep.subr.mxu0 0.0
        %2085 = vmatpush1.msra.mxu0 0.0
        %2086 = vmatprep.subr.mxu0 0.0
        %2087 = vmatpush1.msra.mxu0 0.0
        %2088 = vmatprep.subr.mxu0 0.0
        %2089 = vmatpush1.msra.mxu0 0.0
        %2090 = vmatprep.subr.mxu0 0.0
        %2091 = vmatpush1.msra.mxu0 0.0
        %2092 = vmatprep.subr.mxu0 0.0
        %2093 = vmatpush1.msra.mxu0 0.0
        %2094 = vmatprep.subr.mxu0 0.0
        %2095 = vmatpush1.msra.mxu0 0.0
        %2096 = vmatprep.subr.mxu0 0.0
        %2097 = vmatpush1.msra.mxu0 0.0
        %2098 = vmatprep.subr.mxu0 0.0
        %2099 = vmatpush1.msra.mxu0 0.0
        %2100 = vmatprep.subr.mxu0 0.0
        %2101 = vmatpush1.msra.mxu0 0.0
        %2102 = vmatprep.subr.mxu0 0.0
        %2103 = vmatpush1.msra.mxu0 0.0
        %2104 = vmatprep.subr.mxu0 0.0
        %2105 = vmatpush1.msra.mxu0 0.0
        %2106 = vmatprep.subr.mxu0 0.0
        %2107 = vmatpush1.msra.mxu0 0.0
        %2108 = vmatprep.subr.mxu0 0.0
        %2109 = vmatpush1.msra.mxu0 0.0
        %2110 = vmatprep.subr.mxu0 0.0
        %2111 = vmatpush1.msra.mxu0 0.0
        %2112 = vmatprep.subr.mxu0 0.0
        %2113 = vmatpush1.msra.mxu0 0.0
        %2114 = vmatprep.subr.mxu0 0.0
        %2115 = vmatpush1.msra.mxu0 0.0
        %2116 = vmatprep.subr.mxu0 0.0
        %2117 = vmatpush1.msra.mxu0 0.0
        %2118 = vmatprep.subr.mxu0 0.0
        %2119 = vmatpush1.msra.mxu0 0.0
        %2120 = vmatprep.mubr.f32.mxu0 0.0
        %2121 = vmatmul.mubr.f32.gmra.mrb[0].mxu0 %v2054
        %v2122 = vpop.f32.mrb[0].mxu0
        %v2123 = vadd.f32 0.0, %v2122
        %v2124 = vpop.f32.mrb[0].mxu0
        %2125 = vdwg.mxu0
        %v2126 = vsel %vm1909, %v1614, 0
        %2128 = vmatprep.subr.mxu0 0.0
        %2129 = vmatpush1.msra.mxu0 %v1765
        %2130 = vmatprep.subr.mxu0 0.0
        %2131 = vmatpush1.msra.mxu0 %v1766
        %2132 = vmatprep.subr.mxu0 0.0
        %2133 = vmatpush1.msra.mxu0 %v1767
        %2134 = vmatprep.subr.mxu0 0.0
        %2135 = vmatpush1.msra.mxu0 %v1768
        %2136 = vmatprep.subr.mxu0 0.0
        %2137 = vmatpush1.msra.mxu0 %v1769
        %2138 = vmatprep.subr.mxu0 0.0
        %2139 = vmatpush1.msra.mxu0 %v1770
        %2140 = vmatprep.subr.mxu0 0.0
        %2141 = vmatpush1.msra.mxu0 %v1771
        %2142 = vmatprep.subr.mxu0 0.0
        %2143 = vmatpush1.msra.mxu0 %v1772
        %2144 = vmatprep.subr.mxu0 0.0
        %2145 = vmatpush1.msra.mxu0 0.0
        %2146 = vmatprep.subr.mxu0 0.0
        %2147 = vmatpush1.msra.mxu0 0.0
        %2148 = vmatprep.subr.mxu0 0.0
        %2149 = vmatpush1.msra.mxu0 0.0
        %2150 = vmatprep.subr.mxu0 0.0
        %2151 = vmatpush1.msra.mxu0 0.0
        %2152 = vmatprep.subr.mxu0 0.0
        %2153 = vmatpush1.msra.mxu0 0.0
        %2154 = vmatprep.subr.mxu0 0.0
        %2155 = vmatpush1.msra.mxu0 0.0
        %2156 = vmatprep.subr.mxu0 0.0
        %2157 = vmatpush1.msra.mxu0 0.0
        %2158 = vmatprep.subr.mxu0 0.0
        %2159 = vmatpush1.msra.mxu0 0.0
        %2160 = vmatprep.subr.mxu0 0.0
        %2161 = vmatpush1.msra.mxu0 0.0
        %2162 = vmatprep.subr.mxu0 0.0
        %2163 = vmatpush1.msra.mxu0 0.0
        %2164 = vmatprep.subr.mxu0 0.0
        %2165 = vmatpush1.msra.mxu0 0.0
        %2166 = vmatprep.subr.mxu0 0.0
        %2167 = vmatpush1.msra.mxu0 0.0
        %2168 = vmatprep.subr.mxu0 0.0
        %2169 = vmatpush1.msra.mxu0 0.0
        %2170 = vmatprep.subr.mxu0 0.0
        %2171 = vmatpush1.msra.mxu0 0.0
        %2172 = vmatprep.subr.mxu0 0.0
        %2173 = vmatpush1.msra.mxu0 0.0
        %2174 = vmatprep.subr.mxu0 0.0
        %2175 = vmatpush1.msra.mxu0 0.0
        %2176 = vmatprep.subr.mxu0 0.0
        %2177 = vmatpush1.msra.mxu0 0.0
        %2178 = vmatprep.subr.mxu0 0.0
        %2179 = vmatpush1.msra.mxu0 0.0
        %2180 = vmatprep.subr.mxu0 0.0
        %2181 = vmatpush1.msra.mxu0 0.0
        %2182 = vmatprep.subr.mxu0 0.0
        %2183 = vmatpush1.msra.mxu0 0.0
        %2184 = vmatprep.subr.mxu0 0.0
        %2185 = vmatpush1.msra.mxu0 0.0
        %2186 = vmatprep.subr.mxu0 0.0
        %2187 = vmatpush1.msra.mxu0 0.0
        %2188 = vmatprep.subr.mxu0 0.0
        %2189 = vmatpush1.msra.mxu0 0.0
        %2190 = vmatprep.subr.mxu0 0.0
        %2191 = vmatpush1.msra.mxu0 0.0
        %2192 = vmatprep.mubr.f32.mxu0 0.0
        %2193 = vmatmul.mubr.f32.gmra.mrb[0].mxu0 %v2126
        %v2194 = vpop.f32.mrb[0].mxu0
        %v2195 = vadd.f32 0.0, %v2194
        %v2196 = vpop.f32.mrb[0].mxu0
        %2197 = vdwg.mxu0
        %v2198 = vsel %vm1909, %v1439, 0
        %2200 = vmatprep.subr.mxu0 0.0
        %2201 = vmatpush1.msra.mxu0 %v1797
        %2202 = vmatprep.subr.mxu0 0.0
        %2203 = vmatpush1.msra.mxu0 %v1798
        %2204 = vmatprep.subr.mxu0 0.0
        %2205 = vmatpush1.msra.mxu0 %v1799
        %2206 = vmatprep.subr.mxu0 0.0
        %2207 = vmatpush1.msra.mxu0 %v1800
        %2208 = vmatprep.subr.mxu0 0.0
        %2209 = vmatpush1.msra.mxu0 %v1801
        %2210 = vmatprep.subr.mxu0 0.0
        %2211 = vmatpush1.msra.mxu0 %v1802
        %2212 = vmatprep.subr.mxu0 0.0
        %2213 = vmatpush1.msra.mxu0 %v1803
        %2214 = vmatprep.subr.mxu0 0.0
        %2215 = vmatpush1.msra.mxu0 %v1804
        %2216 = vmatprep.subr.mxu0 0.0
        %2217 = vmatpush1.msra.mxu0 0.0
        %2218 = vmatprep.subr.mxu0 0.0
        %2219 = vmatpush1.msra.mxu0 0.0
        %2220 = vmatprep.subr.mxu0 0.0
        %2221 = vmatpush1.msra.mxu0 0.0
        %2222 = vmatprep.subr.mxu0 0.0
        %2223 = vmatpush1.msra.mxu0 0.0
        %2224 = vmatprep.subr.mxu0 0.0
        %2225 = vmatpush1.msra.mxu0 0.0
        %2226 = vmatprep.subr.mxu0 0.0
        %2227 = vmatpush1.msra.mxu0 0.0
        %2228 = vmatprep.subr.mxu0 0.0
        %2229 = vmatpush1.msra.mxu0 0.0
        %2230 = vmatprep.subr.mxu0 0.0
        %2231 = vmatpush1.msra.mxu0 0.0
        %2232 = vmatprep.subr.mxu0 0.0
        %2233 = vmatpush1.msra.mxu0 0.0
        %2234 = vmatprep.subr.mxu0 0.0
        %2235 = vmatpush1.msra.mxu0 0.0
        %2236 = vmatprep.subr.mxu0 0.0
        %2237 = vmatpush1.msra.mxu0 0.0
        %2238 = vmatprep.subr.mxu0 0.0
        %2239 = vmatpush1.msra.mxu0 0.0
        %2240 = vmatprep.subr.mxu0 0.0
        %2241 = vmatpush1.msra.mxu0 0.0
        %2242 = vmatprep.subr.mxu0 0.0
        %2243 = vmatpush1.msra.mxu0 0.0
        %2244 = vmatprep.subr.mxu0 0.0
        %2245 = vmatpush1.msra.mxu0 0.0
        %2246 = vmatprep.subr.mxu0 0.0
        %2247 = vmatpush1.msra.mxu0 0.0
        %2248 = vmatprep.subr.mxu0 0.0
        %2249 = vmatpush1.msra.mxu0 0.0
        %2250 = vmatprep.subr.mxu0 0.0
        %2251 = vmatpush1.msra.mxu0 0.0
        %2252 = vmatprep.subr.mxu0 0.0
        %2253 = vmatpush1.msra.mxu0 0.0
        %2254 = vmatprep.subr.mxu0 0.0
        %2255 = vmatpush1.msra.mxu0 0.0
        %2256 = vmatprep.subr.mxu0 0.0
        %2257 = vmatpush1.msra.mxu0 0.0
        %2258 = vmatprep.subr.mxu0 0.0
        %2259 = vmatpush1.msra.mxu0 0.0
        %2260 = vmatprep.subr.mxu0 0.0
        %2261 = vmatpush1.msra.mxu0 0.0
        %2262 = vmatprep.subr.mxu0 0.0
        %2263 = vmatpush1.msra.mxu0 0.0
        %2264 = vmatprep.mubr.f32.mxu0 0.0
        %2265 = vmatmul.mubr.f32.gmra.mrb[0].mxu0 %v2198
        %v2266 = vpop.f32.mrb[0].mxu0
        %v2267 = vadd.f32 0.0, %v2266
        %v2268 = vpop.f32.mrb[0].mxu0
        %2269 = vdwg.mxu0
        %v2270 = vsel %vm1909, %v1617, 0
        %2272 = vmatprep.subr.mxu0 0.0
        %2273 = vmatpush1.msra.mxu0 %v1829
        %2274 = vmatprep.subr.mxu0 0.0
        %2275 = vmatpush1.msra.mxu0 %v1830
        %2276 = vmatprep.subr.mxu0 0.0
        %2277 = vmatpush1.msra.mxu0 %v1831
        %2278 = vmatprep.subr.mxu0 0.0
        %2279 = vmatpush1.msra.mxu0 %v1832
        %2280 = vmatprep.subr.mxu0 0.0
        %2281 = vmatpush1.msra.mxu0 %v1833
        %2282 = vmatprep.subr.mxu0 0.0
        %2283 = vmatpush1.msra.mxu0 %v1834
        %2284 = vmatprep.subr.mxu0 0.0
        %2285 = vmatpush1.msra.mxu0 %v1835
        %2286 = vmatprep.subr.mxu0 0.0
        %2287 = vmatpush1.msra.mxu0 %v1836
        %2288 = vmatprep.subr.mxu0 0.0
        %2289 = vmatpush1.msra.mxu0 0.0
        %2290 = vmatprep.subr.mxu0 0.0
        %2291 = vmatpush1.msra.mxu0 0.0
        %2292 = vmatprep.subr.mxu0 0.0
        %2293 = vmatpush1.msra.mxu0 0.0
        %2294 = vmatprep.subr.mxu0 0.0
        %2295 = vmatpush1.msra.mxu0 0.0
        %2296 = vmatprep.subr.mxu0 0.0
        %2297 = vmatpush1.msra.mxu0 0.0
        %2298 = vmatprep.subr.mxu0 0.0
        %2299 = vmatpush1.msra.mxu0 0.0
        %2300 = vmatprep.subr.mxu0 0.0
        %2301 = vmatpush1.msra.mxu0 0.0
        %2302 = vmatprep.subr.mxu0 0.0
        %2303 = vmatpush1.msra.mxu0 0.0
        %2304 = vmatprep.subr.mxu0 0.0
        %2305 = vmatpush1.msra.mxu0 0.0
        %2306 = vmatprep.subr.mxu0 0.0
        %2307 = vmatpush1.msra.mxu0 0.0
        %2308 = vmatprep.subr.mxu0 0.0
        %2309 = vmatpush1.msra.mxu0 0.0
        %2310 = vmatprep.subr.mxu0 0.0
        %2311 = vmatpush1.msra.mxu0 0.0
        %2312 = vmatprep.subr.mxu0 0.0
        %2313 = vmatpush1.msra.mxu0 0.0
        %2314 = vmatprep.subr.mxu0 0.0
        %2315 = vmatpush1.msra.mxu0 0.0
        %2316 = vmatprep.subr.mxu0 0.0
        %2317 = vmatpush1.msra.mxu0 0.0
        %2318 = vmatprep.subr.mxu0 0.0
        %2319 = vmatpush1.msra.mxu0 0.0
        %2320 = vmatprep.subr.mxu0 0.0
        %2321 = vmatpush1.msra.mxu0 0.0
        %2322 = vmatprep.subr.mxu0 0.0
        %2323 = vmatpush1.msra.mxu0 0.0
        %2324 = vmatprep.subr.mxu0 0.0
        %2325 = vmatpush1.msra.mxu0 0.0
        %2326 = vmatprep.subr.mxu0 0.0
        %2327 = vmatpush1.msra.mxu0 0.0
        %2328 = vmatprep.subr.mxu0 0.0
        %2329 = vmatpush1.msra.mxu0 0.0
        %2330 = vmatprep.subr.mxu0 0.0
        %2331 = vmatpush1.msra.mxu0 0.0
        %2332 = vmatprep.subr.mxu0 0.0
        %2333 = vmatpush1.msra.mxu0 0.0
        %2334 = vmatprep.subr.mxu0 0.0
        %2335 = vmatpush1.msra.mxu0 0.0
        %2336 = vmatprep.mubr.f32.mxu0 0.0
        %2337 = vmatmul.mubr.f32.gmra.mrb[0].mxu0 %v2270
        %v2338 = vpop.f32.mrb[0].mxu0
        %v2339 = vadd.f32 0.0, %v2338
        %v2340 = vpop.f32.mrb[0].mxu0
        %2341 = vdwg.mxu0
        %v2342 = vsel %vm1909, %v1441, 0
        %2344 = vmatprep.subr.mxu0 0.0
        %2345 = vmatpush1.msra.mxu0 %v1861
        %2346 = vmatprep.subr.mxu0 0.0
        %2347 = vmatpush1.msra.mxu0 %v1862
        %2348 = vmatprep.subr.mxu0 0.0
        %2349 = vmatpush1.msra.mxu0 %v1863
        %2350 = vmatprep.subr.mxu0 0.0
        %2351 = vmatpush1.msra.mxu0 %v1864
        %2352 = vmatprep.subr.mxu0 0.0
        %2353 = vmatpush1.msra.mxu0 %v1865
        %2354 = vmatprep.subr.mxu0 0.0
        %2355 = vmatpush1.msra.mxu0 %v1866
        %2356 = vmatprep.subr.mxu0 0.0
        %2357 = vmatpush1.msra.mxu0 %v1867
        %2358 = vmatprep.subr.mxu0 0.0
        %2359 = vmatpush1.msra.mxu0 %v1868
        %2360 = vmatprep.subr.mxu0 0.0
        %2361 = vmatpush1.msra.mxu0 0.0
        %2362 = vmatprep.subr.mxu0 0.0
        %2363 = vmatpush1.msra.mxu0 0.0
        %2364 = vmatprep.subr.mxu0 0.0
        %2365 = vmatpush1.msra.mxu0 0.0
        %2366 = vmatprep.subr.mxu0 0.0
        %2367 = vmatpush1.msra.mxu0 0.0
        %2368 = vmatprep.subr.mxu0 0.0
        %2369 = vmatpush1.msra.mxu0 0.0
        %2370 = vmatprep.subr.mxu0 0.0
        %2371 = vmatpush1.msra.mxu0 0.0
        %2372 = vmatprep.subr.mxu0 0.0
        %2373 = vmatpush1.msra.mxu0 0.0
        %2374 = vmatprep.subr.mxu0 0.0
        %2375 = vmatpush1.msra.mxu0 0.0
        %2376 = vmatprep.subr.mxu0 0.0
        %2377 = vmatpush1.msra.mxu0 0.0
        %2378 = vmatprep.subr.mxu0 0.0
        %2379 = vmatpush1.msra.mxu0 0.0
        %2380 = vmatprep.subr.mxu0 0.0
        %2381 = vmatpush1.msra.mxu0 0.0
        %2382 = vmatprep.subr.mxu0 0.0
        %2383 = vmatpush1.msra.mxu0 0.0
        %2384 = vmatprep.subr.mxu0 0.0
        %2385 = vmatpush1.msra.mxu0 0.0
        %2386 = vmatprep.subr.mxu0 0.0
        %2387 = vmatpush1.msra.mxu0 0.0
        %2388 = vmatprep.subr.mxu0 0.0
        %2389 = vmatpush1.msra.mxu0 0.0
        %2390 = vmatprep.subr.mxu0 0.0
        %2391 = vmatpush1.msra.mxu0 0.0
        %2392 = vmatprep.subr.mxu0 0.0
        %2393 = vmatpush1.msra.mxu0 0.0
        %2394 = vmatprep.subr.mxu0 0.0
        %2395 = vmatpush1.msra.mxu0 0.0
        %2396 = vmatprep.subr.mxu0 0.0
        %2397 = vmatpush1.msra.mxu0 0.0
        %2398 = vmatprep.subr.mxu0 0.0
        %2399 = vmatpush1.msra.mxu0 0.0
        %2400 = vmatprep.subr.mxu0 0.0
        %2401 = vmatpush1.msra.mxu0 0.0
        %2402 = vmatprep.subr.mxu0 0.0
        %2403 = vmatpush1.msra.mxu0 0.0
        %2404 = vmatprep.subr.mxu0 0.0
        %2405 = vmatpush1.msra.mxu0 0.0
        %2406 = vmatprep.subr.mxu0 0.0
        %2407 = vmatpush1.msra.mxu0 0.0
        %2408 = vmatprep.mubr.f32.mxu0 0.0
        %2409 = vmatmul.mubr.f32.gmra.mrb[0].mxu0 %v2342
        %v2410 = vpop.f32.mrb[0].mxu0
        %v2411 = vadd.f32 0.0, %v2410
        %v2412 = vpop.f32.mrb[0].mxu0
        %2413 = vdwg.mxu0
        %v2414 = vsel %vm1909, %v1620, 0
        %2416 = vmatprep.subr.mxu0 0.0
        %2417 = vmatpush1.msra.mxu0 %v1893
        %2418 = vmatprep.subr.mxu0 0.0
        %2419 = vmatpush1.msra.mxu0 %v1894
        %2420 = vmatprep.subr.mxu0 0.0
        %2421 = vmatpush1.msra.mxu0 %v1895
        %2422 = vmatprep.subr.mxu0 0.0
        %2423 = vmatpush1.msra.mxu0 %v1896
        %2424 = vmatprep.subr.mxu0 0.0
        %2425 = vmatpush1.msra.mxu0 %v1897
        %2426 = vmatprep.subr.mxu0 0.0
        %2427 = vmatpush1.msra.mxu0 %v1898
        %2428 = vmatprep.subr.mxu0 0.0
        %2429 = vmatpush1.msra.mxu0 %v1899
        %2430 = vmatprep.subr.mxu0 0.0
        %2431 = vmatpush1.msra.mxu0 %v1900
        %2432 = vmatprep.subr.mxu0 0.0
        %2433 = vmatpush1.msra.mxu0 0.0
        %2434 = vmatprep.subr.mxu0 0.0
        %2435 = vmatpush1.msra.mxu0 0.0
        %2436 = vmatprep.subr.mxu0 0.0
        %2437 = vmatpush1.msra.mxu0 0.0
        %2438 = vmatprep.subr.mxu0 0.0
        %2439 = vmatpush1.msra.mxu0 0.0
        %2440 = vmatprep.subr.mxu0 0.0
        %2441 = vmatpush1.msra.mxu0 0.0
        %2442 = vmatprep.subr.mxu0 0.0
        %2443 = vmatpush1.msra.mxu0 0.0
        %2444 = vmatprep.subr.mxu0 0.0
        %2445 = vmatpush1.msra.mxu0 0.0
        %2446 = vmatprep.subr.mxu0 0.0
        %2447 = vmatpush1.msra.mxu0 0.0
        %2448 = vmatprep.subr.mxu0 0.0
        %2449 = vmatpush1.msra.mxu0 0.0
        %2450 = vmatprep.subr.mxu0 0.0
        %2451 = vmatpush1.msra.mxu0 0.0
        %2452 = vmatprep.subr.mxu0 0.0
        %2453 = vmatpush1.msra.mxu0 0.0
        %2454 = vmatprep.subr.mxu0 0.0
        %2455 = vmatpush1.msra.mxu0 0.0
        %2456 = vmatprep.subr.mxu0 0.0
        %2457 = vmatpush1.msra.mxu0 0.0
        %2458 = vmatprep.subr.mxu0 0.0
        %2459 = vmatpush1.msra.mxu0 0.0
        %2460 = vmatprep.subr.mxu0 0.0
        %2461 = vmatpush1.msra.mxu0 0.0
        %2462 = vmatprep.subr.mxu0 0.0
        %2463 = vmatpush1.msra.mxu0 0.0
        %2464 = vmatprep.subr.mxu0 0.0
        %2465 = vmatpush1.msra.mxu0 0.0
        %2466 = vmatprep.subr.mxu0 0.0
        %2467 = vmatpush1.msra.mxu0 0.0
        %2468 = vmatprep.subr.mxu0 0.0
        %2469 = vmatpush1.msra.mxu0 0.0
        %2470 = vmatprep.subr.mxu0 0.0
        %2471 = vmatpush1.msra.mxu0 0.0
        %2472 = vmatprep.subr.mxu0 0.0
        %2473 = vmatpush1.msra.mxu0 0.0
        %2474 = vmatprep.subr.mxu0 0.0
        %2475 = vmatpush1.msra.mxu0 0.0
        %2476 = vmatprep.subr.mxu0 0.0
        %2477 = vmatpush1.msra.mxu0 0.0
        %2478 = vmatprep.subr.mxu0 0.0
        %2479 = vmatpush1.msra.mxu0 0.0
        %2480 = vmatprep.mubr.f32.mxu0 0.0
        %2481 = vmatmul.mubr.f32.gmra.mrb[0].mxu0 %v2414
        %v2482 = vpop.f32.mrb[0].mxu0
        %v2483 = vadd.f32 0.0, %v2482
        %v2484 = vpop.f32.mrb[0].mxu0
        %2485 = vdwg.mxu0
        %v2486 = vmul.f32 %v1979, 0.125
        %v2487 = vmul.f32 %v2051, 0.125
        %v2488 = vmul.f32 %v2123, 0.125
        %v2489 = vmul.f32 %v2195, 0.125
        %v2490 = vmul.f32 %v2267, 0.125
        %v2491 = vmul.f32 %v2339, 0.125
        %v2492 = vmul.f32 %v2411, 0.125
        %v2493 = vmul.f32 %v2483, 0.125
        %vm2494 = vcmask 64512
        %v2495 = vsel %vm2494, %v2486, -inf
        %2496 = vmax.xlane.f32.xlu0 %v2495
        %v2497 = vpop.xlane.xlu0 %2496
        %v2498 = vsel %vm2494, %v2487, -inf
        %2499 = vmax.xlane.f32.xlu0 %v2498
        %v2500 = vpop.xlane.xlu0 %2499
        %v2501 = vsel %vm2494, %v2488, -inf
        %2502 = vmax.xlane.f32.xlu0 %v2501
        %v2503 = vpop.xlane.xlu0 %2502
        %v2504 = vsel %vm2494, %v2489, -inf
        %2505 = vmax.xlane.f32.xlu0 %v2504
        %v2506 = vpop.xlane.xlu0 %2505
        %v2507 = vsel %vm2494, %v2490, -inf
        %2508 = vmax.xlane.f32.xlu0 %v2507
        %v2509 = vpop.xlane.xlu0 %2508
        %v2510 = vsel %vm2494, %v2491, -inf
        %2511 = vmax.xlane.f32.xlu0 %v2510
        %v2512 = vpop.xlane.xlu0 %2511
        %v2513 = vsel %vm2494, %v2492, -inf
        %2514 = vmax.xlane.f32.xlu0 %v2513
        %v2515 = vpop.xlane.xlu0 %2514
        %v2516 = vsel %vm2494, %v2493, -inf
        %2517 = vmax.xlane.f32.xlu0 %v2516
        %v2518 = vpop.xlane.xlu0 %2517
        %v2519 = vsub.f32 %v2486, %v2497
        %v2520 = vsub.f32 %v2487, %v2500
        %v2521 = vsub.f32 %v2488, %v2503
        %v2522 = vsub.f32 %v2489, %v2506
        %v2523 = vsub.f32 %v2490, %v2509
        %v2524 = vsub.f32 %v2491, %v2512
        %v2525 = vsub.f32 %v2492, %v2515
        %v2526 = vsub.f32 %v2493, %v2518
        %v2527 = vmul.f32 %v2519, 1.442695
        %v2528 = vpow.pop %v2527
        %v2529 = vmul.f32 %v2520, 1.442695
        %v2530 = vpow.pop %v2529
        %v2531 = vmul.f32 %v2521, 1.442695
        %v2532 = vpow.pop %v2531
        %v2533 = vmul.f32 %v2522, 1.442695
        %v2534 = vpow.pop %v2533
        %v2535 = vmul.f32 %v2523, 1.442695
        %v2536 = vpow.pop %v2535
        %v2537 = vmul.f32 %v2524, 1.442695
        %v2538 = vpow.pop %v2537
        %v2539 = vmul.f32 %v2525, 1.442695
        %v2540 = vpow.pop %v2539
        %v2541 = vmul.f32 %v2526, 1.442695
        %v2542 = vpow.pop %v2541
        %v2543 = vsel %vm2494, %v2528, 0.0
        %2544 = vadd.xlane.f32.xlu0 %v2543
        %v2545 = vpop.xlane.xlu0 %2544
        %v2546 = vsel %vm2494, %v2530, 0.0
        %2547 = vadd.xlane.f32.xlu0 %v2546
        %v2548 = vpop.xlane.xlu0 %2547
        %v2549 = vsel %vm2494, %v2532, 0.0
        %2550 = vadd.xlane.f32.xlu0 %v2549
        %v2551 = vpop.xlane.xlu0 %2550
        %v2552 = vsel %vm2494, %v2534, 0.0
        %2553 = vadd.xlane.f32.xlu0 %v2552
        %v2554 = vpop.xlane.xlu0 %2553
        %v2555 = vsel %vm2494, %v2536, 0.0
        %2556 = vadd.xlane.f32.xlu0 %v2555
        %v2557 = vpop.xlane.xlu0 %2556
        %v2558 = vsel %vm2494, %v2538, 0.0
        %2559 = vadd.xlane.f32.xlu0 %v2558
        %v2560 = vpop.xlane.xlu0 %2559
        %v2561 = vsel %vm2494, %v2540, 0.0
        %2562 = vadd.xlane.f32.xlu0 %v2561
        %v2563 = vpop.xlane.xlu0 %2562
        %v2564 = vsel %vm2494, %v2542, 0.0
        %2565 = vadd.xlane.f32.xlu0 %v2564
        %v2566 = vpop.xlane.xlu0 %2565
        %v2567 = vrcp.pop %v2545
        %v2568 = vrcp.pop %v2548
        %v2569 = vrcp.pop %v2551
        %v2570 = vrcp.pop %v2554
        %v2571 = vrcp.pop %v2557
        %v2572 = vrcp.pop %v2560
        %v2573 = vrcp.pop %v2563
        %v2574 = vrcp.pop %v2566
        %v2575 = vmul.f32 %v2528, %v2567
        %v2576 = vmul.f32 %v2530, %v2568
        %v2577 = vmul.f32 %v2532, %v2569
        %v2578 = vmul.f32 %v2534, %v2570
        %v2579 = vmul.f32 %v2536, %v2571
        %v2580 = vmul.f32 %v2538, %v2572
        %v2581 = vmul.f32 %v2540, %v2573
        %v2582 = vmul.f32 %v2542, %v2574
        %2583 = vxpose.xlu0.b32.start [1/16] %v1562, 128
        %2584 = vxpose.xlu0.b32.cont [2/16] 0.0, 128
        %2585 = vxpose.xlu0.b32.cont [3/16] 0.0, 128
        %2586 = vxpose.xlu0.b32.cont [4/16] 0.0, 128
        %2587 = vxpose.xlu0.b32.cont [5/16] 0.0, 128
        %2588 = vxpose.xlu0.b32.cont [6/16] 0.0, 128
        %2589 = vxpose.xlu0.b32.cont [7/16] 0.0, 128
        %2590 = vxpose.xlu0.b32.cont [8/16] 0.0, 128
        %2591 = vxpose.xlu0.b32.cont [9/16] 0.0, 128
        %2592 = vxpose.xlu0.b32.cont [10/16] 0.0, 128
        %2593 = vxpose.xlu0.b32.cont [11/16] 0.0, 128
        %2594 = vxpose.xlu0.b32.cont [12/16] 0.0, 128
        %2595 = vxpose.xlu0.b32.cont [13/16] 0.0, 128
        %2596 = vxpose.xlu0.b32.cont [14/16] 0.0, 128
        %2597 = vxpose.xlu0.b32.cont [15/16] 0.0, 128
        %2598 = vxpose.xlu0.b32.end [16/16] 0.0, 128
        %v2599 = vpop.trf.xlu0
        %v2600 = vpop.trf.xlu0
        %v2601 = vpop.trf.xlu0
        %v2602 = vpop.trf.xlu0
        %v2603 = vpop.trf.xlu0
        %v2604 = vpop.trf.xlu0
        %v2605 = vpop.trf.xlu0
        %v2606 = vpop.trf.xlu0
        %v2607 = vpop.trf.xlu0
        %v2608 = vpop.trf.xlu0
        %v2609 = vpop.trf.xlu0
        %v2610 = vpop.trf.xlu0
        %v2611 = vpop.trf.xlu0
        %v2612 = vpop.trf.xlu0
        %v2613 = vpop.trf.xlu0
        %v2614 = vpop.trf.xlu0
        %2615 = vxpose.xlu0.b32.start [1/16] %v1639, 128
        %2616 = vxpose.xlu0.b32.cont [2/16] 0.0, 128
        %2617 = vxpose.xlu0.b32.cont [3/16] 0.0, 128
        %2618 = vxpose.xlu0.b32.cont [4/16] 0.0, 128
        %2619 = vxpose.xlu0.b32.cont [5/16] 0.0, 128
        %2620 = vxpose.xlu0.b32.cont [6/16] 0.0, 128
        %2621 = vxpose.xlu0.b32.cont [7/16] 0.0, 128
        %2622 = vxpose.xlu0.b32.cont [8/16] 0.0, 128
        %2623 = vxpose.xlu0.b32.cont [9/16] 0.0, 128
        %2624 = vxpose.xlu0.b32.cont [10/16] 0.0, 128
        %2625 = vxpose.xlu0.b32.cont [11/16] 0.0, 128
        %2626 = vxpose.xlu0.b32.cont [12/16] 0.0, 128
        %2627 = vxpose.xlu0.b32.cont [13/16] 0.0, 128
        %2628 = vxpose.xlu0.b32.cont [14/16] 0.0, 128
        %2629 = vxpose.xlu0.b32.cont [15/16] 0.0, 128
        %2630 = vxpose.xlu0.b32.end [16/16] 0.0, 128
        %v2631 = vpop.trf.xlu0
        %v2632 = vpop.trf.xlu0
        %v2633 = vpop.trf.xlu0
        %v2634 = vpop.trf.xlu0
        %v2635 = vpop.trf.xlu0
        %v2636 = vpop.trf.xlu0
        %v2637 = vpop.trf.xlu0
        %v2638 = vpop.trf.xlu0
        %v2639 = vpop.trf.xlu0
        %v2640 = vpop.trf.xlu0
        %v2641 = vpop.trf.xlu0
        %v2642 = vpop.trf.xlu0
        %v2643 = vpop.trf.xlu0
        %v2644 = vpop.trf.xlu0
        %v2645 = vpop.trf.xlu0
        %v2646 = vpop.trf.xlu0
        %2647 = vxpose.xlu0.b32.start [1/16] %v1564, 128
        %2648 = vxpose.xlu0.b32.cont [2/16] 0.0, 128
        %2649 = vxpose.xlu0.b32.cont [3/16] 0.0, 128
        %2650 = vxpose.xlu0.b32.cont [4/16] 0.0, 128
        %2651 = vxpose.xlu0.b32.cont [5/16] 0.0, 128
        %2652 = vxpose.xlu0.b32.cont [6/16] 0.0, 128
        %2653 = vxpose.xlu0.b32.cont [7/16] 0.0, 128
        %2654 = vxpose.xlu0.b32.cont [8/16] 0.0, 128
        %2655 = vxpose.xlu0.b32.cont [9/16] 0.0, 128
        %2656 = vxpose.xlu0.b32.cont [10/16] 0.0, 128
        %2657 = vxpose.xlu0.b32.cont [11/16] 0.0, 128
        %2658 = vxpose.xlu0.b32.cont [12/16] 0.0, 128
        %2659 = vxpose.xlu0.b32.cont [13/16] 0.0, 128
        %2660 = vxpose.xlu0.b32.cont [14/16] 0.0, 128
        %2661 = vxpose.xlu0.b32.cont [15/16] 0.0, 128
        %2662 = vxpose.xlu0.b32.end [16/16] 0.0, 128
        %v2663 = vpop.trf.xlu0
        %v2664 = vpop.trf.xlu0
        %v2665 = vpop.trf.xlu0
        %v2666 = vpop.trf.xlu0
        %v2667 = vpop.trf.xlu0
        %v2668 = vpop.trf.xlu0
        %v2669 = vpop.trf.xlu0
        %v2670 = vpop.trf.xlu0
        %v2671 = vpop.trf.xlu0
        %v2672 = vpop.trf.xlu0
        %v2673 = vpop.trf.xlu0
        %v2674 = vpop.trf.xlu0
        %v2675 = vpop.trf.xlu0
        %v2676 = vpop.trf.xlu0
        %v2677 = vpop.trf.xlu0
        %v2678 = vpop.trf.xlu0
        %2679 = vxpose.xlu0.b32.start [1/16] %v1643, 128
        %2680 = vxpose.xlu0.b32.cont [2/16] 0.0, 128
        %2681 = vxpose.xlu0.b32.cont [3/16] 0.0, 128
        %2682 = vxpose.xlu0.b32.cont [4/16] 0.0, 128
        %2683 = vxpose.xlu0.b32.cont [5/16] 0.0, 128
        %2684 = vxpose.xlu0.b32.cont [6/16] 0.0, 128
        %2685 = vxpose.xlu0.b32.cont [7/16] 0.0, 128
        %2686 = vxpose.xlu0.b32.cont [8/16] 0.0, 128
        %2687 = vxpose.xlu0.b32.cont [9/16] 0.0, 128
        %2688 = vxpose.xlu0.b32.cont [10/16] 0.0, 128
        %2689 = vxpose.xlu0.b32.cont [11/16] 0.0, 128
        %2690 = vxpose.xlu0.b32.cont [12/16] 0.0, 128
        %2691 = vxpose.xlu0.b32.cont [13/16] 0.0, 128
        %2692 = vxpose.xlu0.b32.cont [14/16] 0.0, 128
        %2693 = vxpose.xlu0.b32.cont [15/16] 0.0, 128
        %2694 = vxpose.xlu0.b32.end [16/16] 0.0, 128
        %v2695 = vpop.trf.xlu0
        %v2696 = vpop.trf.xlu0
        %v2697 = vpop.trf.xlu0
        %v2698 = vpop.trf.xlu0
        %v2699 = vpop.trf.xlu0
        %v2700 = vpop.trf.xlu0
        %v2701 = vpop.trf.xlu0
        %v2702 = vpop.trf.xlu0
        %v2703 = vpop.trf.xlu0
        %v2704 = vpop.trf.xlu0
        %v2705 = vpop.trf.xlu0
        %v2706 = vpop.trf.xlu0
        %v2707 = vpop.trf.xlu0
        %v2708 = vpop.trf.xlu0
        %v2709 = vpop.trf.xlu0
        %v2710 = vpop.trf.xlu0
        %2711 = vxpose.xlu0.b32.start [1/16] %v1603, 128
        %2712 = vxpose.xlu0.b32.cont [2/16] 0.0, 128
        %2713 = vxpose.xlu0.b32.cont [3/16] 0.0, 128
        %2714 = vxpose.xlu0.b32.cont [4/16] 0.0, 128
        %2715 = vxpose.xlu0.b32.cont [5/16] 0.0, 128
        %2716 = vxpose.xlu0.b32.cont [6/16] 0.0, 128
        %2717 = vxpose.xlu0.b32.cont [7/16] 0.0, 128
        %2718 = vxpose.xlu0.b32.cont [8/16] 0.0, 128
        %2719 = vxpose.xlu0.b32.cont [9/16] 0.0, 128
        %2720 = vxpose.xlu0.b32.cont [10/16] 0.0, 128
        %2721 = vxpose.xlu0.b32.cont [11/16] 0.0, 128
        %2722 = vxpose.xlu0.b32.cont [12/16] 0.0, 128
        %2723 = vxpose.xlu0.b32.cont [13/16] 0.0, 128
        %2724 = vxpose.xlu0.b32.cont [14/16] 0.0, 128
        %2725 = vxpose.xlu0.b32.cont [15/16] 0.0, 128
        %2726 = vxpose.xlu0.b32.end [16/16] 0.0, 128
        %v2727 = vpop.trf.xlu0
        %v2728 = vpop.trf.xlu0
        %v2729 = vpop.trf.xlu0
        %v2730 = vpop.trf.xlu0
        %v2731 = vpop.trf.xlu0
        %v2732 = vpop.trf.xlu0
        %v2733 = vpop.trf.xlu0
        %v2734 = vpop.trf.xlu0
        %v2735 = vpop.trf.xlu0
        %v2736 = vpop.trf.xlu0
        %v2737 = vpop.trf.xlu0
        %v2738 = vpop.trf.xlu0
        %v2739 = vpop.trf.xlu0
        %v2740 = vpop.trf.xlu0
        %v2741 = vpop.trf.xlu0
        %v2742 = vpop.trf.xlu0
        %2743 = vxpose.xlu0.b32.start [1/16] %v1647, 128
        %2744 = vxpose.xlu0.b32.cont [2/16] 0.0, 128
        %2745 = vxpose.xlu0.b32.cont [3/16] 0.0, 128
        %2746 = vxpose.xlu0.b32.cont [4/16] 0.0, 128
        %2747 = vxpose.xlu0.b32.cont [5/16] 0.0, 128
        %2748 = vxpose.xlu0.b32.cont [6/16] 0.0, 128
        %2749 = vxpose.xlu0.b32.cont [7/16] 0.0, 128
        %2750 = vxpose.xlu0.b32.cont [8/16] 0.0, 128
        %2751 = vxpose.xlu0.b32.cont [9/16] 0.0, 128
        %2752 = vxpose.xlu0.b32.cont [10/16] 0.0, 128
        %2753 = vxpose.xlu0.b32.cont [11/16] 0.0, 128
        %2754 = vxpose.xlu0.b32.cont [12/16] 0.0, 128
        %2755 = vxpose.xlu0.b32.cont [13/16] 0.0, 128
        %2756 = vxpose.xlu0.b32.cont [14/16] 0.0, 128
        %2757 = vxpose.xlu0.b32.cont [15/16] 0.0, 128
        %2758 = vxpose.xlu0.b32.end [16/16] 0.0, 128
        %v2759 = vpop.trf.xlu0
        %v2760 = vpop.trf.xlu0
        %v2761 = vpop.trf.xlu0
        %v2762 = vpop.trf.xlu0
        %v2763 = vpop.trf.xlu0
        %v2764 = vpop.trf.xlu0
        %v2765 = vpop.trf.xlu0
        %v2766 = vpop.trf.xlu0
        %v2767 = vpop.trf.xlu0
        %v2768 = vpop.trf.xlu0
        %v2769 = vpop.trf.xlu0
        %v2770 = vpop.trf.xlu0
        %v2771 = vpop.trf.xlu0
        %v2772 = vpop.trf.xlu0
        %v2773 = vpop.trf.xlu0
        %v2774 = vpop.trf.xlu0
        %2775 = vxpose.xlu0.b32.start [1/16] %v1605, 128
        %2776 = vxpose.xlu0.b32.cont [2/16] 0.0, 128
        %2777 = vxpose.xlu0.b32.cont [3/16] 0.0, 128
        %2778 = vxpose.xlu0.b32.cont [4/16] 0.0, 128
        %2779 = vxpose.xlu0.b32.cont [5/16] 0.0, 128
        %2780 = vxpose.xlu0.b32.cont [6/16] 0.0, 128
        %2781 = vxpose.xlu0.b32.cont [7/16] 0.0, 128
        %2782 = vxpose.xlu0.b32.cont [8/16] 0.0, 128
        %2783 = vxpose.xlu0.b32.cont [9/16] 0.0, 128
        %2784 = vxpose.xlu0.b32.cont [10/16] 0.0, 128
        %2785 = vxpose.xlu0.b32.cont [11/16] 0.0, 128
        %2786 = vxpose.xlu0.b32.cont [12/16] 0.0, 128
        %2787 = vxpose.xlu0.b32.cont [13/16] 0.0, 128
        %2788 = vxpose.xlu0.b32.cont [14/16] 0.0, 128
        %2789 = vxpose.xlu0.b32.cont [15/16] 0.0, 128
        %2790 = vxpose.xlu0.b32.end [16/16] 0.0, 128
        %v2791 = vpop.trf.xlu0
        %v2792 = vpop.trf.xlu0
        %v2793 = vpop.trf.xlu0
        %v2794 = vpop.trf.xlu0
        %v2795 = vpop.trf.xlu0
        %v2796 = vpop.trf.xlu0
        %v2797 = vpop.trf.xlu0
        %v2798 = vpop.trf.xlu0
        %v2799 = vpop.trf.xlu0
        %v2800 = vpop.trf.xlu0
        %v2801 = vpop.trf.xlu0
        %v2802 = vpop.trf.xlu0
        %v2803 = vpop.trf.xlu0
        %v2804 = vpop.trf.xlu0
        %v2805 = vpop.trf.xlu0
        %v2806 = vpop.trf.xlu0
        %2807 = vxpose.xlu0.b32.start [1/16] %v1651, 128
        %2808 = vxpose.xlu0.b32.cont [2/16] 0.0, 128
        %2809 = vxpose.xlu0.b32.cont [3/16] 0.0, 128
        %2810 = vxpose.xlu0.b32.cont [4/16] 0.0, 128
        %2811 = vxpose.xlu0.b32.cont [5/16] 0.0, 128
        %2812 = vxpose.xlu0.b32.cont [6/16] 0.0, 128
        %2813 = vxpose.xlu0.b32.cont [7/16] 0.0, 128
        %2814 = vxpose.xlu0.b32.cont [8/16] 0.0, 128
        %2815 = vxpose.xlu0.b32.cont [9/16] 0.0, 128
        %2816 = vxpose.xlu0.b32.cont [10/16] 0.0, 128
        %2817 = vxpose.xlu0.b32.cont [11/16] 0.0, 128
        %2818 = vxpose.xlu0.b32.cont [12/16] 0.0, 128
        %2819 = vxpose.xlu0.b32.cont [13/16] 0.0, 128
        %2820 = vxpose.xlu0.b32.cont [14/16] 0.0, 128
        %2821 = vxpose.xlu0.b32.cont [15/16] 0.0, 128
        %2822 = vxpose.xlu0.b32.end [16/16] 0.0, 128
        %v2823 = vpop.trf.xlu0
        %v2824 = vpop.trf.xlu0
        %v2825 = vpop.trf.xlu0
        %v2826 = vpop.trf.xlu0
        %v2827 = vpop.trf.xlu0
        %v2828 = vpop.trf.xlu0
        %v2829 = vpop.trf.xlu0
        %v2830 = vpop.trf.xlu0
        %v2831 = vpop.trf.xlu0
        %v2832 = vpop.trf.xlu0
        %v2833 = vpop.trf.xlu0
        %v2834 = vpop.trf.xlu0
        %v2835 = vpop.trf.xlu0
        %v2836 = vpop.trf.xlu0
        %v2837 = vpop.trf.xlu0
        %v2838 = vpop.trf.xlu0
        %v2840 = vsel %vm2494, %v2599, 0
        %v2843 = vsel %vm2494, %v2600, 0
        %v2846 = vsel %vm2494, %v2601, 0
        %v2849 = vsel %vm2494, %v2602, 0
        %v2852 = vsel %vm2494, %v2603, 0
        %v2855 = vsel %vm2494, %v2604, 0
        %v2858 = vsel %vm2494, %v2605, 0
        %v2861 = vsel %vm2494, %v2606, 0
        %v2864 = vsel %vm2494, %v2575, 0
        %2866 = vmatprep.subr.mxu0 0.0
        %2867 = vmatpush1.xpose.msra.mxu0 %v2864
        %2868 = vmatprep.subr.mxu0 0.0
        %2869 = vmatpush1.xpose.msra.mxu0 0.0
        %2870 = vmatprep.subr.mxu0 0.0
        %2871 = vmatpush1.xpose.msra.mxu0 0.0
        %2872 = vmatprep.subr.mxu0 0.0
        %2873 = vmatpush1.xpose.msra.mxu0 0.0
        %2874 = vmatprep.subr.mxu0 0.0
        %2875 = vmatpush1.xpose.msra.mxu0 0.0
        %2876 = vmatprep.subr.mxu0 0.0
        %2877 = vmatpush1.xpose.msra.mxu0 0.0
        %2878 = vmatprep.subr.mxu0 0.0
        %2879 = vmatpush1.xpose.msra.mxu0 0.0
        %2880 = vmatprep.subr.mxu0 0.0
        %2881 = vmatpush1.xpose.msra.mxu0 0.0
        %2882 = vmatprep.subr.mxu0 0.0
        %2883 = vmatpush1.xpose.msra.mxu0 0.0
        %2884 = vmatprep.subr.mxu0 0.0
        %2885 = vmatpush1.xpose.msra.mxu0 0.0
        %2886 = vmatprep.subr.mxu0 0.0
        %2887 = vmatpush1.xpose.msra.mxu0 0.0
        %2888 = vmatprep.subr.mxu0 0.0
        %2889 = vmatpush1.xpose.msra.mxu0 0.0
        %2890 = vmatprep.subr.mxu0 0.0
        %2891 = vmatpush1.xpose.msra.mxu0 0.0
        %2892 = vmatprep.subr.mxu0 0.0
        %2893 = vmatpush1.xpose.msra.mxu0 0.0
        %2894 = vmatprep.subr.mxu0 0.0
        %2895 = vmatpush1.xpose.msra.mxu0 0.0
        %2896 = vmatprep.subr.mxu0 0.0
        %2897 = vmatpush1.xpose.msra.mxu0 0.0
        %2898 = vmatprep.subr.mxu0 0.0
        %2899 = vmatpush1.xpose.msra.mxu0 0.0
        %2900 = vmatprep.subr.mxu0 0.0
        %2901 = vmatpush1.xpose.msra.mxu0 0.0
        %2902 = vmatprep.subr.mxu0 0.0
        %2903 = vmatpush1.xpose.msra.mxu0 0.0
        %2904 = vmatprep.subr.mxu0 0.0
        %2905 = vmatpush1.xpose.msra.mxu0 0.0
        %2906 = vmatprep.subr.mxu0 0.0
        %2907 = vmatpush1.xpose.msra.mxu0 0.0
        %2908 = vmatprep.subr.mxu0 0.0
        %2909 = vmatpush1.xpose.msra.mxu0 0.0
        %2910 = vmatprep.subr.mxu0 0.0
        %2911 = vmatpush1.xpose.msra.mxu0 0.0
        %2912 = vmatprep.subr.mxu0 0.0
        %2913 = vmatpush1.xpose.msra.mxu0 0.0
        %2914 = vmatprep.subr.mxu0 0.0
        %2915 = vmatpush1.xpose.msra.mxu0 0.0
        %2916 = vmatprep.subr.mxu0 0.0
        %2917 = vmatpush1.xpose.msra.mxu0 0.0
        %2918 = vmatprep.subr.mxu0 0.0
        %2919 = vmatpush1.xpose.msra.mxu0 0.0
        %2920 = vmatprep.subr.mxu0 0.0
        %2921 = vmatpush1.xpose.msra.mxu0 0.0
        %2922 = vmatprep.subr.mxu0 0.0
        %2923 = vmatpush1.xpose.msra.mxu0 0.0
        %2924 = vmatprep.subr.mxu0 0.0
        %2925 = vmatpush1.xpose.msra.mxu0 0.0
        %2926 = vmatprep.subr.mxu0 0.0
        %2927 = vmatpush1.xpose.msra.mxu0 0.0
        %2928 = vmatprep.subr.mxu0 0.0
        %2929 = vmatpush1.xpose.msra.mxu0 0.0
        %2930 = vmatprep.mubr.f32.mxu0 0.0
        %2931 = vmatmul.mubr.f32.gmra.mrb[0].mxu0 %v2840
        %v2932 = vpop.f32.mrb[0].mxu0
        %v2933 = vadd.f32 0.0, %v2932
        %v2934 = vpop.f32.mrb[0].mxu0
        %2935 = vmatprep.mubr.f32.mxu0 0.0
        %2936 = vmatmul.mubr.f32.gmra.mrb[0].mxu0 %v2843
        %v2937 = vpop.f32.mrb[0].mxu0
        %v2938 = vadd.f32 0.0, %v2937
        %v2939 = vpop.f32.mrb[0].mxu0
        %2940 = vmatprep.mubr.f32.mxu0 0.0
        %2941 = vmatmul.mubr.f32.gmra.mrb[0].mxu0 %v2846
        %v2942 = vpop.f32.mrb[0].mxu0
        %v2943 = vadd.f32 0.0, %v2942
        %v2944 = vpop.f32.mrb[0].mxu0
        %2945 = vmatprep.mubr.f32.mxu0 0.0
        %2946 = vmatmul.mubr.f32.gmra.mrb[0].mxu0 %v2849
        %v2947 = vpop.f32.mrb[0].mxu0
        %v2948 = vadd.f32 0.0, %v2947
        %v2949 = vpop.f32.mrb[0].mxu0
        %2950 = vmatprep.mubr.f32.mxu0 0.0
        %2951 = vmatmul.mubr.f32.gmra.mrb[0].mxu0 %v2852
        %v2952 = vpop.f32.mrb[0].mxu0
        %v2953 = vadd.f32 0.0, %v2952
        %v2954 = vpop.f32.mrb[0].mxu0
        %2955 = vmatprep.mubr.f32.mxu0 0.0
        %2956 = vmatmul.mubr.f32.gmra.mrb[0].mxu0 %v2855
        %v2957 = vpop.f32.mrb[0].mxu0
        %v2958 = vadd.f32 0.0, %v2957
        %v2959 = vpop.f32.mrb[0].mxu0
        %2960 = vmatprep.mubr.f32.mxu0 0.0
        %2961 = vmatmul.mubr.f32.gmra.mrb[0].mxu0 %v2858
        %v2962 = vpop.f32.mrb[0].mxu0
        %v2963 = vadd.f32 0.0, %v2962
        %v2964 = vpop.f32.mrb[0].mxu0
        %2965 = vmatprep.mubr.f32.mxu0 0.0
        %2966 = vmatmul.mubr.f32.gmra.mrb[0].mxu0 %v2861
        %v2967 = vpop.f32.mrb[0].mxu0
        %v2968 = vadd.f32 0.0, %v2967
        %v2969 = vpop.f32.mrb[0].mxu0
        %2970 = vdwg.mxu0
        %v2972 = vsel %vm2494, %v2631, 0
        %v2975 = vsel %vm2494, %v2632, 0
        %v2978 = vsel %vm2494, %v2633, 0
        %v2981 = vsel %vm2494, %v2634, 0
        %v2984 = vsel %vm2494, %v2635, 0
        %v2987 = vsel %vm2494, %v2636, 0
        %v2990 = vsel %vm2494, %v2637, 0
        %v2993 = vsel %vm2494, %v2638, 0
        %v2996 = vsel %vm2494, %v2576, 0
        %2998 = vmatprep.subr.mxu0 0.0
        %2999 = vmatpush1.xpose.msra.mxu0 %v2996
        %3000 = vmatprep.subr.mxu0 0.0
        %3001 = vmatpush1.xpose.msra.mxu0 0.0
        %3002 = vmatprep.subr.mxu0 0.0
        %3003 = vmatpush1.xpose.msra.mxu0 0.0
        %3004 = vmatprep.subr.mxu0 0.0
        %3005 = vmatpush1.xpose.msra.mxu0 0.0
        %3006 = vmatprep.subr.mxu0 0.0
        %3007 = vmatpush1.xpose.msra.mxu0 0.0
        %3008 = vmatprep.subr.mxu0 0.0
        %3009 = vmatpush1.xpose.msra.mxu0 0.0
        %3010 = vmatprep.subr.mxu0 0.0
        %3011 = vmatpush1.xpose.msra.mxu0 0.0
        %3012 = vmatprep.subr.mxu0 0.0
        %3013 = vmatpush1.xpose.msra.mxu0 0.0
        %3014 = vmatprep.subr.mxu0 0.0
        %3015 = vmatpush1.xpose.msra.mxu0 0.0
        %3016 = vmatprep.subr.mxu0 0.0
        %3017 = vmatpush1.xpose.msra.mxu0 0.0
        %3018 = vmatprep.subr.mxu0 0.0
        %3019 = vmatpush1.xpose.msra.mxu0 0.0
        %3020 = vmatprep.subr.mxu0 0.0
        %3021 = vmatpush1.xpose.msra.mxu0 0.0
        %3022 = vmatprep.subr.mxu0 0.0
        %3023 = vmatpush1.xpose.msra.mxu0 0.0
        %3024 = vmatprep.subr.mxu0 0.0
        %3025 = vmatpush1.xpose.msra.mxu0 0.0
        %3026 = vmatprep.subr.mxu0 0.0
        %3027 = vmatpush1.xpose.msra.mxu0 0.0
        %3028 = vmatprep.subr.mxu0 0.0
        %3029 = vmatpush1.xpose.msra.mxu0 0.0
        %3030 = vmatprep.subr.mxu0 0.0
        %3031 = vmatpush1.xpose.msra.mxu0 0.0
        %3032 = vmatprep.subr.mxu0 0.0
        %3033 = vmatpush1.xpose.msra.mxu0 0.0
        %3034 = vmatprep.subr.mxu0 0.0
        %3035 = vmatpush1.xpose.msra.mxu0 0.0
        %3036 = vmatprep.subr.mxu0 0.0
        %3037 = vmatpush1.xpose.msra.mxu0 0.0
        %3038 = vmatprep.subr.mxu0 0.0
        %3039 = vmatpush1.xpose.msra.mxu0 0.0
        %3040 = vmatprep.subr.mxu0 0.0
        %3041 = vmatpush1.xpose.msra.mxu0 0.0
        %3042 = vmatprep.subr.mxu0 0.0
        %3043 = vmatpush1.xpose.msra.mxu0 0.0
        %3044 = vmatprep.subr.mxu0 0.0
        %3045 = vmatpush1.xpose.msra.mxu0 0.0
        %3046 = vmatprep.subr.mxu0 0.0
        %3047 = vmatpush1.xpose.msra.mxu0 0.0
        %3048 = vmatprep.subr.mxu0 0.0
        %3049 = vmatpush1.xpose.msra.mxu0 0.0
        %3050 = vmatprep.subr.mxu0 0.0
        %3051 = vmatpush1.xpose.msra.mxu0 0.0
        %3052 = vmatprep.subr.mxu0 0.0
        %3053 = vmatpush1.xpose.msra.mxu0 0.0
        %3054 = vmatprep.subr.mxu0 0.0
        %3055 = vmatpush1.xpose.msra.mxu0 0.0
        %3056 = vmatprep.subr.mxu0 0.0
        %3057 = vmatpush1.xpose.msra.mxu0 0.0
        %3058 = vmatprep.subr.mxu0 0.0
        %3059 = vmatpush1.xpose.msra.mxu0 0.0
        %3060 = vmatprep.subr.mxu0 0.0
        %3061 = vmatpush1.xpose.msra.mxu0 0.0
        %3062 = vmatprep.mubr.f32.mxu0 0.0
        %3063 = vmatmul.mubr.f32.gmra.mrb[0].mxu0 %v2972
        %v3064 = vpop.f32.mrb[0].mxu0
        %v3065 = vadd.f32 0.0, %v3064
        %v3066 = vpop.f32.mrb[0].mxu0
        %3067 = vmatprep.mubr.f32.mxu0 0.0
        %3068 = vmatmul.mubr.f32.gmra.mrb[0].mxu0 %v2975
        %v3069 = vpop.f32.mrb[0].mxu0
        %v3070 = vadd.f32 0.0, %v3069
        %v3071 = vpop.f32.mrb[0].mxu0
        %3072 = vmatprep.mubr.f32.mxu0 0.0
        %3073 = vmatmul.mubr.f32.gmra.mrb[0].mxu0 %v2978
        %v3074 = vpop.f32.mrb[0].mxu0
        %v3075 = vadd.f32 0.0, %v3074
        %v3076 = vpop.f32.mrb[0].mxu0
        %3077 = vmatprep.mubr.f32.mxu0 0.0
        %3078 = vmatmul.mubr.f32.gmra.mrb[0].mxu0 %v2981
        %v3079 = vpop.f32.mrb[0].mxu0
        %v3080 = vadd.f32 0.0, %v3079
        %v3081 = vpop.f32.mrb[0].mxu0
        %3082 = vmatprep.mubr.f32.mxu0 0.0
        %3083 = vmatmul.mubr.f32.gmra.mrb[0].mxu0 %v2984
        %v3084 = vpop.f32.mrb[0].mxu0
        %v3085 = vadd.f32 0.0, %v3084
        %v3086 = vpop.f32.mrb[0].mxu0
        %3087 = vmatprep.mubr.f32.mxu0 0.0
        %3088 = vmatmul.mubr.f32.gmra.mrb[0].mxu0 %v2987
        %v3089 = vpop.f32.mrb[0].mxu0
        %v3090 = vadd.f32 0.0, %v3089
        %v3091 = vpop.f32.mrb[0].mxu0
        %3092 = vmatprep.mubr.f32.mxu0 0.0
        %3093 = vmatmul.mubr.f32.gmra.mrb[0].mxu0 %v2990
        %v3094 = vpop.f32.mrb[0].mxu0
        %v3095 = vadd.f32 0.0, %v3094
        %v3096 = vpop.f32.mrb[0].mxu0
        %3097 = vmatprep.mubr.f32.mxu0 0.0
        %3098 = vmatmul.mubr.f32.gmra.mrb[0].mxu0 %v2993
        %v3099 = vpop.f32.mrb[0].mxu0
        %v3100 = vadd.f32 0.0, %v3099
        %v3101 = vpop.f32.mrb[0].mxu0
        %3102 = vdwg.mxu0
        %v3104 = vsel %vm2494, %v2663, 0
        %v3107 = vsel %vm2494, %v2664, 0
        %v3110 = vsel %vm2494, %v2665, 0
        %v3113 = vsel %vm2494, %v2666, 0
        %v3116 = vsel %vm2494, %v2667, 0
        %v3119 = vsel %vm2494, %v2668, 0
        %v3122 = vsel %vm2494, %v2669, 0
        %v3125 = vsel %vm2494, %v2670, 0
        %v3128 = vsel %vm2494, %v2577, 0
        %3130 = vmatprep.subr.mxu0 0.0
        %3131 = vmatpush1.xpose.msra.mxu0 %v3128
        %3132 = vmatprep.subr.mxu0 0.0
        %3133 = vmatpush1.xpose.msra.mxu0 0.0
        %3134 = vmatprep.subr.mxu0 0.0
        %3135 = vmatpush1.xpose.msra.mxu0 0.0
        %3136 = vmatprep.subr.mxu0 0.0
        %3137 = vmatpush1.xpose.msra.mxu0 0.0
        %3138 = vmatprep.subr.mxu0 0.0
        %3139 = vmatpush1.xpose.msra.mxu0 0.0
        %3140 = vmatprep.subr.mxu0 0.0
        %3141 = vmatpush1.xpose.msra.mxu0 0.0
        %3142 = vmatprep.subr.mxu0 0.0
        %3143 = vmatpush1.xpose.msra.mxu0 0.0
        %3144 = vmatprep.subr.mxu0 0.0
        %3145 = vmatpush1.xpose.msra.mxu0 0.0
        %3146 = vmatprep.subr.mxu0 0.0
        %3147 = vmatpush1.xpose.msra.mxu0 0.0
        %3148 = vmatprep.subr.mxu0 0.0
        %3149 = vmatpush1.xpose.msra.mxu0 0.0
        %3150 = vmatprep.subr.mxu0 0.0
        %3151 = vmatpush1.xpose.msra.mxu0 0.0
        %3152 = vmatprep.subr.mxu0 0.0
        %3153 = vmatpush1.xpose.msra.mxu0 0.0
        %3154 = vmatprep.subr.mxu0 0.0
        %3155 = vmatpush1.xpose.msra.mxu0 0.0
        %3156 = vmatprep.subr.mxu0 0.0
        %3157 = vmatpush1.xpose.msra.mxu0 0.0
        %3158 = vmatprep.subr.mxu0 0.0
        %3159 = vmatpush1.xpose.msra.mxu0 0.0
        %3160 = vmatprep.subr.mxu0 0.0
        %3161 = vmatpush1.xpose.msra.mxu0 0.0
        %3162 = vmatprep.subr.mxu0 0.0
        %3163 = vmatpush1.xpose.msra.mxu0 0.0
        %3164 = vmatprep.subr.mxu0 0.0
        %3165 = vmatpush1.xpose.msra.mxu0 0.0
        %3166 = vmatprep.subr.mxu0 0.0
        %3167 = vmatpush1.xpose.msra.mxu0 0.0
        %3168 = vmatprep.subr.mxu0 0.0
        %3169 = vmatpush1.xpose.msra.mxu0 0.0
        %3170 = vmatprep.subr.mxu0 0.0
        %3171 = vmatpush1.xpose.msra.mxu0 0.0
        %3172 = vmatprep.subr.mxu0 0.0
        %3173 = vmatpush1.xpose.msra.mxu0 0.0
        %3174 = vmatprep.subr.mxu0 0.0
        %3175 = vmatpush1.xpose.msra.mxu0 0.0
        %3176 = vmatprep.subr.mxu0 0.0
        %3177 = vmatpush1.xpose.msra.mxu0 0.0
        %3178 = vmatprep.subr.mxu0 0.0
        %3179 = vmatpush1.xpose.msra.mxu0 0.0
        %3180 = vmatprep.subr.mxu0 0.0
        %3181 = vmatpush1.xpose.msra.mxu0 0.0
        %3182 = vmatprep.subr.mxu0 0.0
        %3183 = vmatpush1.xpose.msra.mxu0 0.0
        %3184 = vmatprep.subr.mxu0 0.0
        %3185 = vmatpush1.xpose.msra.mxu0 0.0
        %3186 = vmatprep.subr.mxu0 0.0
        %3187 = vmatpush1.xpose.msra.mxu0 0.0
        %3188 = vmatprep.subr.mxu0 0.0
        %3189 = vmatpush1.xpose.msra.mxu0 0.0
        %3190 = vmatprep.subr.mxu0 0.0
        %3191 = vmatpush1.xpose.msra.mxu0 0.0
        %3192 = vmatprep.subr.mxu0 0.0
        %3193 = vmatpush1.xpose.msra.mxu0 0.0
        %3194 = vmatprep.mubr.f32.mxu0 0.0
        %3195 = vmatmul.mubr.f32.gmra.mrb[0].mxu0 %v3104
        %v3196 = vpop.f32.mrb[0].mxu0
        %v3197 = vadd.f32 0.0, %v3196
        %v3198 = vpop.f32.mrb[0].mxu0
        %3199 = vmatprep.mubr.f32.mxu0 0.0
        %3200 = vmatmul.mubr.f32.gmra.mrb[0].mxu0 %v3107
        %v3201 = vpop.f32.mrb[0].mxu0
        %v3202 = vadd.f32 0.0, %v3201
        %v3203 = vpop.f32.mrb[0].mxu0
        %3204 = vmatprep.mubr.f32.mxu0 0.0
        %3205 = vmatmul.mubr.f32.gmra.mrb[0].mxu0 %v3110
        %v3206 = vpop.f32.mrb[0].mxu0
        %v3207 = vadd.f32 0.0, %v3206
        %v3208 = vpop.f32.mrb[0].mxu0
        %3209 = vmatprep.mubr.f32.mxu0 0.0
        %3210 = vmatmul.mubr.f32.gmra.mrb[0].mxu0 %v3113
        %v3211 = vpop.f32.mrb[0].mxu0
        %v3212 = vadd.f32 0.0, %v3211
        %v3213 = vpop.f32.mrb[0].mxu0
        %3214 = vmatprep.mubr.f32.mxu0 0.0
        %3215 = vmatmul.mubr.f32.gmra.mrb[0].mxu0 %v3116
        %v3216 = vpop.f32.mrb[0].mxu0
        %v3217 = vadd.f32 0.0, %v3216
        %v3218 = vpop.f32.mrb[0].mxu0
        %3219 = vmatprep.mubr.f32.mxu0 0.0
        %3220 = vmatmul.mubr.f32.gmra.mrb[0].mxu0 %v3119
        %v3221 = vpop.f32.mrb[0].mxu0
        %v3222 = vadd.f32 0.0, %v3221
        %v3223 = vpop.f32.mrb[0].mxu0
        %3224 = vmatprep.mubr.f32.mxu0 0.0
        %3225 = vmatmul.mubr.f32.gmra.mrb[0].mxu0 %v3122
        %v3226 = vpop.f32.mrb[0].mxu0
        %v3227 = vadd.f32 0.0, %v3226
        %v3228 = vpop.f32.mrb[0].mxu0
        %3229 = vmatprep.mubr.f32.mxu0 0.0
        %3230 = vmatmul.mubr.f32.gmra.mrb[0].mxu0 %v3125
        %v3231 = vpop.f32.mrb[0].mxu0
        %v3232 = vadd.f32 0.0, %v3231
        %v3233 = vpop.f32.mrb[0].mxu0
        %3234 = vdwg.mxu0
        %v3236 = vsel %vm2494, %v2695, 0
        %v3239 = vsel %vm2494, %v2696, 0
        %v3242 = vsel %vm2494, %v2697, 0
        %v3245 = vsel %vm2494, %v2698, 0
        %v3248 = vsel %vm2494, %v2699, 0
        %v3251 = vsel %vm2494, %v2700, 0
        %v3254 = vsel %vm2494, %v2701, 0
        %v3257 = vsel %vm2494, %v2702, 0
        %v3260 = vsel %vm2494, %v2578, 0
        %3262 = vmatprep.subr.mxu0 0.0
        %3263 = vmatpush1.xpose.msra.mxu0 %v3260
        %3264 = vmatprep.subr.mxu0 0.0
        %3265 = vmatpush1.xpose.msra.mxu0 0.0
        %3266 = vmatprep.subr.mxu0 0.0
        %3267 = vmatpush1.xpose.msra.mxu0 0.0
        %3268 = vmatprep.subr.mxu0 0.0
        %3269 = vmatpush1.xpose.msra.mxu0 0.0
        %3270 = vmatprep.subr.mxu0 0.0
        %3271 = vmatpush1.xpose.msra.mxu0 0.0
        %3272 = vmatprep.subr.mxu0 0.0
        %3273 = vmatpush1.xpose.msra.mxu0 0.0
        %3274 = vmatprep.subr.mxu0 0.0
        %3275 = vmatpush1.xpose.msra.mxu0 0.0
        %3276 = vmatprep.subr.mxu0 0.0
        %3277 = vmatpush1.xpose.msra.mxu0 0.0
        %3278 = vmatprep.subr.mxu0 0.0
        %3279 = vmatpush1.xpose.msra.mxu0 0.0
        %3280 = vmatprep.subr.mxu0 0.0
        %3281 = vmatpush1.xpose.msra.mxu0 0.0
        %3282 = vmatprep.subr.mxu0 0.0
        %3283 = vmatpush1.xpose.msra.mxu0 0.0
        %3284 = vmatprep.subr.mxu0 0.0
        %3285 = vmatpush1.xpose.msra.mxu0 0.0
        %3286 = vmatprep.subr.mxu0 0.0
        %3287 = vmatpush1.xpose.msra.mxu0 0.0
        %3288 = vmatprep.subr.mxu0 0.0
        %3289 = vmatpush1.xpose.msra.mxu0 0.0
        %3290 = vmatprep.subr.mxu0 0.0
        %3291 = vmatpush1.xpose.msra.mxu0 0.0
        %3292 = vmatprep.subr.mxu0 0.0
        %3293 = vmatpush1.xpose.msra.mxu0 0.0
        %3294 = vmatprep.subr.mxu0 0.0
        %3295 = vmatpush1.xpose.msra.mxu0 0.0
        %3296 = vmatprep.subr.mxu0 0.0
        %3297 = vmatpush1.xpose.msra.mxu0 0.0
        %3298 = vmatprep.subr.mxu0 0.0
        %3299 = vmatpush1.xpose.msra.mxu0 0.0
        %3300 = vmatprep.subr.mxu0 0.0
        %3301 = vmatpush1.xpose.msra.mxu0 0.0
        %3302 = vmatprep.subr.mxu0 0.0
        %3303 = vmatpush1.xpose.msra.mxu0 0.0
        %3304 = vmatprep.subr.mxu0 0.0
        %3305 = vmatpush1.xpose.msra.mxu0 0.0
        %3306 = vmatprep.subr.mxu0 0.0
        %3307 = vmatpush1.xpose.msra.mxu0 0.0
        %3308 = vmatprep.subr.mxu0 0.0
        %3309 = vmatpush1.xpose.msra.mxu0 0.0
        %3310 = vmatprep.subr.mxu0 0.0
        %3311 = vmatpush1.xpose.msra.mxu0 0.0
        %3312 = vmatprep.subr.mxu0 0.0
        %3313 = vmatpush1.xpose.msra.mxu0 0.0
        %3314 = vmatprep.subr.mxu0 0.0
        %3315 = vmatpush1.xpose.msra.mxu0 0.0
        %3316 = vmatprep.subr.mxu0 0.0
        %3317 = vmatpush1.xpose.msra.mxu0 0.0
        %3318 = vmatprep.subr.mxu0 0.0
        %3319 = vmatpush1.xpose.msra.mxu0 0.0
        %3320 = vmatprep.subr.mxu0 0.0
        %3321 = vmatpush1.xpose.msra.mxu0 0.0
        %3322 = vmatprep.subr.mxu0 0.0
        %3323 = vmatpush1.xpose.msra.mxu0 0.0
        %3324 = vmatprep.subr.mxu0 0.0
        %3325 = vmatpush1.xpose.msra.mxu0 0.0
        %3326 = vmatprep.mubr.f32.mxu0 0.0
        %3327 = vmatmul.mubr.f32.gmra.mrb[0].mxu0 %v3236
        %v3328 = vpop.f32.mrb[0].mxu0
        %v3329 = vadd.f32 0.0, %v3328
        %v3330 = vpop.f32.mrb[0].mxu0
        %3331 = vmatprep.mubr.f32.mxu0 0.0
        %3332 = vmatmul.mubr.f32.gmra.mrb[0].mxu0 %v3239
        %v3333 = vpop.f32.mrb[0].mxu0
        %v3334 = vadd.f32 0.0, %v3333
        %v3335 = vpop.f32.mrb[0].mxu0
        %3336 = vmatprep.mubr.f32.mxu0 0.0
        %3337 = vmatmul.mubr.f32.gmra.mrb[0].mxu0 %v3242
        %v3338 = vpop.f32.mrb[0].mxu0
        %v3339 = vadd.f32 0.0, %v3338
        %v3340 = vpop.f32.mrb[0].mxu0
        %3341 = vmatprep.mubr.f32.mxu0 0.0
        %3342 = vmatmul.mubr.f32.gmra.mrb[0].mxu0 %v3245
        %v3343 = vpop.f32.mrb[0].mxu0
        %v3344 = vadd.f32 0.0, %v3343
        %v3345 = vpop.f32.mrb[0].mxu0
        %3346 = vmatprep.mubr.f32.mxu0 0.0
        %3347 = vmatmul.mubr.f32.gmra.mrb[0].mxu0 %v3248
        %v3348 = vpop.f32.mrb[0].mxu0
        %v3349 = vadd.f32 0.0, %v3348
        %v3350 = vpop.f32.mrb[0].mxu0
        %3351 = vmatprep.mubr.f32.mxu0 0.0
        %3352 = vmatmul.mubr.f32.gmra.mrb[0].mxu0 %v3251
        %v3353 = vpop.f32.mrb[0].mxu0
        %v3354 = vadd.f32 0.0, %v3353
        %v3355 = vpop.f32.mrb[0].mxu0
        %3356 = vmatprep.mubr.f32.mxu0 0.0
        %3357 = vmatmul.mubr.f32.gmra.mrb[0].mxu0 %v3254
        %v3358 = vpop.f32.mrb[0].mxu0
        %v3359 = vadd.f32 0.0, %v3358
        %v3360 = vpop.f32.mrb[0].mxu0
        %3361 = vmatprep.mubr.f32.mxu0 0.0
        %3362 = vmatmul.mubr.f32.gmra.mrb[0].mxu0 %v3257
        %v3363 = vpop.f32.mrb[0].mxu0
        %v3364 = vadd.f32 0.0, %v3363
        %v3365 = vpop.f32.mrb[0].mxu0
        %3366 = vdwg.mxu0
        %v3368 = vsel %vm2494, %v2727, 0
        %v3371 = vsel %vm2494, %v2728, 0
        %v3374 = vsel %vm2494, %v2729, 0
        %v3377 = vsel %vm2494, %v2730, 0
        %v3380 = vsel %vm2494, %v2731, 0
        %v3383 = vsel %vm2494, %v2732, 0
        %v3386 = vsel %vm2494, %v2733, 0
        %v3389 = vsel %vm2494, %v2734, 0
        %v3392 = vsel %vm2494, %v2579, 0
        %3394 = vmatprep.subr.mxu0 0.0
        %3395 = vmatpush1.xpose.msra.mxu0 %v3392
        %3396 = vmatprep.subr.mxu0 0.0
        %3397 = vmatpush1.xpose.msra.mxu0 0.0
        %3398 = vmatprep.subr.mxu0 0.0
        %3399 = vmatpush1.xpose.msra.mxu0 0.0
        %3400 = vmatprep.subr.mxu0 0.0
        %3401 = vmatpush1.xpose.msra.mxu0 0.0
        %3402 = vmatprep.subr.mxu0 0.0
        %3403 = vmatpush1.xpose.msra.mxu0 0.0
        %3404 = vmatprep.subr.mxu0 0.0
        %3405 = vmatpush1.xpose.msra.mxu0 0.0
        %3406 = vmatprep.subr.mxu0 0.0
        %3407 = vmatpush1.xpose.msra.mxu0 0.0
        %3408 = vmatprep.subr.mxu0 0.0
        %3409 = vmatpush1.xpose.msra.mxu0 0.0
        %3410 = vmatprep.subr.mxu0 0.0
        %3411 = vmatpush1.xpose.msra.mxu0 0.0
        %3412 = vmatprep.subr.mxu0 0.0
        %3413 = vmatpush1.xpose.msra.mxu0 0.0
        %3414 = vmatprep.subr.mxu0 0.0
        %3415 = vmatpush1.xpose.msra.mxu0 0.0
        %3416 = vmatprep.subr.mxu0 0.0
        %3417 = vmatpush1.xpose.msra.mxu0 0.0
        %3418 = vmatprep.subr.mxu0 0.0
        %3419 = vmatpush1.xpose.msra.mxu0 0.0
        %3420 = vmatprep.subr.mxu0 0.0
        %3421 = vmatpush1.xpose.msra.mxu0 0.0
        %3422 = vmatprep.subr.mxu0 0.0
        %3423 = vmatpush1.xpose.msra.mxu0 0.0
        %3424 = vmatprep.subr.mxu0 0.0
        %3425 = vmatpush1.xpose.msra.mxu0 0.0
        %3426 = vmatprep.subr.mxu0 0.0
        %3427 = vmatpush1.xpose.msra.mxu0 0.0
        %3428 = vmatprep.subr.mxu0 0.0
        %3429 = vmatpush1.xpose.msra.mxu0 0.0
        %3430 = vmatprep.subr.mxu0 0.0
        %3431 = vmatpush1.xpose.msra.mxu0 0.0
        %3432 = vmatprep.subr.mxu0 0.0
        %3433 = vmatpush1.xpose.msra.mxu0 0.0
        %3434 = vmatprep.subr.mxu0 0.0
        %3435 = vmatpush1.xpose.msra.mxu0 0.0
        %3436 = vmatprep.subr.mxu0 0.0
        %3437 = vmatpush1.xpose.msra.mxu0 0.0
        %3438 = vmatprep.subr.mxu0 0.0
        %3439 = vmatpush1.xpose.msra.mxu0 0.0
        %3440 = vmatprep.subr.mxu0 0.0
        %3441 = vmatpush1.xpose.msra.mxu0 0.0
        %3442 = vmatprep.subr.mxu0 0.0
        %3443 = vmatpush1.xpose.msra.mxu0 0.0
        %3444 = vmatprep.subr.mxu0 0.0
        %3445 = vmatpush1.xpose.msra.mxu0 0.0
        %3446 = vmatprep.subr.mxu0 0.0
        %3447 = vmatpush1.xpose.msra.mxu0 0.0
        %3448 = vmatprep.subr.mxu0 0.0
        %3449 = vmatpush1.xpose.msra.mxu0 0.0
        %3450 = vmatprep.subr.mxu0 0.0
        %3451 = vmatpush1.xpose.msra.mxu0 0.0
        %3452 = vmatprep.subr.mxu0 0.0
        %3453 = vmatpush1.xpose.msra.mxu0 0.0
        %3454 = vmatprep.subr.mxu0 0.0
        %3455 = vmatpush1.xpose.msra.mxu0 0.0
        %3456 = vmatprep.subr.mxu0 0.0
        %3457 = vmatpush1.xpose.msra.mxu0 0.0
        %3458 = vmatprep.mubr.f32.mxu0 0.0
        %3459 = vmatmul.mubr.f32.gmra.mrb[0].mxu0 %v3368
        %v3460 = vpop.f32.mrb[0].mxu0
        %v3461 = vadd.f32 0.0, %v3460
        %v3462 = vpop.f32.mrb[0].mxu0
        %3463 = vmatprep.mubr.f32.mxu0 0.0
        %3464 = vmatmul.mubr.f32.gmra.mrb[0].mxu0 %v3371
        %v3465 = vpop.f32.mrb[0].mxu0
        %v3466 = vadd.f32 0.0, %v3465
        %v3467 = vpop.f32.mrb[0].mxu0
        %3468 = vmatprep.mubr.f32.mxu0 0.0
        %3469 = vmatmul.mubr.f32.gmra.mrb[0].mxu0 %v3374
        %v3470 = vpop.f32.mrb[0].mxu0
        %v3471 = vadd.f32 0.0, %v3470
        %v3472 = vpop.f32.mrb[0].mxu0
        %3473 = vmatprep.mubr.f32.mxu0 0.0
        %3474 = vmatmul.mubr.f32.gmra.mrb[0].mxu0 %v3377
        %v3475 = vpop.f32.mrb[0].mxu0
        %v3476 = vadd.f32 0.0, %v3475
        %v3477 = vpop.f32.mrb[0].mxu0
        %3478 = vmatprep.mubr.f32.mxu0 0.0
        %3479 = vmatmul.mubr.f32.gmra.mrb[0].mxu0 %v3380
        %v3480 = vpop.f32.mrb[0].mxu0
        %v3481 = vadd.f32 0.0, %v3480
        %v3482 = vpop.f32.mrb[0].mxu0
        %3483 = vmatprep.mubr.f32.mxu0 0.0
        %3484 = vmatmul.mubr.f32.gmra.mrb[0].mxu0 %v3383
        %v3485 = vpop.f32.mrb[0].mxu0
        %v3486 = vadd.f32 0.0, %v3485
        %v3487 = vpop.f32.mrb[0].mxu0
        %3488 = vmatprep.mubr.f32.mxu0 0.0
        %3489 = vmatmul.mubr.f32.gmra.mrb[0].mxu0 %v3386
        %v3490 = vpop.f32.mrb[0].mxu0
        %v3491 = vadd.f32 0.0, %v3490
        %v3492 = vpop.f32.mrb[0].mxu0
        %3493 = vmatprep.mubr.f32.mxu0 0.0
        %3494 = vmatmul.mubr.f32.gmra.mrb[0].mxu0 %v3389
        %v3495 = vpop.f32.mrb[0].mxu0
        %v3496 = vadd.f32 0.0, %v3495
        %v3497 = vpop.f32.mrb[0].mxu0
        %3498 = vdwg.mxu0
        %v3500 = vsel %vm2494, %v2759, 0
        %v3503 = vsel %vm2494, %v2760, 0
        %v3506 = vsel %vm2494, %v2761, 0
        %v3509 = vsel %vm2494, %v2762, 0
        %v3512 = vsel %vm2494, %v2763, 0
        %v3515 = vsel %vm2494, %v2764, 0
        %v3518 = vsel %vm2494, %v2765, 0
        %v3521 = vsel %vm2494, %v2766, 0
        %v3524 = vsel %vm2494, %v2580, 0
        %3526 = vmatprep.subr.mxu0 0.0
        %3527 = vmatpush1.xpose.msra.mxu0 %v3524
        %3528 = vmatprep.subr.mxu0 0.0
        %3529 = vmatpush1.xpose.msra.mxu0 0.0
        %3530 = vmatprep.subr.mxu0 0.0
        %3531 = vmatpush1.xpose.msra.mxu0 0.0
        %3532 = vmatprep.subr.mxu0 0.0
        %3533 = vmatpush1.xpose.msra.mxu0 0.0
        %3534 = vmatprep.subr.mxu0 0.0
        %3535 = vmatpush1.xpose.msra.mxu0 0.0
        %3536 = vmatprep.subr.mxu0 0.0
        %3537 = vmatpush1.xpose.msra.mxu0 0.0
        %3538 = vmatprep.subr.mxu0 0.0
        %3539 = vmatpush1.xpose.msra.mxu0 0.0
        %3540 = vmatprep.subr.mxu0 0.0
        %3541 = vmatpush1.xpose.msra.mxu0 0.0
        %3542 = vmatprep.subr.mxu0 0.0
        %3543 = vmatpush1.xpose.msra.mxu0 0.0
        %3544 = vmatprep.subr.mxu0 0.0
        %3545 = vmatpush1.xpose.msra.mxu0 0.0
        %3546 = vmatprep.subr.mxu0 0.0
        %3547 = vmatpush1.xpose.msra.mxu0 0.0
        %3548 = vmatprep.subr.mxu0 0.0
        %3549 = vmatpush1.xpose.msra.mxu0 0.0
        %3550 = vmatprep.subr.mxu0 0.0
        %3551 = vmatpush1.xpose.msra.mxu0 0.0
        %3552 = vmatprep.subr.mxu0 0.0
        %3553 = vmatpush1.xpose.msra.mxu0 0.0
        %3554 = vmatprep.subr.mxu0 0.0
        %3555 = vmatpush1.xpose.msra.mxu0 0.0
        %3556 = vmatprep.subr.mxu0 0.0
        %3557 = vmatpush1.xpose.msra.mxu0 0.0
        %3558 = vmatprep.subr.mxu0 0.0
        %3559 = vmatpush1.xpose.msra.mxu0 0.0
        %3560 = vmatprep.subr.mxu0 0.0
        %3561 = vmatpush1.xpose.msra.mxu0 0.0
        %3562 = vmatprep.subr.mxu0 0.0
        %3563 = vmatpush1.xpose.msra.mxu0 0.0
        %3564 = vmatprep.subr.mxu0 0.0
        %3565 = vmatpush1.xpose.msra.mxu0 0.0
        %3566 = vmatprep.subr.mxu0 0.0
        %3567 = vmatpush1.xpose.msra.mxu0 0.0
        %3568 = vmatprep.subr.mxu0 0.0
        %3569 = vmatpush1.xpose.msra.mxu0 0.0
        %3570 = vmatprep.subr.mxu0 0.0
        %3571 = vmatpush1.xpose.msra.mxu0 0.0
        %3572 = vmatprep.subr.mxu0 0.0
        %3573 = vmatpush1.xpose.msra.mxu0 0.0
        %3574 = vmatprep.subr.mxu0 0.0
        %3575 = vmatpush1.xpose.msra.mxu0 0.0
        %3576 = vmatprep.subr.mxu0 0.0
        %3577 = vmatpush1.xpose.msra.mxu0 0.0
        %3578 = vmatprep.subr.mxu0 0.0
        %3579 = vmatpush1.xpose.msra.mxu0 0.0
        %3580 = vmatprep.subr.mxu0 0.0
        %3581 = vmatpush1.xpose.msra.mxu0 0.0
        %3582 = vmatprep.subr.mxu0 0.0
        %3583 = vmatpush1.xpose.msra.mxu0 0.0
        %3584 = vmatprep.subr.mxu0 0.0
        %3585 = vmatpush1.xpose.msra.mxu0 0.0
        %3586 = vmatprep.subr.mxu0 0.0
        %3587 = vmatpush1.xpose.msra.mxu0 0.0
        %3588 = vmatprep.subr.mxu0 0.0
        %3589 = vmatpush1.xpose.msra.mxu0 0.0
        %3590 = vmatprep.mubr.f32.mxu0 0.0
        %3591 = vmatmul.mubr.f32.gmra.mrb[0].mxu0 %v3500
        %v3592 = vpop.f32.mrb[0].mxu0
        %v3593 = vadd.f32 0.0, %v3592
        %v3594 = vpop.f32.mrb[0].mxu0
        %3595 = vmatprep.mubr.f32.mxu0 0.0
        %3596 = vmatmul.mubr.f32.gmra.mrb[0].mxu0 %v3503
        %v3597 = vpop.f32.mrb[0].mxu0
        %v3598 = vadd.f32 0.0, %v3597
        %v3599 = vpop.f32.mrb[0].mxu0
        %3600 = vmatprep.mubr.f32.mxu0 0.0
        %3601 = vmatmul.mubr.f32.gmra.mrb[0].mxu0 %v3506
        %v3602 = vpop.f32.mrb[0].mxu0
        %v3603 = vadd.f32 0.0, %v3602
        %v3604 = vpop.f32.mrb[0].mxu0
        %3605 = vmatprep.mubr.f32.mxu0 0.0
        %3606 = vmatmul.mubr.f32.gmra.mrb[0].mxu0 %v3509
        %v3607 = vpop.f32.mrb[0].mxu0
        %v3608 = vadd.f32 0.0, %v3607
        %v3609 = vpop.f32.mrb[0].mxu0
        %3610 = vmatprep.mubr.f32.mxu0 0.0
        %3611 = vmatmul.mubr.f32.gmra.mrb[0].mxu0 %v3512
        %v3612 = vpop.f32.mrb[0].mxu0
        %v3613 = vadd.f32 0.0, %v3612
        %v3614 = vpop.f32.mrb[0].mxu0
        %3615 = vmatprep.mubr.f32.mxu0 0.0
        %3616 = vmatmul.mubr.f32.gmra.mrb[0].mxu0 %v3515
        %v3617 = vpop.f32.mrb[0].mxu0
        %v3618 = vadd.f32 0.0, %v3617
        %v3619 = vpop.f32.mrb[0].mxu0
        %3620 = vmatprep.mubr.f32.mxu0 0.0
        %3621 = vmatmul.mubr.f32.gmra.mrb[0].mxu0 %v3518
        %v3622 = vpop.f32.mrb[0].mxu0
        %v3623 = vadd.f32 0.0, %v3622
        %v3624 = vpop.f32.mrb[0].mxu0
        %3625 = vmatprep.mubr.f32.mxu0 0.0
        %3626 = vmatmul.mubr.f32.gmra.mrb[0].mxu0 %v3521
        %v3627 = vpop.f32.mrb[0].mxu0
        %v3628 = vadd.f32 0.0, %v3627
        %v3629 = vpop.f32.mrb[0].mxu0
        %3630 = vdwg.mxu0
        %v3632 = vsel %vm2494, %v2791, 0
        %v3635 = vsel %vm2494, %v2792, 0
        %v3638 = vsel %vm2494, %v2793, 0
        %v3641 = vsel %vm2494, %v2794, 0
        %v3644 = vsel %vm2494, %v2795, 0
        %v3647 = vsel %vm2494, %v2796, 0
        %v3650 = vsel %vm2494, %v2797, 0
        %v3653 = vsel %vm2494, %v2798, 0
        %v3656 = vsel %vm2494, %v2581, 0
        %3658 = vmatprep.subr.mxu0 0.0
        %3659 = vmatpush1.xpose.msra.mxu0 %v3656
        %3660 = vmatprep.subr.mxu0 0.0
        %3661 = vmatpush1.xpose.msra.mxu0 0.0
        %3662 = vmatprep.subr.mxu0 0.0
        %3663 = vmatpush1.xpose.msra.mxu0 0.0
        %3664 = vmatprep.subr.mxu0 0.0
        %3665 = vmatpush1.xpose.msra.mxu0 0.0
        %3666 = vmatprep.subr.mxu0 0.0
        %3667 = vmatpush1.xpose.msra.mxu0 0.0
        %3668 = vmatprep.subr.mxu0 0.0
        %3669 = vmatpush1.xpose.msra.mxu0 0.0
        %3670 = vmatprep.subr.mxu0 0.0
        %3671 = vmatpush1.xpose.msra.mxu0 0.0
        %3672 = vmatprep.subr.mxu0 0.0
        %3673 = vmatpush1.xpose.msra.mxu0 0.0
        %3674 = vmatprep.subr.mxu0 0.0
        %3675 = vmatpush1.xpose.msra.mxu0 0.0
        %3676 = vmatprep.subr.mxu0 0.0
        %3677 = vmatpush1.xpose.msra.mxu0 0.0
        %3678 = vmatprep.subr.mxu0 0.0
        %3679 = vmatpush1.xpose.msra.mxu0 0.0
        %3680 = vmatprep.subr.mxu0 0.0
        %3681 = vmatpush1.xpose.msra.mxu0 0.0
        %3682 = vmatprep.subr.mxu0 0.0
        %3683 = vmatpush1.xpose.msra.mxu0 0.0
        %3684 = vmatprep.subr.mxu0 0.0
        %3685 = vmatpush1.xpose.msra.mxu0 0.0
        %3686 = vmatprep.subr.mxu0 0.0
        %3687 = vmatpush1.xpose.msra.mxu0 0.0
        %3688 = vmatprep.subr.mxu0 0.0
        %3689 = vmatpush1.xpose.msra.mxu0 0.0
        %3690 = vmatprep.subr.mxu0 0.0
        %3691 = vmatpush1.xpose.msra.mxu0 0.0
        %3692 = vmatprep.subr.mxu0 0.0
        %3693 = vmatpush1.xpose.msra.mxu0 0.0
        %3694 = vmatprep.subr.mxu0 0.0
        %3695 = vmatpush1.xpose.msra.mxu0 0.0
        %3696 = vmatprep.subr.mxu0 0.0
        %3697 = vmatpush1.xpose.msra.mxu0 0.0
        %3698 = vmatprep.subr.mxu0 0.0
        %3699 = vmatpush1.xpose.msra.mxu0 0.0
        %3700 = vmatprep.subr.mxu0 0.0
        %3701 = vmatpush1.xpose.msra.mxu0 0.0
        %3702 = vmatprep.subr.mxu0 0.0
        %3703 = vmatpush1.xpose.msra.mxu0 0.0
        %3704 = vmatprep.subr.mxu0 0.0
        %3705 = vmatpush1.xpose.msra.mxu0 0.0
        %3706 = vmatprep.subr.mxu0 0.0
        %3707 = vmatpush1.xpose.msra.mxu0 0.0
        %3708 = vmatprep.subr.mxu0 0.0
        %3709 = vmatpush1.xpose.msra.mxu0 0.0
        %3710 = vmatprep.subr.mxu0 0.0
        %3711 = vmatpush1.xpose.msra.mxu0 0.0
        %3712 = vmatprep.subr.mxu0 0.0
        %3713 = vmatpush1.xpose.msra.mxu0 0.0
        %3714 = vmatprep.subr.mxu0 0.0
        %3715 = vmatpush1.xpose.msra.mxu0 0.0
        %3716 = vmatprep.subr.mxu0 0.0
        %3717 = vmatpush1.xpose.msra.mxu0 0.0
        %3718 = vmatprep.subr.mxu0 0.0
        %3719 = vmatpush1.xpose.msra.mxu0 0.0
        %3720 = vmatprep.subr.mxu0 0.0
        %3721 = vmatpush1.xpose.msra.mxu0 0.0
        %3722 = vmatprep.mubr.f32.mxu0 0.0
        %3723 = vmatmul.mubr.f32.gmra.mrb[0].mxu0 %v3632
        %v3724 = vpop.f32.mrb[0].mxu0
        %v3725 = vadd.f32 0.0, %v3724
        %v3726 = vpop.f32.mrb[0].mxu0
        %3727 = vmatprep.mubr.f32.mxu0 0.0
        %3728 = vmatmul.mubr.f32.gmra.mrb[0].mxu0 %v3635
        %v3729 = vpop.f32.mrb[0].mxu0
        %v3730 = vadd.f32 0.0, %v3729
        %v3731 = vpop.f32.mrb[0].mxu0
        %3732 = vmatprep.mubr.f32.mxu0 0.0
        %3733 = vmatmul.mubr.f32.gmra.mrb[0].mxu0 %v3638
        %v3734 = vpop.f32.mrb[0].mxu0
        %v3735 = vadd.f32 0.0, %v3734
        %v3736 = vpop.f32.mrb[0].mxu0
        %3737 = vmatprep.mubr.f32.mxu0 0.0
        %3738 = vmatmul.mubr.f32.gmra.mrb[0].mxu0 %v3641
        %v3739 = vpop.f32.mrb[0].mxu0
        %v3740 = vadd.f32 0.0, %v3739
        %v3741 = vpop.f32.mrb[0].mxu0
        %3742 = vmatprep.mubr.f32.mxu0 0.0
        %3743 = vmatmul.mubr.f32.gmra.mrb[0].mxu0 %v3644
        %v3744 = vpop.f32.mrb[0].mxu0
        %v3745 = vadd.f32 0.0, %v3744
        %v3746 = vpop.f32.mrb[0].mxu0
        %3747 = vmatprep.mubr.f32.mxu0 0.0
        %3748 = vmatmul.mubr.f32.gmra.mrb[0].mxu0 %v3647
        %v3749 = vpop.f32.mrb[0].mxu0
        %v3750 = vadd.f32 0.0, %v3749
        %v3751 = vpop.f32.mrb[0].mxu0
        %3752 = vmatprep.mubr.f32.mxu0 0.0
        %3753 = vmatmul.mubr.f32.gmra.mrb[0].mxu0 %v3650
        %v3754 = vpop.f32.mrb[0].mxu0
        %v3755 = vadd.f32 0.0, %v3754
        %v3756 = vpop.f32.mrb[0].mxu0
        %3757 = vmatprep.mubr.f32.mxu0 0.0
        %3758 = vmatmul.mubr.f32.gmra.mrb[0].mxu0 %v3653
        %v3759 = vpop.f32.mrb[0].mxu0
        %v3760 = vadd.f32 0.0, %v3759
        %v3761 = vpop.f32.mrb[0].mxu0
        %3762 = vdwg.mxu0
        %v3764 = vsel %vm2494, %v2823, 0
        %v3767 = vsel %vm2494, %v2824, 0
        %v3770 = vsel %vm2494, %v2825, 0
        %v3773 = vsel %vm2494, %v2826, 0
        %v3776 = vsel %vm2494, %v2827, 0
        %v3779 = vsel %vm2494, %v2828, 0
        %v3782 = vsel %vm2494, %v2829, 0
        %v3785 = vsel %vm2494, %v2830, 0
        %v3788 = vsel %vm2494, %v2582, 0
        %3790 = vmatprep.subr.mxu0 0.0
        %3791 = vmatpush1.xpose.msra.mxu0 %v3788
        %3792 = vmatprep.subr.mxu0 0.0
        %3793 = vmatpush1.xpose.msra.mxu0 0.0
        %3794 = vmatprep.subr.mxu0 0.0
        %3795 = vmatpush1.xpose.msra.mxu0 0.0
        %3796 = vmatprep.subr.mxu0 0.0
        %3797 = vmatpush1.xpose.msra.mxu0 0.0
        %3798 = vmatprep.subr.mxu0 0.0
        %3799 = vmatpush1.xpose.msra.mxu0 0.0
        %3800 = vmatprep.subr.mxu0 0.0
        %3801 = vmatpush1.xpose.msra.mxu0 0.0
        %3802 = vmatprep.subr.mxu0 0.0
        %3803 = vmatpush1.xpose.msra.mxu0 0.0
        %3804 = vmatprep.subr.mxu0 0.0
        %3805 = vmatpush1.xpose.msra.mxu0 0.0
        %3806 = vmatprep.subr.mxu0 0.0
        %3807 = vmatpush1.xpose.msra.mxu0 0.0
        %3808 = vmatprep.subr.mxu0 0.0
        %3809 = vmatpush1.xpose.msra.mxu0 0.0
        %3810 = vmatprep.subr.mxu0 0.0
        %3811 = vmatpush1.xpose.msra.mxu0 0.0
        %3812 = vmatprep.subr.mxu0 0.0
        %3813 = vmatpush1.xpose.msra.mxu0 0.0
        %3814 = vmatprep.subr.mxu0 0.0
        %3815 = vmatpush1.xpose.msra.mxu0 0.0
        %3816 = vmatprep.subr.mxu0 0.0
        %3817 = vmatpush1.xpose.msra.mxu0 0.0
        %3818 = vmatprep.subr.mxu0 0.0
        %3819 = vmatpush1.xpose.msra.mxu0 0.0
        %3820 = vmatprep.subr.mxu0 0.0
        %3821 = vmatpush1.xpose.msra.mxu0 0.0
        %3822 = vmatprep.subr.mxu0 0.0
        %3823 = vmatpush1.xpose.msra.mxu0 0.0
        %3824 = vmatprep.subr.mxu0 0.0
        %3825 = vmatpush1.xpose.msra.mxu0 0.0
        %3826 = vmatprep.subr.mxu0 0.0
        %3827 = vmatpush1.xpose.msra.mxu0 0.0
        %3828 = vmatprep.subr.mxu0 0.0
        %3829 = vmatpush1.xpose.msra.mxu0 0.0
        %3830 = vmatprep.subr.mxu0 0.0
        %3831 = vmatpush1.xpose.msra.mxu0 0.0
        %3832 = vmatprep.subr.mxu0 0.0
        %3833 = vmatpush1.xpose.msra.mxu0 0.0
        %3834 = vmatprep.subr.mxu0 0.0
        %3835 = vmatpush1.xpose.msra.mxu0 0.0
        %3836 = vmatprep.subr.mxu0 0.0
        %3837 = vmatpush1.xpose.msra.mxu0 0.0
        %3838 = vmatprep.subr.mxu0 0.0
        %3839 = vmatpush1.xpose.msra.mxu0 0.0
        %3840 = vmatprep.subr.mxu0 0.0
        %3841 = vmatpush1.xpose.msra.mxu0 0.0
        %3842 = vmatprep.subr.mxu0 0.0
        %3843 = vmatpush1.xpose.msra.mxu0 0.0
        %3844 = vmatprep.subr.mxu0 0.0
        %3845 = vmatpush1.xpose.msra.mxu0 0.0
        %3846 = vmatprep.subr.mxu0 0.0
        %3847 = vmatpush1.xpose.msra.mxu0 0.0
        %3848 = vmatprep.subr.mxu0 0.0
        %3849 = vmatpush1.xpose.msra.mxu0 0.0
        %3850 = vmatprep.subr.mxu0 0.0
        %3851 = vmatpush1.xpose.msra.mxu0 0.0
        %3852 = vmatprep.subr.mxu0 0.0
        %3853 = vmatpush1.xpose.msra.mxu0 0.0
        %3854 = vmatprep.mubr.f32.mxu0 0.0
        %3855 = vmatmul.mubr.f32.gmra.mrb[0].mxu0 %v3764
        %v3856 = vpop.f32.mrb[0].mxu0
        %v3857 = vadd.f32 0.0, %v3856
        %v3858 = vpop.f32.mrb[0].mxu0
        %3859 = vmatprep.mubr.f32.mxu0 0.0
        %3860 = vmatmul.mubr.f32.gmra.mrb[0].mxu0 %v3767
        %v3861 = vpop.f32.mrb[0].mxu0
        %v3862 = vadd.f32 0.0, %v3861
        %v3863 = vpop.f32.mrb[0].mxu0
        %3864 = vmatprep.mubr.f32.mxu0 0.0
        %3865 = vmatmul.mubr.f32.gmra.mrb[0].mxu0 %v3770
        %v3866 = vpop.f32.mrb[0].mxu0
        %v3867 = vadd.f32 0.0, %v3866
        %v3868 = vpop.f32.mrb[0].mxu0
        %3869 = vmatprep.mubr.f32.mxu0 0.0
        %3870 = vmatmul.mubr.f32.gmra.mrb[0].mxu0 %v3773
        %v3871 = vpop.f32.mrb[0].mxu0
        %v3872 = vadd.f32 0.0, %v3871
        %v3873 = vpop.f32.mrb[0].mxu0
        %3874 = vmatprep.mubr.f32.mxu0 0.0
        %3875 = vmatmul.mubr.f32.gmra.mrb[0].mxu0 %v3776
        %v3876 = vpop.f32.mrb[0].mxu0
        %v3877 = vadd.f32 0.0, %v3876
        %v3878 = vpop.f32.mrb[0].mxu0
        %3879 = vmatprep.mubr.f32.mxu0 0.0
        %3880 = vmatmul.mubr.f32.gmra.mrb[0].mxu0 %v3779
        %v3881 = vpop.f32.mrb[0].mxu0
        %v3882 = vadd.f32 0.0, %v3881
        %v3883 = vpop.f32.mrb[0].mxu0
        %3884 = vmatprep.mubr.f32.mxu0 0.0
        %3885 = vmatmul.mubr.f32.gmra.mrb[0].mxu0 %v3782
        %v3886 = vpop.f32.mrb[0].mxu0
        %v3887 = vadd.f32 0.0, %v3886
        %v3888 = vpop.f32.mrb[0].mxu0
        %3889 = vmatprep.mubr.f32.mxu0 0.0
        %3890 = vmatmul.mubr.f32.gmra.mrb[0].mxu0 %v3785
        %v3891 = vpop.f32.mrb[0].mxu0
        %v3892 = vadd.f32 0.0, %v3891
        %v3893 = vpop.f32.mrb[0].mxu0
        %3894 = vdwg.mxu0
        %3895 = vxpose.xlu0.b32.start [1/16] %v2933, 128
        %3896 = vxpose.xlu0.b32.cont [2/16] %v2938, 128
        %3897 = vxpose.xlu0.b32.cont [3/16] %v2943, 128
        %3898 = vxpose.xlu0.b32.cont [4/16] %v2948, 128
        %3899 = vxpose.xlu0.b32.cont [5/16] %v2953, 128
        %3900 = vxpose.xlu0.b32.cont [6/16] %v2958, 128
        %3901 = vxpose.xlu0.b32.cont [7/16] %v2963, 128
        %3902 = vxpose.xlu0.b32.cont [8/16] %v2968, 128
        %3903 = vxpose.xlu0.b32.cont [9/16] 0.0, 128
        %3904 = vxpose.xlu0.b32.cont [10/16] 0.0, 128
        %3905 = vxpose.xlu0.b32.cont [11/16] 0.0, 128
        %3906 = vxpose.xlu0.b32.cont [12/16] 0.0, 128
        %3907 = vxpose.xlu0.b32.cont [13/16] 0.0, 128
        %3908 = vxpose.xlu0.b32.cont [14/16] 0.0, 128
        %3909 = vxpose.xlu0.b32.cont [15/16] 0.0, 128
        %3910 = vxpose.xlu0.b32.end [16/16] 0.0, 128
        %v3911 = vpop.trf.xlu0
        %v3912 = vpop.trf.xlu0
        %v3913 = vpop.trf.xlu0
        %v3914 = vpop.trf.xlu0
        %v3915 = vpop.trf.xlu0
        %v3916 = vpop.trf.xlu0
        %v3917 = vpop.trf.xlu0
        %v3918 = vpop.trf.xlu0
        %v3919 = vpop.trf.xlu0
        %v3920 = vpop.trf.xlu0
        %v3921 = vpop.trf.xlu0
        %v3922 = vpop.trf.xlu0
        %v3923 = vpop.trf.xlu0
        %v3924 = vpop.trf.xlu0
        %v3925 = vpop.trf.xlu0
        %v3926 = vpop.trf.xlu0
        %3927 = vxpose.xlu0.b32.start [1/16] %v3065, 128
        %3928 = vxpose.xlu0.b32.cont [2/16] %v3070, 128
        %3929 = vxpose.xlu0.b32.cont [3/16] %v3075, 128
        %3930 = vxpose.xlu0.b32.cont [4/16] %v3080, 128
        %3931 = vxpose.xlu0.b32.cont [5/16] %v3085, 128
        %3932 = vxpose.xlu0.b32.cont [6/16] %v3090, 128
        %3933 = vxpose.xlu0.b32.cont [7/16] %v3095, 128
        %3934 = vxpose.xlu0.b32.cont [8/16] %v3100, 128
        %3935 = vxpose.xlu0.b32.cont [9/16] 0.0, 128
        %3936 = vxpose.xlu0.b32.cont [10/16] 0.0, 128
        %3937 = vxpose.xlu0.b32.cont [11/16] 0.0, 128
        %3938 = vxpose.xlu0.b32.cont [12/16] 0.0, 128
        %3939 = vxpose.xlu0.b32.cont [13/16] 0.0, 128
        %3940 = vxpose.xlu0.b32.cont [14/16] 0.0, 128
        %3941 = vxpose.xlu0.b32.cont [15/16] 0.0, 128
        %3942 = vxpose.xlu0.b32.end [16/16] 0.0, 128
        %v3943 = vpop.trf.xlu0
        %v3944 = vpop.trf.xlu0
        %v3945 = vpop.trf.xlu0
        %v3946 = vpop.trf.xlu0
        %v3947 = vpop.trf.xlu0
        %v3948 = vpop.trf.xlu0
        %v3949 = vpop.trf.xlu0
        %v3950 = vpop.trf.xlu0
        %v3951 = vpop.trf.xlu0
        %v3952 = vpop.trf.xlu0
        %v3953 = vpop.trf.xlu0
        %v3954 = vpop.trf.xlu0
        %v3955 = vpop.trf.xlu0
        %v3956 = vpop.trf.xlu0
        %v3957 = vpop.trf.xlu0
        %v3958 = vpop.trf.xlu0
        %3959 = vxpose.xlu0.b32.start [1/16] %v3197, 128
        %3960 = vxpose.xlu0.b32.cont [2/16] %v3202, 128
        %3961 = vxpose.xlu0.b32.cont [3/16] %v3207, 128
        %3962 = vxpose.xlu0.b32.cont [4/16] %v3212, 128
        %3963 = vxpose.xlu0.b32.cont [5/16] %v3217, 128
        %3964 = vxpose.xlu0.b32.cont [6/16] %v3222, 128
        %3965 = vxpose.xlu0.b32.cont [7/16] %v3227, 128
        %3966 = vxpose.xlu0.b32.cont [8/16] %v3232, 128
        %3967 = vxpose.xlu0.b32.cont [9/16] 0.0, 128
        %3968 = vxpose.xlu0.b32.cont [10/16] 0.0, 128
        %3969 = vxpose.xlu0.b32.cont [11/16] 0.0, 128
        %3970 = vxpose.xlu0.b32.cont [12/16] 0.0, 128
        %3971 = vxpose.xlu0.b32.cont [13/16] 0.0, 128
        %3972 = vxpose.xlu0.b32.cont [14/16] 0.0, 128
        %3973 = vxpose.xlu0.b32.cont [15/16] 0.0, 128
        %3974 = vxpose.xlu0.b32.end [16/16] 0.0, 128
        %v3975 = vpop.trf.xlu0
        %v3976 = vpop.trf.xlu0
        %v3977 = vpop.trf.xlu0
        %v3978 = vpop.trf.xlu0
        %v3979 = vpop.trf.xlu0
        %v3980 = vpop.trf.xlu0
        %v3981 = vpop.trf.xlu0
        %v3982 = vpop.trf.xlu0
        %v3983 = vpop.trf.xlu0
        %v3984 = vpop.trf.xlu0
        %v3985 = vpop.trf.xlu0
        %v3986 = vpop.trf.xlu0
        %v3987 = vpop.trf.xlu0
        %v3988 = vpop.trf.xlu0
        %v3989 = vpop.trf.xlu0
        %v3990 = vpop.trf.xlu0
        %3991 = vxpose.xlu0.b32.start [1/16] %v3329, 128
        %3992 = vxpose.xlu0.b32.cont [2/16] %v3334, 128
        %3993 = vxpose.xlu0.b32.cont [3/16] %v3339, 128
        %3994 = vxpose.xlu0.b32.cont [4/16] %v3344, 128
        %3995 = vxpose.xlu0.b32.cont [5/16] %v3349, 128
        %3996 = vxpose.xlu0.b32.cont [6/16] %v3354, 128
        %3997 = vxpose.xlu0.b32.cont [7/16] %v3359, 128
        %3998 = vxpose.xlu0.b32.cont [8/16] %v3364, 128
        %3999 = vxpose.xlu0.b32.cont [9/16] 0.0, 128
        %4000 = vxpose.xlu0.b32.cont [10/16] 0.0, 128
        %4001 = vxpose.xlu0.b32.cont [11/16] 0.0, 128
        %4002 = vxpose.xlu0.b32.cont [12/16] 0.0, 128
        %4003 = vxpose.xlu0.b32.cont [13/16] 0.0, 128
        %4004 = vxpose.xlu0.b32.cont [14/16] 0.0, 128
        %4005 = vxpose.xlu0.b32.cont [15/16] 0.0, 128
        %4006 = vxpose.xlu0.b32.end [16/16] 0.0, 128
        %v4007 = vpop.trf.xlu0
        %v4008 = vpop.trf.xlu0
        %v4009 = vpop.trf.xlu0
        %v4010 = vpop.trf.xlu0
        %v4011 = vpop.trf.xlu0
        %v4012 = vpop.trf.xlu0
        %v4013 = vpop.trf.xlu0
        %v4014 = vpop.trf.xlu0
        %v4015 = vpop.trf.xlu0
        %v4016 = vpop.trf.xlu0
        %v4017 = vpop.trf.xlu0
        %v4018 = vpop.trf.xlu0
        %v4019 = vpop.trf.xlu0
        %v4020 = vpop.trf.xlu0
        %v4021 = vpop.trf.xlu0
        %v4022 = vpop.trf.xlu0
        %4023 = vxpose.xlu0.b32.start [1/16] %v3461, 128
        %4024 = vxpose.xlu0.b32.cont [2/16] %v3466, 128
        %4025 = vxpose.xlu0.b32.cont [3/16] %v3471, 128
        %4026 = vxpose.xlu0.b32.cont [4/16] %v3476, 128
        %4027 = vxpose.xlu0.b32.cont [5/16] %v3481, 128
        %4028 = vxpose.xlu0.b32.cont [6/16] %v3486, 128
        %4029 = vxpose.xlu0.b32.cont [7/16] %v3491, 128
        %4030 = vxpose.xlu0.b32.cont [8/16] %v3496, 128
        %4031 = vxpose.xlu0.b32.cont [9/16] 0.0, 128
        %4032 = vxpose.xlu0.b32.cont [10/16] 0.0, 128
        %4033 = vxpose.xlu0.b32.cont [11/16] 0.0, 128
        %4034 = vxpose.xlu0.b32.cont [12/16] 0.0, 128
        %4035 = vxpose.xlu0.b32.cont [13/16] 0.0, 128
        %4036 = vxpose.xlu0.b32.cont [14/16] 0.0, 128
        %4037 = vxpose.xlu0.b32.cont [15/16] 0.0, 128
        %4038 = vxpose.xlu0.b32.end [16/16] 0.0, 128
        %v4039 = vpop.trf.xlu0
        %v4040 = vpop.trf.xlu0
        %v4041 = vpop.trf.xlu0
        %v4042 = vpop.trf.xlu0
        %v4043 = vpop.trf.xlu0
        %v4044 = vpop.trf.xlu0
        %v4045 = vpop.trf.xlu0
        %v4046 = vpop.trf.xlu0
        %v4047 = vpop.trf.xlu0
        %v4048 = vpop.trf.xlu0
        %v4049 = vpop.trf.xlu0
        %v4050 = vpop.trf.xlu0
        %v4051 = vpop.trf.xlu0
        %v4052 = vpop.trf.xlu0
        %v4053 = vpop.trf.xlu0
        %v4054 = vpop.trf.xlu0
        %4055 = vxpose.xlu0.b32.start [1/16] %v3593, 128
        %4056 = vxpose.xlu0.b32.cont [2/16] %v3598, 128
        %4057 = vxpose.xlu0.b32.cont [3/16] %v3603, 128
        %4058 = vxpose.xlu0.b32.cont [4/16] %v3608, 128
        %4059 = vxpose.xlu0.b32.cont [5/16] %v3613, 128
        %4060 = vxpose.xlu0.b32.cont [6/16] %v3618, 128
        %4061 = vxpose.xlu0.b32.cont [7/16] %v3623, 128
        %4062 = vxpose.xlu0.b32.cont [8/16] %v3628, 128
        %4063 = vxpose.xlu0.b32.cont [9/16] 0.0, 128
        %4064 = vxpose.xlu0.b32.cont [10/16] 0.0, 128
        %4065 = vxpose.xlu0.b32.cont [11/16] 0.0, 128
        %4066 = vxpose.xlu0.b32.cont [12/16] 0.0, 128
        %4067 = vxpose.xlu0.b32.cont [13/16] 0.0, 128
        %4068 = vxpose.xlu0.b32.cont [14/16] 0.0, 128
        %4069 = vxpose.xlu0.b32.cont [15/16] 0.0, 128
        %4070 = vxpose.xlu0.b32.end [16/16] 0.0, 128
        %v4071 = vpop.trf.xlu0
        %v4072 = vpop.trf.xlu0
        %v4073 = vpop.trf.xlu0
        %v4074 = vpop.trf.xlu0
        %v4075 = vpop.trf.xlu0
        %v4076 = vpop.trf.xlu0
        %v4077 = vpop.trf.xlu0
        %v4078 = vpop.trf.xlu0
        %v4079 = vpop.trf.xlu0
        %v4080 = vpop.trf.xlu0
        %v4081 = vpop.trf.xlu0
        %v4082 = vpop.trf.xlu0
        %v4083 = vpop.trf.xlu0
        %v4084 = vpop.trf.xlu0
        %v4085 = vpop.trf.xlu0
        %v4086 = vpop.trf.xlu0
        %4087 = vxpose.xlu0.b32.start [1/16] %v3725, 128
        %4088 = vxpose.xlu0.b32.cont [2/16] %v3730, 128
        %4089 = vxpose.xlu0.b32.cont [3/16] %v3735, 128
        %4090 = vxpose.xlu0.b32.cont [4/16] %v3740, 128
        %4091 = vxpose.xlu0.b32.cont [5/16] %v3745, 128
        %4092 = vxpose.xlu0.b32.cont [6/16] %v3750, 128
        %4093 = vxpose.xlu0.b32.cont [7/16] %v3755, 128
        %4094 = vxpose.xlu0.b32.cont [8/16] %v3760, 128
        %4095 = vxpose.xlu0.b32.cont [9/16] 0.0, 128
        %4096 = vxpose.xlu0.b32.cont [10/16] 0.0, 128
        %4097 = vxpose.xlu0.b32.cont [11/16] 0.0, 128
        %4098 = vxpose.xlu0.b32.cont [12/16] 0.0, 128
        %4099 = vxpose.xlu0.b32.cont [13/16] 0.0, 128
        %4100 = vxpose.xlu0.b32.cont [14/16] 0.0, 128
        %4101 = vxpose.xlu0.b32.cont [15/16] 0.0, 128
        %4102 = vxpose.xlu0.b32.end [16/16] 0.0, 128
        %v4103 = vpop.trf.xlu0
        %v4104 = vpop.trf.xlu0
        %v4105 = vpop.trf.xlu0
        %v4106 = vpop.trf.xlu0
        %v4107 = vpop.trf.xlu0
        %v4108 = vpop.trf.xlu0
        %v4109 = vpop.trf.xlu0
        %v4110 = vpop.trf.xlu0
        %v4111 = vpop.trf.xlu0
        %v4112 = vpop.trf.xlu0
        %v4113 = vpop.trf.xlu0
        %v4114 = vpop.trf.xlu0
        %v4115 = vpop.trf.xlu0
        %v4116 = vpop.trf.xlu0
        %v4117 = vpop.trf.xlu0
        %v4118 = vpop.trf.xlu0
        %4119 = vxpose.xlu0.b32.start [1/16] %v3857, 128
        %4120 = vxpose.xlu0.b32.cont [2/16] %v3862, 128
        %4121 = vxpose.xlu0.b32.cont [3/16] %v3867, 128
        %4122 = vxpose.xlu0.b32.cont [4/16] %v3872, 128
        %4123 = vxpose.xlu0.b32.cont [5/16] %v3877, 128
        %4124 = vxpose.xlu0.b32.cont [6/16] %v3882, 128
        %4125 = vxpose.xlu0.b32.cont [7/16] %v3887, 128
        %4126 = vxpose.xlu0.b32.cont [8/16] %v3892, 128
        %4127 = vxpose.xlu0.b32.cont [9/16] 0.0, 128
        %4128 = vxpose.xlu0.b32.cont [10/16] 0.0, 128
        %4129 = vxpose.xlu0.b32.cont [11/16] 0.0, 128
        %4130 = vxpose.xlu0.b32.cont [12/16] 0.0, 128
        %4131 = vxpose.xlu0.b32.cont [13/16] 0.0, 128
        %4132 = vxpose.xlu0.b32.cont [14/16] 0.0, 128
        %4133 = vxpose.xlu0.b32.cont [15/16] 0.0, 128
        %4134 = vxpose.xlu0.b32.end [16/16] 0.0, 128
        %v4135 = vpop.trf.xlu0
        %v4136 = vpop.trf.xlu0
        %v4137 = vpop.trf.xlu0
        %v4138 = vpop.trf.xlu0
        %v4139 = vpop.trf.xlu0
        %v4140 = vpop.trf.xlu0
        %v4141 = vpop.trf.xlu0
        %v4142 = vpop.trf.xlu0
        %v4143 = vpop.trf.xlu0
        %v4144 = vpop.trf.xlu0
        %v4145 = vpop.trf.xlu0
        %v4146 = vpop.trf.xlu0
        %v4147 = vpop.trf.xlu0
        %v4148 = vpop.trf.xlu0
        %v4149 = vpop.trf.xlu0
        %v4150 = vpop.trf.xlu0
        %v4151 = vcombine.low %v3911, %v3975
        %v4152 = vcombine.high %v3911, %v3975
        %v4154 = vunpack.c.l.s4 1983009808
        %v4155 = vunpack.c.0.s8 %v4154
        %v4156 = vlaneseq
        %v4157 = vshrl.u32 %v4156, 7
        %v4158 = vsub.s32 %v4155, %v4157
        %v4159 = vrot.slane %v4151, %v4158
        %v4161 = vunpack.c.l.s4 1983009808
        %v4162 = vunpack.c.0.s8 %v4161
        %v4163 = vlaneseq
        %v4164 = vshrl.u32 %v4163, 7
        %v4165 = vsub.s32 %v4162, %v4164
        %v4166 = vrot.slane %v4152, %v4165
        %v4167 = vcombine.low %v3943, %v4007
        %v4168 = vcombine.high %v3943, %v4007
        %v4170 = vunpack.c.l.s4 1983009808
        %v4171 = vunpack.c.0.s8 %v4170
        %v4172 = vlaneseq
        %v4173 = vshrl.u32 %v4172, 7
        %v4174 = vsub.s32 %v4171, %v4173
        %v4175 = vrot.slane %v4167, %v4174
        %v4177 = vunpack.c.l.s4 1983009808
        %v4178 = vunpack.c.0.s8 %v4177
        %v4179 = vlaneseq
        %v4180 = vshrl.u32 %v4179, 7
        %v4181 = vsub.s32 %v4178, %v4180
        %v4182 = vrot.slane %v4168, %v4181
        %v4183 = vcombine.low %v4039, %v4103
        %v4184 = vcombine.high %v4039, %v4103
        %v4186 = vunpack.c.l.s4 1983009808
        %v4187 = vunpack.c.0.s8 %v4186
        %v4188 = vlaneseq
        %v4189 = vshrl.u32 %v4188, 7
        %v4190 = vsub.s32 %v4187, %v4189
        %v4191 = vrot.slane %v4183, %v4190
        %v4193 = vunpack.c.l.s4 1983009808
        %v4194 = vunpack.c.0.s8 %v4193
        %v4195 = vlaneseq
        %v4196 = vshrl.u32 %v4195, 7
        %v4197 = vsub.s32 %v4194, %v4196
        %v4198 = vrot.slane %v4184, %v4197
        %v4199 = vcombine.low %v4071, %v4135
        %v4200 = vcombine.high %v4071, %v4135
        %v4202 = vunpack.c.l.s4 1983009808
        %v4203 = vunpack.c.0.s8 %v4202
        %v4204 = vlaneseq
        %v4205 = vshrl.u32 %v4204, 7
        %v4206 = vsub.s32 %v4203, %v4205
        %v4207 = vrot.slane %v4199, %v4206
        %v4209 = vunpack.c.l.s4 1983009808
        %v4210 = vunpack.c.0.s8 %v4209
        %v4211 = vlaneseq
        %v4212 = vshrl.u32 %v4211, 7
        %v4213 = vsub.s32 %v4210, %v4212
        %v4214 = vrot.slane %v4200, %v4213
        %v4215 = vcombine.low %v4159, %v4175
        %v4216 = vcombine.high %v4159, %v4175
        %v4218 = vunpack.c.l.s4 1934713408
        %v4219 = vunpack.c.0.s8 %v4218
        %v4220 = vlaneseq
        %v4221 = vshrl.u32 %v4220, 7
        %v4222 = vsub.s32 %v4219, %v4221
        %v4223 = vrot.slane %v4215, %v4222
        %v4225 = vunpack.c.l.s4 1934713408
        %v4226 = vunpack.c.0.s8 %v4225
        %v4227 = vlaneseq
        %v4228 = vshrl.u32 %v4227, 7
        %v4229 = vsub.s32 %v4226, %v4228
        %v4230 = vrot.slane %v4216, %v4229
        %v4231 = vcombine.low %v4166, %v4182
        %v4232 = vcombine.high %v4166, %v4182
        %v4234 = vunpack.c.l.s4 1934713408
        %v4235 = vunpack.c.0.s8 %v4234
        %v4236 = vlaneseq
        %v4237 = vshrl.u32 %v4236, 7
        %v4238 = vsub.s32 %v4235, %v4237
        %v4239 = vrot.slane %v4231, %v4238
        %v4241 = vunpack.c.l.s4 1934713408
        %v4242 = vunpack.c.0.s8 %v4241
        %v4243 = vlaneseq
        %v4244 = vshrl.u32 %v4243, 7
        %v4245 = vsub.s32 %v4242, %v4244
        %v4246 = vrot.slane %v4232, %v4245
        %v4247 = vcombine.low %v4191, %v4207
        %v4248 = vcombine.high %v4191, %v4207
        %v4250 = vunpack.c.l.s4 1934713408
        %v4251 = vunpack.c.0.s8 %v4250
        %v4252 = vlaneseq
        %v4253 = vshrl.u32 %v4252, 7
        %v4254 = vsub.s32 %v4251, %v4253
        %v4255 = vrot.slane %v4247, %v4254
        %v4257 = vunpack.c.l.s4 1934713408
        %v4258 = vunpack.c.0.s8 %v4257
        %v4259 = vlaneseq
        %v4260 = vshrl.u32 %v4259, 7
        %v4261 = vsub.s32 %v4258, %v4260
        %v4262 = vrot.slane %v4248, %v4261
        %v4263 = vcombine.low %v4198, %v4214
        %v4264 = vcombine.high %v4198, %v4214
        %v4266 = vunpack.c.l.s4 1934713408
        %v4267 = vunpack.c.0.s8 %v4266
        %v4268 = vlaneseq
        %v4269 = vshrl.u32 %v4268, 7
        %v4270 = vsub.s32 %v4267, %v4269
        %v4271 = vrot.slane %v4263, %v4270
        %v4273 = vunpack.c.l.s4 1934713408
        %v4274 = vunpack.c.0.s8 %v4273
        %v4275 = vlaneseq
        %v4276 = vshrl.u32 %v4275, 7
        %v4277 = vsub.s32 %v4274, %v4276
        %v4278 = vrot.slane %v4264, %v4277
        %v4279 = vcombine.low %v4223, %v4255
        %v4280 = vcombine.high %v4223, %v4255
        %v4281 = vcombine.low %v4230, %v4262
        %v4282 = vcombine.high %v4230, %v4262
        %v4283 = vcombine.low %v4239, %v4271
        %v4284 = vcombine.high %v4239, %v4271
        %v4285 = vcombine.low %v4246, %v4278
        %v4286 = vcombine.high %v4246, %v4278
        %v4287 = vcombine.low %v4279, %v4281
        %v4288 = vcombine.high %v4279, %v4281
        %v4290 = vunpack.c.l.s4 1983009808
        %v4291 = vunpack.c.0.s8 %v4290
        %v4292 = vlaneseq
        %v4293 = vshrl.u32 %v4292, 7
        %v4294 = vsub.s32 %v4291, %v4293
        %v4295 = vrot.slane %v4287, %v4294
        %v4297 = vunpack.c.l.s4 1983009808
        %v4298 = vunpack.c.0.s8 %v4297
        %v4299 = vlaneseq
        %v4300 = vshrl.u32 %v4299, 7
        %v4301 = vsub.s32 %v4298, %v4300
        %v4302 = vrot.slane %v4288, %v4301
        %v4303 = vcombine.low %v4280, %v4282
        %v4304 = vcombine.high %v4280, %v4282
        %v4306 = vunpack.c.l.s4 1983009808
        %v4307 = vunpack.c.0.s8 %v4306
        %v4308 = vlaneseq
        %v4309 = vshrl.u32 %v4308, 7
        %v4310 = vsub.s32 %v4307, %v4309
        %v4311 = vrot.slane %v4303, %v4310
        %v4313 = vunpack.c.l.s4 1983009808
        %v4314 = vunpack.c.0.s8 %v4313
        %v4315 = vlaneseq
        %v4316 = vshrl.u32 %v4315, 7
        %v4317 = vsub.s32 %v4314, %v4316
        %v4318 = vrot.slane %v4304, %v4317
        %v4319 = vcombine.low %v4283, %v4285
        %v4320 = vcombine.high %v4283, %v4285
        %v4322 = vunpack.c.l.s4 1983009808
        %v4323 = vunpack.c.0.s8 %v4322
        %v4324 = vlaneseq
        %v4325 = vshrl.u32 %v4324, 7
        %v4326 = vsub.s32 %v4323, %v4325
        %v4327 = vrot.slane %v4319, %v4326
        %v4329 = vunpack.c.l.s4 1983009808
        %v4330 = vunpack.c.0.s8 %v4329
        %v4331 = vlaneseq
        %v4332 = vshrl.u32 %v4331, 7
        %v4333 = vsub.s32 %v4330, %v4332
        %v4334 = vrot.slane %v4320, %v4333
        %v4335 = vcombine.low %v4284, %v4286
        %v4336 = vcombine.high %v4284, %v4286
        %v4338 = vunpack.c.l.s4 1983009808
        %v4339 = vunpack.c.0.s8 %v4338
        %v4340 = vlaneseq
        %v4341 = vshrl.u32 %v4340, 7
        %v4342 = vsub.s32 %v4339, %v4341
        %v4343 = vrot.slane %v4335, %v4342
        %v4345 = vunpack.c.l.s4 1983009808
        %v4346 = vunpack.c.0.s8 %v4345
        %v4347 = vlaneseq
        %v4348 = vshrl.u32 %v4347, 7
        %v4349 = vsub.s32 %v4346, %v4348
        %v4350 = vrot.slane %v4336, %v4349
        %v4351 = vcombine.low %v4295, %v4311
        %v4352 = vcombine.high %v4295, %v4311
        %v4354 = vunpack.c.l.s4 1934713408
        %v4355 = vunpack.c.0.s8 %v4354
        %v4356 = vlaneseq
        %v4357 = vshrl.u32 %v4356, 7
        %v4358 = vsub.s32 %v4355, %v4357
        %v4359 = vrot.slane %v4351, %v4358
        %v4361 = vunpack.c.l.s4 1934713408
        %v4362 = vunpack.c.0.s8 %v4361
        %v4363 = vlaneseq
        %v4364 = vshrl.u32 %v4363, 7
        %v4365 = vsub.s32 %v4362, %v4364
        %v4366 = vrot.slane %v4352, %v4365
        %v4367 = vcombine.low %v4302, %v4318
        %v4368 = vcombine.high %v4302, %v4318
        %v4370 = vunpack.c.l.s4 1934713408
        %v4371 = vunpack.c.0.s8 %v4370
        %v4372 = vlaneseq
        %v4373 = vshrl.u32 %v4372, 7
        %v4374 = vsub.s32 %v4371, %v4373
        %v4375 = vrot.slane %v4367, %v4374
        %v4377 = vunpack.c.l.s4 1934713408
        %v4378 = vunpack.c.0.s8 %v4377
        %v4379 = vlaneseq
        %v4380 = vshrl.u32 %v4379, 7
        %v4381 = vsub.s32 %v4378, %v4380
        %v4382 = vrot.slane %v4368, %v4381
        %v4383 = vcombine.low %v4327, %v4343
        %v4384 = vcombine.high %v4327, %v4343
        %v4386 = vunpack.c.l.s4 1934713408
        %v4387 = vunpack.c.0.s8 %v4386
        %v4388 = vlaneseq
        %v4389 = vshrl.u32 %v4388, 7
        %v4390 = vsub.s32 %v4387, %v4389
        %v4391 = vrot.slane %v4383, %v4390
        %v4393 = vunpack.c.l.s4 1934713408
        %v4394 = vunpack.c.0.s8 %v4393
        %v4395 = vlaneseq
        %v4396 = vshrl.u32 %v4395, 7
        %v4397 = vsub.s32 %v4394, %v4396
        %v4398 = vrot.slane %v4384, %v4397
        %v4399 = vcombine.low %v4334, %v4350
        %v4400 = vcombine.high %v4334, %v4350
        %v4402 = vunpack.c.l.s4 1934713408
        %v4403 = vunpack.c.0.s8 %v4402
        %v4404 = vlaneseq
        %v4405 = vshrl.u32 %v4404, 7
        %v4406 = vsub.s32 %v4403, %v4405
        %v4407 = vrot.slane %v4399, %v4406
        %v4409 = vunpack.c.l.s4 1934713408
        %v4410 = vunpack.c.0.s8 %v4409
        %v4411 = vlaneseq
        %v4412 = vshrl.u32 %v4411, 7
        %v4413 = vsub.s32 %v4410, %v4412
        %v4414 = vrot.slane %v4400, %v4413
        %v4415 = vcombine.low %v4359, %v4391
        %v4416 = vcombine.high %v4359, %v4391
        %v4417 = vcombine.low %v4366, %v4398
        %v4418 = vcombine.high %v4366, %v4398
        %v4419 = vcombine.low %v4375, %v4407
        %v4420 = vcombine.high %v4375, %v4407
        %v4421 = vcombine.low %v4382, %v4414
        %v4422 = vcombine.high %v4382, %v4414
        %4424 = vrot.lane.b32.xlu0 %v4416, 64
        %v4425 = vpop.permute.xlu0 %4424
        %4428 = vrot.lane.b32.xlu0 %v4418, 64
        %v4429 = vpop.permute.xlu0 %4428
        %4432 = vrot.lane.b32.xlu0 %v4420, 64
        %v4433 = vpop.permute.xlu0 %4432
        %4436 = vrot.lane.b32.xlu0 %v4422, 64
        %v4437 = vpop.permute.xlu0 %4436
        %v4439 = vsel %vm1909, %v4415, %v4425
        %v4440 = vsel %vm1909, %v4417, %v4429
        %v4441 = vsel %vm1909, %v4419, %v4433
        %v4442 = vsel %vm1909, %v4421, %v4437
        %v4443 = vpack.c.bf16 %v4439, %v4439
        %v4444 = vpack.c.bf16 %v4440, %v4440
        %v4445 = vpack.c.bf16 %v4441, %v4441
        %v4446 = vpack.c.bf16 %v4442, %v4442
        %v4447 = vld [vmem:[%s623] sm:$0xf]
        %v4448 = vld [vmem:[%s623 + $0x4] sm:$0xf]
        %v4449 = vld [vmem:[%s623 + $0x8] sm:$0xf]
        %v4450 = vld [vmem:[%s623 + $0xc] sm:$0xf]
        %v4451 = vld [vmem:[%s623 + $0x10] sm:$0xf]
        %v4452 = vld [vmem:[%s623 + $0x14] sm:$0xf]
        %v4453 = vld [vmem:[%s623 + $0x18] sm:$0xf]
        %v4454 = vld [vmem:[%s623 + $0x1c] sm:$0xf]
        %v4455 = vld [vmem:[%s623 + $0x20] sm:$0xf]
        %v4456 = vld [vmem:[%s623 + $0x24] sm:$0xf]
        %v4457 = vld [vmem:[%s623 + $0x28] sm:$0xf]
        %v4458 = vld [vmem:[%s623 + $0x2c] sm:$0xf]
        %v4459 = vld [vmem:[%s623 + $0x30] sm:$0xf]
        %v4460 = vld [vmem:[%s623 + $0x34] sm:$0xf]
        %v4461 = vld [vmem:[%s623 + $0x38] sm:$0xf]
        %v4462 = vld [vmem:[%s623 + $0x3c] sm:$0xf]
        %v4463 = vld [vmem:[%s623 + $0x40] sm:$0xf]
        %v4464 = vld [vmem:[%s623 + $0x44] sm:$0xf]
        %v4465 = vld [vmem:[%s623 + $0x48] sm:$0xf]
        %v4466 = vld [vmem:[%s623 + $0x4c] sm:$0xf]
        %v4467 = vld [vmem:[%s623 + $0x50] sm:$0xf]
        %v4468 = vld [vmem:[%s623 + $0x54] sm:$0xf]
        %v4469 = vld [vmem:[%s623 + $0x58] sm:$0xf]
        %v4470 = vld [vmem:[%s623 + $0x5c] sm:$0xf]
        %v4471 = vld [vmem:[%s623 + $0x60] sm:$0xf]
        %v4472 = vld [vmem:[%s623 + $0x64] sm:$0xf]
        %v4473 = vld [vmem:[%s623 + $0x68] sm:$0xf]
        %v4474 = vld [vmem:[%s623 + $0x6c] sm:$0xf]
        %v4475 = vld [vmem:[%s623 + $0x70] sm:$0xf]
        %v4476 = vld [vmem:[%s623 + $0x74] sm:$0xf]
        %v4477 = vld [vmem:[%s623 + $0x78] sm:$0xf]
        %v4478 = vld [vmem:[%s623 + $0x7c] sm:$0xf]
        %v4479 = vld [vmem:[%s623 + $0x80] sm:$0xf]
        %v4480 = vld [vmem:[%s623 + $0x84] sm:$0xf]
        %v4481 = vld [vmem:[%s623 + $0x88] sm:$0xf]
        %v4482 = vld [vmem:[%s623 + $0x8c] sm:$0xf]
        %v4483 = vld [vmem:[%s623 + $0x90] sm:$0xf]
        %v4484 = vld [vmem:[%s623 + $0x94] sm:$0xf]
        %v4485 = vld [vmem:[%s623 + $0x98] sm:$0xf]
        %v4486 = vld [vmem:[%s623 + $0x9c] sm:$0xf]
        %v4487 = vld [vmem:[%s623 + $0xa0] sm:$0xf]
        %v4488 = vld [vmem:[%s623 + $0xa4] sm:$0xf]
        %v4489 = vld [vmem:[%s623 + $0xa8] sm:$0xf]
        %v4490 = vld [vmem:[%s623 + $0xac] sm:$0xf]
        %v4491 = vld [vmem:[%s623 + $0xb0] sm:$0xf]
        %v4492 = vld [vmem:[%s623 + $0xb4] sm:$0xf]
        %v4493 = vld [vmem:[%s623 + $0xb8] sm:$0xf]
        %v4494 = vld [vmem:[%s623 + $0xbc] sm:$0xf]
        %v4495 = vld [vmem:[%s623 + $0xc0] sm:$0xf]
        %v4496 = vld [vmem:[%s623 + $0xc4] sm:$0xf]
        %v4497 = vld [vmem:[%s623 + $0xc8] sm:$0xf]
        %v4498 = vld [vmem:[%s623 + $0xcc] sm:$0xf]
        %v4499 = vld [vmem:[%s623 + $0xd0] sm:$0xf]
        %v4500 = vld [vmem:[%s623 + $0xd4] sm:$0xf]
        %v4501 = vld [vmem:[%s623 + $0xd8] sm:$0xf]
        %v4502 = vld [vmem:[%s623 + $0xdc] sm:$0xf]
        %v4503 = vld [vmem:[%s623 + $0xe0] sm:$0xf]
        %v4504 = vld [vmem:[%s623 + $0xe4] sm:$0xf]
        %v4505 = vld [vmem:[%s623 + $0xe8] sm:$0xf]
        %v4506 = vld [vmem:[%s623 + $0xec] sm:$0xf]
        %v4507 = vld [vmem:[%s623 + $0xf0] sm:$0xf]
        %v4508 = vld [vmem:[%s623 + $0xf4] sm:$0xf]
        %v4509 = vld [vmem:[%s623 + $0xf8] sm:$0xf]
        %v4510 = vld [vmem:[%s623 + $0xfc] sm:$0xf]
        %v4511 = vld [vmem:[%s736] sm:$0x1]
        %v4513 = vlaneseq
        %v4514 = vshrl.u32 %v4513, 7
        %v4515 = vsub.s32 0, %v4514
        %v4516 = vrot.slane %v4511, %v4515
        %v4582 = vunpack.c.l.b16 %v4447
        %v4583 = vunpack.c.l.b16 %v4448
        %v4584 = vunpack.c.l.b16 %v4449
        %v4585 = vunpack.c.l.b16 %v4450
        %v4586 = vunpack.c.l.b16 %v4451
        %v4587 = vunpack.c.l.b16 %v4452
        %v4588 = vunpack.c.l.b16 %v4453
        %v4589 = vunpack.c.l.b16 %v4454
        %v4590 = vunpack.c.l.b16 %v4455
        %v4591 = vunpack.c.l.b16 %v4456
        %v4592 = vunpack.c.l.b16 %v4457
        %v4593 = vunpack.c.l.b16 %v4458
        %v4594 = vunpack.c.l.b16 %v4459
        %v4595 = vunpack.c.l.b16 %v4460
        %v4596 = vunpack.c.l.b16 %v4461
        %v4597 = vunpack.c.l.b16 %v4462
        %v4598 = vunpack.c.l.b16 %v4463
        %v4599 = vunpack.c.l.b16 %v4464
        %v4600 = vunpack.c.l.b16 %v4465
        %v4601 = vunpack.c.l.b16 %v4466
        %v4602 = vunpack.c.l.b16 %v4467
        %v4603 = vunpack.c.l.b16 %v4468
        %v4604 = vunpack.c.l.b16 %v4469
        %v4605 = vunpack.c.l.b16 %v4470
        %v4606 = vunpack.c.l.b16 %v4471
        %v4607 = vunpack.c.l.b16 %v4472
        %v4608 = vunpack.c.l.b16 %v4473
        %v4609 = vunpack.c.l.b16 %v4474
        %v4610 = vunpack.c.l.b16 %v4475
        %v4611 = vunpack.c.l.b16 %v4476
        %v4612 = vunpack.c.l.b16 %v4477
        %v4613 = vunpack.c.l.b16 %v4478
        %v4614 = vunpack.c.l.b16 %v4479
        %v4615 = vunpack.c.l.b16 %v4480
        %v4616 = vunpack.c.l.b16 %v4481
        %v4617 = vunpack.c.l.b16 %v4482
        %v4618 = vunpack.c.l.b16 %v4483
        %v4619 = vunpack.c.l.b16 %v4484
        %v4620 = vunpack.c.l.b16 %v4485
        %v4621 = vunpack.c.l.b16 %v4486
        %v4622 = vunpack.c.l.b16 %v4487
        %v4623 = vunpack.c.l.b16 %v4488
        %v4624 = vunpack.c.l.b16 %v4489
        %v4625 = vunpack.c.l.b16 %v4490
        %v4626 = vunpack.c.l.b16 %v4491
        %v4627 = vunpack.c.l.b16 %v4492
        %v4628 = vunpack.c.l.b16 %v4493
        %v4629 = vunpack.c.l.b16 %v4494
        %v4630 = vunpack.c.l.b16 %v4495
        %v4631 = vunpack.c.l.b16 %v4496
        %v4632 = vunpack.c.l.b16 %v4497
        %v4633 = vunpack.c.l.b16 %v4498
        %v4634 = vunpack.c.l.b16 %v4499
        %v4635 = vunpack.c.l.b16 %v4500
        %v4636 = vunpack.c.l.b16 %v4501
        %v4637 = vunpack.c.l.b16 %v4502
        %v4638 = vunpack.c.l.b16 %v4503
        %v4639 = vunpack.c.l.b16 %v4504
        %v4640 = vunpack.c.l.b16 %v4505
        %v4641 = vunpack.c.l.b16 %v4506
        %v4642 = vunpack.c.l.b16 %v4507
        %v4643 = vunpack.c.l.b16 %v4508
        %v4644 = vunpack.c.l.b16 %v4509
        %v4645 = vunpack.c.l.b16 %v4510
        %v4646 = vpack.c.b16 %v4583, %v4582
        %v4647 = vpack.c.b16 %v4585, %v4584
        %v4648 = vpack.c.b16 %v4587, %v4586
        %v4649 = vpack.c.b16 %v4589, %v4588
        %v4650 = vpack.c.b16 %v4591, %v4590
        %v4651 = vpack.c.b16 %v4593, %v4592
        %v4652 = vpack.c.b16 %v4595, %v4594
        %v4653 = vpack.c.b16 %v4597, %v4596
        %v4654 = vpack.c.b16 %v4599, %v4598
        %v4655 = vpack.c.b16 %v4601, %v4600
        %v4656 = vpack.c.b16 %v4603, %v4602
        %v4657 = vpack.c.b16 %v4605, %v4604
        %v4658 = vpack.c.b16 %v4607, %v4606
        %v4659 = vpack.c.b16 %v4609, %v4608
        %v4660 = vpack.c.b16 %v4611, %v4610
        %v4661 = vpack.c.b16 %v4613, %v4612
        %v4662 = vpack.c.b16 %v4615, %v4614
        %v4663 = vpack.c.b16 %v4617, %v4616
        %v4664 = vpack.c.b16 %v4619, %v4618
        %v4665 = vpack.c.b16 %v4621, %v4620
        %v4666 = vpack.c.b16 %v4623, %v4622
        %v4667 = vpack.c.b16 %v4625, %v4624
        %v4668 = vpack.c.b16 %v4627, %v4626
        %v4669 = vpack.c.b16 %v4629, %v4628
        %v4670 = vpack.c.b16 %v4631, %v4630
        %v4671 = vpack.c.b16 %v4633, %v4632
        %v4672 = vpack.c.b16 %v4635, %v4634
        %v4673 = vpack.c.b16 %v4637, %v4636
        %v4674 = vpack.c.b16 %v4639, %v4638
        %v4675 = vpack.c.b16 %v4641, %v4640
        %v4676 = vpack.c.b16 %v4643, %v4642
        %v4677 = vpack.c.b16 %v4645, %v4644
        %4710 = vmatprep.subr.bf16.mxu0 0
        %4711 = vmatpush1.bf16.msra.mxu0 %v4646
        %4712 = vmatprep.subr.bf16.mxu0 0
        %4713 = vmatpush1.bf16.msra.mxu0 %v4647
        %4714 = vmatprep.subr.bf16.mxu0 0
        %4715 = vmatpush1.bf16.msra.mxu0 %v4648
        %4716 = vmatprep.subr.bf16.mxu0 0
        %4717 = vmatpush1.bf16.msra.mxu0 %v4649
        %4718 = vmatprep.subr.bf16.mxu0 0
        %4719 = vmatpush1.bf16.msra.mxu0 %v4650
        %4720 = vmatprep.subr.bf16.mxu0 0
        %4721 = vmatpush1.bf16.msra.mxu0 %v4651
        %4722 = vmatprep.subr.bf16.mxu0 0
        %4723 = vmatpush1.bf16.msra.mxu0 %v4652
        %4724 = vmatprep.subr.bf16.mxu0 0
        %4725 = vmatpush1.bf16.msra.mxu0 %v4653
        %4726 = vmatprep.subr.bf16.mxu0 0
        %4727 = vmatpush1.bf16.msra.mxu0 %v4654
        %4728 = vmatprep.subr.bf16.mxu0 0
        %4729 = vmatpush1.bf16.msra.mxu0 %v4655
        %4730 = vmatprep.subr.bf16.mxu0 0
        %4731 = vmatpush1.bf16.msra.mxu0 %v4656
        %4732 = vmatprep.subr.bf16.mxu0 0
        %4733 = vmatpush1.bf16.msra.mxu0 %v4657
        %4734 = vmatprep.subr.bf16.mxu0 0
        %4735 = vmatpush1.bf16.msra.mxu0 %v4658
        %4736 = vmatprep.subr.bf16.mxu0 0
        %4737 = vmatpush1.bf16.msra.mxu0 %v4659
        %4738 = vmatprep.subr.bf16.mxu0 0
        %4739 = vmatpush1.bf16.msra.mxu0 %v4660
        %4740 = vmatprep.subr.bf16.mxu0 0
        %4741 = vmatpush1.bf16.msra.mxu0 %v4661
        %4742 = vmatprep.mubr.bf16.mxu0 %v4444
        %4743 = vmatmul.mubr.bf16.gmra.mrb[0].mxu0 %v4443
        %v4744 = vpop.f32.mrb[0].mxu0
        %v4745 = vadd.f32 %v4516, %v4744
        %v4746 = vpop.f32.mrb[0].mxu0
        %v4747 = vpop.f32.mrb[0].mxu0
        %v4748 = vpop.f32.mrb[0].mxu0
        %4749 = vdwg.mxu0
        %4750 = vmatprep.subr.bf16.mxu0 0
        %4751 = vmatpush1.bf16.msra.mxu0 %v4662
        %4752 = vmatprep.subr.bf16.mxu0 0
        %4753 = vmatpush1.bf16.msra.mxu0 %v4663
        %4754 = vmatprep.subr.bf16.mxu0 0
        %4755 = vmatpush1.bf16.msra.mxu0 %v4664
        %4756 = vmatprep.subr.bf16.mxu0 0
        %4757 = vmatpush1.bf16.msra.mxu0 %v4665
        %4758 = vmatprep.subr.bf16.mxu0 0
        %4759 = vmatpush1.bf16.msra.mxu0 %v4666
        %4760 = vmatprep.subr.bf16.mxu0 0
        %4761 = vmatpush1.bf16.msra.mxu0 %v4667
        %4762 = vmatprep.subr.bf16.mxu0 0
        %4763 = vmatpush1.bf16.msra.mxu0 %v4668
        %4764 = vmatprep.subr.bf16.mxu0 0
        %4765 = vmatpush1.bf16.msra.mxu0 %v4669
        %4766 = vmatprep.subr.bf16.mxu0 0
        %4767 = vmatpush1.bf16.msra.mxu0 %v4670
        %4768 = vmatprep.subr.bf16.mxu0 0
        %4769 = vmatpush1.bf16.msra.mxu0 %v4671
        %4770 = vmatprep.subr.bf16.mxu0 0
        %4771 = vmatpush1.bf16.msra.mxu0 %v4672
        %4772 = vmatprep.subr.bf16.mxu0 0
        %4773 = vmatpush1.bf16.msra.mxu0 %v4673
        %4774 = vmatprep.subr.bf16.mxu0 0
        %4775 = vmatpush1.bf16.msra.mxu0 %v4674
        %4776 = vmatprep.subr.bf16.mxu0 0
        %4777 = vmatpush1.bf16.msra.mxu0 %v4675
        %4778 = vmatprep.subr.bf16.mxu0 0
        %4779 = vmatpush1.bf16.msra.mxu0 %v4676
        %4780 = vmatprep.subr.bf16.mxu0 0
        %4781 = vmatpush1.bf16.msra.mxu0 %v4677
        %4782 = vmatprep.mubr.bf16.mxu0 %v4446
        %4783 = vmatmul.mubr.bf16.gmra.mrb[0].mxu0 %v4445
        %v4784 = vpop.f32.mrb[0].mxu0
        %v4785 = vadd.f32 %v4745, %v4784
        %v4786 = vpop.f32.mrb[0].mxu0
        %v4787 = vpop.f32.mrb[0].mxu0
        %v4788 = vpop.f32.mrb[0].mxu0
        %4789 = vdwg.mxu0
        %v4790 = vadd.f32 %v757, %v4785
        %v4791 = vld [vmem:[%s739] sm:$0x1]
        %v4792 = vld [vmem:[%s742] sm:$0x1]
        %4793 = vadd.xlane.f32.xlu0 %v4790
        %v4794 = vpop.xlane.xlu0 %4793
        %v4795 = vmul.f32 %v4794, %v762
        %v4796 = vsub.f32 %v4790, %v4795
        %v4797 = vmul.f32 %v4796, %v4796
        %4798 = vadd.xlane.f32.xlu0 %v4797
        %v4799 = vpop.xlane.xlu0 %4798
        %v4800 = vmul.f32 %v4799, %v762
        %v4801 = vadd.f32 %v4800, 1e-05
        %v4802 = vrsqrt.pop %v4801
        %v4803 = vmul.f32 %v4796, %v4802
        %v4805 = vlaneseq
        %v4806 = vshrl.u32 %v4805, 7
        %v4807 = vsub.s32 0, %v4806
        %v4808 = vrot.slane %v4791, %v4807
        %v4810 = vmul.f32 %v4803, %v4808
        %v4812 = vlaneseq
        %v4813 = vshrl.u32 %v4812, 7
        %v4814 = vsub.s32 0, %v4813
        %v4815 = vrot.slane %v4792, %v4814
        %v4817 = vadd.f32 %v4810, %v4815
        %v4818 = vpack.c.bf16 %v4817, %v4817
        %v4819 = vld [vmem:[%s632] sm:$0xff]
        %v4820 = vld [vmem:[%s632 + $0x8] sm:$0xff]
        %v4821 = vld [vmem:[%s632 + $0x10] sm:$0xff]
        %v4822 = vld [vmem:[%s632 + $0x18] sm:$0xff]
        %v4823 = vld [vmem:[%s632 + $0x20] sm:$0xff]
        %v4824 = vld [vmem:[%s632 + $0x28] sm:$0xff]
        %v4825 = vld [vmem:[%s632 + $0x30] sm:$0xff]
        %v4826 = vld [vmem:[%s632 + $0x38] sm:$0xff]
        %v4827 = vld [vmem:[%s632 + $0x40] sm:$0xff]
        %v4828 = vld [vmem:[%s632 + $0x48] sm:$0xff]
        %v4829 = vld [vmem:[%s632 + $0x50] sm:$0xff]
        %v4830 = vld [vmem:[%s632 + $0x58] sm:$0xff]
        %v4831 = vld [vmem:[%s632 + $0x60] sm:$0xff]
        %v4832 = vld [vmem:[%s632 + $0x68] sm:$0xff]
        %v4833 = vld [vmem:[%s632 + $0x70] sm:$0xff]
        %v4834 = vld [vmem:[%s632 + $0x78] sm:$0xff]
        %v4835 = vld [vmem:[%s632 + $0x80] sm:$0xff]
        %v4836 = vld [vmem:[%s632 + $0x88] sm:$0xff]
        %v4837 = vld [vmem:[%s632 + $0x90] sm:$0xff]
        %v4838 = vld [vmem:[%s632 + $0x98] sm:$0xff]
        %v4839 = vld [vmem:[%s632 + $0xa0] sm:$0xff]
        %v4840 = vld [vmem:[%s632 + $0xa8] sm:$0xff]
        %v4841 = vld [vmem:[%s632 + $0xb0] sm:$0xff]
        %v4842 = vld [vmem:[%s632 + $0xb8] sm:$0xff]
        %v4843 = vld [vmem:[%s632 + $0xc0] sm:$0xff]
        %v4844 = vld [vmem:[%s632 + $0xc8] sm:$0xff]
        %v4845 = vld [vmem:[%s632 + $0xd0] sm:$0xff]
        %v4846 = vld [vmem:[%s632 + $0xd8] sm:$0xff]
        %v4847 = vld [vmem:[%s632 + $0xe0] sm:$0xff]
        %v4848 = vld [vmem:[%s632 + $0xe8] sm:$0xff]
        %v4849 = vld [vmem:[%s632 + $0xf0] sm:$0xff]
        %v4850 = vld [vmem:[%s632 + $0xf8] sm:$0xff]
        %v4851 = vld [vmem:[%s746] sm:$0xf]
        %v4853 = vlaneseq
        %v4854 = vshrl.u32 %v4853, 7
        %v4855 = vsub.s32 0, %v4854
        %v4856 = vrot.slane %v4851, %v4855
        %v4857 = vlaneseq
        %v4858 = vshrl.u32 %v4857, 7
        %v4859 = vsub.s32 1, %v4858
        %v4860 = vrot.slane %v4851, %v4859
        %v4861 = vlaneseq
        %v4862 = vshrl.u32 %v4861, 7
        %v4863 = vsub.s32 2, %v4862
        %v4864 = vrot.slane %v4851, %v4863
        %v4865 = vlaneseq
        %v4866 = vshrl.u32 %v4865, 7
        %v4867 = vsub.s32 3, %v4866
        %v4868 = vrot.slane %v4851, %v4867
        %v4905 = vunpack.c.l.b16 %v4819
        %v4906 = vunpack.c.h.b16 %v4819
        %v4907 = vunpack.c.l.b16 %v4820
        %v4908 = vunpack.c.h.b16 %v4820
        %v4909 = vunpack.c.l.b16 %v4821
        %v4910 = vunpack.c.h.b16 %v4821
        %v4911 = vunpack.c.l.b16 %v4822
        %v4912 = vunpack.c.h.b16 %v4822
        %v4913 = vunpack.c.l.b16 %v4823
        %v4914 = vunpack.c.h.b16 %v4823
        %v4915 = vunpack.c.l.b16 %v4824
        %v4916 = vunpack.c.h.b16 %v4824
        %v4917 = vunpack.c.l.b16 %v4825
        %v4918 = vunpack.c.h.b16 %v4825
        %v4919 = vunpack.c.l.b16 %v4826
        %v4920 = vunpack.c.h.b16 %v4826
        %v4921 = vunpack.c.l.b16 %v4827
        %v4922 = vunpack.c.h.b16 %v4827
        %v4923 = vunpack.c.l.b16 %v4828
        %v4924 = vunpack.c.h.b16 %v4828
        %v4925 = vunpack.c.l.b16 %v4829
        %v4926 = vunpack.c.h.b16 %v4829
        %v4927 = vunpack.c.l.b16 %v4830
        %v4928 = vunpack.c.h.b16 %v4830
        %v4929 = vunpack.c.l.b16 %v4831
        %v4930 = vunpack.c.h.b16 %v4831
        %v4931 = vunpack.c.l.b16 %v4832
        %v4932 = vunpack.c.h.b16 %v4832
        %v4933 = vunpack.c.l.b16 %v4833
        %v4934 = vunpack.c.h.b16 %v4833
        %v4935 = vunpack.c.l.b16 %v4834
        %v4936 = vunpack.c.h.b16 %v4834
        %v4937 = vunpack.c.l.b16 %v4835
        %v4938 = vunpack.c.h.b16 %v4835
        %v4939 = vunpack.c.l.b16 %v4836
        %v4940 = vunpack.c.h.b16 %v4836
        %v4941 = vunpack.c.l.b16 %v4837
        %v4942 = vunpack.c.h.b16 %v4837
        %v4943 = vunpack.c.l.b16 %v4838
        %v4944 = vunpack.c.h.b16 %v4838
        %v4945 = vunpack.c.l.b16 %v4839
        %v4946 = vunpack.c.h.b16 %v4839
        %v4947 = vunpack.c.l.b16 %v4840
        %v4948 = vunpack.c.h.b16 %v4840
        %v4949 = vunpack.c.l.b16 %v4841
        %v4950 = vunpack.c.h.b16 %v4841
        %v4951 = vunpack.c.l.b16 %v4842
        %v4952 = vunpack.c.h.b16 %v4842
        %v4953 = vunpack.c.l.b16 %v4843
        %v4954 = vunpack.c.h.b16 %v4843
        %v4955 = vunpack.c.l.b16 %v4844
        %v4956 = vunpack.c.h.b16 %v4844
        %v4957 = vunpack.c.l.b16 %v4845
        %v4958 = vunpack.c.h.b16 %v4845
        %v4959 = vunpack.c.l.b16 %v4846
        %v4960 = vunpack.c.h.b16 %v4846
        %v4961 = vunpack.c.l.b16 %v4847
        %v4962 = vunpack.c.h.b16 %v4847
        %v4963 = vunpack.c.l.b16 %v4848
        %v4964 = vunpack.c.h.b16 %v4848
        %v4965 = vunpack.c.l.b16 %v4849
        %v4966 = vunpack.c.h.b16 %v4849
        %v4967 = vunpack.c.l.b16 %v4850
        %v4968 = vunpack.c.h.b16 %v4850
        %v4969 = vpack.c.b16 %v4909, %v4905
        %v4970 = vpack.c.b16 %v4910, %v4906
        %v4971 = vpack.c.b16 %v4911, %v4907
        %v4972 = vpack.c.b16 %v4912, %v4908
        %v4973 = vpack.c.b16 %v4917, %v4913
        %v4974 = vpack.c.b16 %v4918, %v4914
        %v4975 = vpack.c.b16 %v4919, %v4915
        %v4976 = vpack.c.b16 %v4920, %v4916
        %v4977 = vpack.c.b16 %v4925, %v4921
        %v4978 = vpack.c.b16 %v4926, %v4922
        %v4979 = vpack.c.b16 %v4927, %v4923
        %v4980 = vpack.c.b16 %v4928, %v4924
        %v4981 = vpack.c.b16 %v4933, %v4929
        %v4982 = vpack.c.b16 %v4934, %v4930
        %v4983 = vpack.c.b16 %v4935, %v4931
        %v4984 = vpack.c.b16 %v4936, %v4932
        %v4985 = vpack.c.b16 %v4941, %v4937
        %v4986 = vpack.c.b16 %v4942, %v4938
        %v4987 = vpack.c.b16 %v4943, %v4939
        %v4988 = vpack.c.b16 %v4944, %v4940
        %v4989 = vpack.c.b16 %v4949, %v4945
        %v4990 = vpack.c.b16 %v4950, %v4946
        %v4991 = vpack.c.b16 %v4951, %v4947
        %v4992 = vpack.c.b16 %v4952, %v4948
        %v4993 = vpack.c.b16 %v4957, %v4953
        %v4994 = vpack.c.b16 %v4958, %v4954
        %v4995 = vpack.c.b16 %v4959, %v4955
        %v4996 = vpack.c.b16 %v4960, %v4956
        %v4997 = vpack.c.b16 %v4965, %v4961
        %v4998 = vpack.c.b16 %v4966, %v4962
        %v4999 = vpack.c.b16 %v4967, %v4963
        %v5000 = vpack.c.b16 %v4968, %v4964
        %5033 = vmatprep.subr.bf16.mxu0 %v4970
        %5034 = vmatpush1.bf16.msra.mxu0 %v4969
        %5035 = vmatprep.subr.bf16.mxu0 %v4974
        %5036 = vmatpush1.bf16.msra.mxu0 %v4973
        %5037 = vmatprep.subr.bf16.mxu0 %v4978
        %5038 = vmatpush1.bf16.msra.mxu0 %v4977
        %5039 = vmatprep.subr.bf16.mxu0 %v4982
        %5040 = vmatpush1.bf16.msra.mxu0 %v4981
        %5041 = vmatprep.subr.bf16.mxu0 %v4986
        %5042 = vmatpush1.bf16.msra.mxu0 %v4985
        %5043 = vmatprep.subr.bf16.mxu0 %v4990
        %5044 = vmatpush1.bf16.msra.mxu0 %v4989
        %5045 = vmatprep.subr.bf16.mxu0 %v4994
        %5046 = vmatpush1.bf16.msra.mxu0 %v4993
        %5047 = vmatprep.subr.bf16.mxu0 %v4998
        %5048 = vmatpush1.bf16.msra.mxu0 %v4997
        %5049 = vmatprep.subr.bf16.mxu0 0
        %5050 = vmatpush1.bf16.msra.mxu0 0
        %5051 = vmatprep.subr.bf16.mxu0 0
        %5052 = vmatpush1.bf16.msra.mxu0 0
        %5053 = vmatprep.subr.bf16.mxu0 0
        %5054 = vmatpush1.bf16.msra.mxu0 0
        %5055 = vmatprep.subr.bf16.mxu0 0
        %5056 = vmatpush1.bf16.msra.mxu0 0
        %5057 = vmatprep.subr.bf16.mxu0 0
        %5058 = vmatpush1.bf16.msra.mxu0 0
        %5059 = vmatprep.subr.bf16.mxu0 0
        %5060 = vmatpush1.bf16.msra.mxu0 0
        %5061 = vmatprep.subr.bf16.mxu0 0
        %5062 = vmatpush1.bf16.msra.mxu0 0
        %5063 = vmatprep.subr.bf16.mxu0 0
        %5064 = vmatpush1.bf16.msra.mxu0 0
        %5065 = vmatprep.mubr.bf16.mxu0 0
        %5066 = vmatmul.mubr.bf16.gmra.mrb[0].mxu0 %v4818
        %v5067 = vpop.f32.mrb[0].mxu0
        %v5068 = vadd.f32 %v4856, %v5067
        %v5069 = vpop.f32.mrb[0].mxu0
        %v5070 = vadd.f32 %v4860, %v5069
        %v5071 = vpop.f32.mrb[0].mxu0
        %v5072 = vpop.f32.mrb[0].mxu0
        %5073 = vdwg.mxu0
        %5074 = vmatprep.subr.bf16.mxu0 %v4972
        %5075 = vmatpush1.bf16.msra.mxu0 %v4971
        %5076 = vmatprep.subr.bf16.mxu0 %v4976
        %5077 = vmatpush1.bf16.msra.mxu0 %v4975
        %5078 = vmatprep.subr.bf16.mxu0 %v4980
        %5079 = vmatpush1.bf16.msra.mxu0 %v4979
        %5080 = vmatprep.subr.bf16.mxu0 %v4984
        %5081 = vmatpush1.bf16.msra.mxu0 %v4983
        %5082 = vmatprep.subr.bf16.mxu0 %v4988
        %5083 = vmatpush1.bf16.msra.mxu0 %v4987
        %5084 = vmatprep.subr.bf16.mxu0 %v4992
        %5085 = vmatpush1.bf16.msra.mxu0 %v4991
        %5086 = vmatprep.subr.bf16.mxu0 %v4996
        %5087 = vmatpush1.bf16.msra.mxu0 %v4995
        %5088 = vmatprep.subr.bf16.mxu0 %v5000
        %5089 = vmatpush1.bf16.msra.mxu0 %v4999
        %5090 = vmatprep.subr.bf16.mxu0 0
        %5091 = vmatpush1.bf16.msra.mxu0 0
        %5092 = vmatprep.subr.bf16.mxu0 0
        %5093 = vmatpush1.bf16.msra.mxu0 0
        %5094 = vmatprep.subr.bf16.mxu0 0
        %5095 = vmatpush1.bf16.msra.mxu0 0
        %5096 = vmatprep.subr.bf16.mxu0 0
        %5097 = vmatpush1.bf16.msra.mxu0 0
        %5098 = vmatprep.subr.bf16.mxu0 0
        %5099 = vmatpush1.bf16.msra.mxu0 0
        %5100 = vmatprep.subr.bf16.mxu0 0
        %5101 = vmatpush1.bf16.msra.mxu0 0
        %5102 = vmatprep.subr.bf16.mxu0 0
        %5103 = vmatpush1.bf16.msra.mxu0 0
        %5104 = vmatprep.subr.bf16.mxu0 0
        %5105 = vmatpush1.bf16.msra.mxu0 0
        %5106 = vmatprep.mubr.bf16.mxu0 0
        %5107 = vmatmul.mubr.bf16.gmra.mrb[0].mxu0 %v4818
        %v5108 = vpop.f32.mrb[0].mxu0
        %v5109 = vadd.f32 %v4864, %v5108
        %v5110 = vpop.f32.mrb[0].mxu0
        %v5111 = vadd.f32 %v4868, %v5110
        %v5112 = vpop.f32.mrb[0].mxu0
        %v5113 = vpop.f32.mrb[0].mxu0
        %5114 = vdwg.mxu0
        %v5115 = vmul.f32 %v5068, %v5068
        %v5116 = vmul.f32 %v5070, %v5070
        %v5117 = vmul.f32 %v5109, %v5109
        %v5118 = vmul.f32 %v5111, %v5111
        %v5119 = vmul.f32 %v5068, %v5115
        %v5120 = vmul.f32 %v5070, %v5116
        %v5121 = vmul.f32 %v5109, %v5117
        %v5122 = vmul.f32 %v5111, %v5118
        %v5123 = vmul.f32 %v5119, 0.044715
        %v5124 = vmul.f32 %v5120, 0.044715
        %v5125 = vmul.f32 %v5121, 0.044715
        %v5126 = vmul.f32 %v5122, 0.044715
        %v5127 = vadd.f32 %v5068, %v5123
        %v5128 = vadd.f32 %v5070, %v5124
        %v5129 = vadd.f32 %v5109, %v5125
        %v5130 = vadd.f32 %v5111, %v5126
        %v5131 = vmul.f32 %v5127, 0.7978846
        %v5132 = vmul.f32 %v5128, 0.7978846
        %v5133 = vmul.f32 %v5129, 0.7978846
        %v5134 = vmul.f32 %v5130, 0.7978846
        %v5135 = vtanh.pop %v5131
        %v5136 = vtanh.pop %v5132
        %v5137 = vtanh.pop %v5133
        %v5138 = vtanh.pop %v5134
        %v5139 = vadd.f32 %v5135, 1.0
        %v5140 = vadd.f32 %v5136, 1.0
        %v5141 = vadd.f32 %v5137, 1.0
        %v5142 = vadd.f32 %v5138, 1.0
        %v5143 = vmul.f32 %v5139, 0.5
        %v5144 = vmul.f32 %v5140, 0.5
        %v5145 = vmul.f32 %v5141, 0.5
        %v5146 = vmul.f32 %v5142, 0.5
        %v5147 = vmul.f32 %v5068, %v5143
        %v5148 = vmul.f32 %v5070, %v5144
        %v5149 = vmul.f32 %v5109, %v5145
        %v5150 = vmul.f32 %v5111, %v5146
        %v5151 = vpack.c.bf16 %v5147, %v5147
        %v5152 = vpack.c.bf16 %v5148, %v5148
        %v5153 = vpack.c.bf16 %v5149, %v5149
        %v5154 = vpack.c.bf16 %v5150, %v5150
        %v5155 = vld [vmem:[%s641] sm:$0xf]
        %v5156 = vld [vmem:[%s641 + $0x4] sm:$0xf]
        %v5157 = vld [vmem:[%s641 + $0x8] sm:$0xf]
        %v5158 = vld [vmem:[%s641 + $0xc] sm:$0xf]
        %v5159 = vld [vmem:[%s641 + $0x10] sm:$0xf]
        %v5160 = vld [vmem:[%s641 + $0x14] sm:$0xf]
        %v5161 = vld [vmem:[%s641 + $0x18] sm:$0xf]
        %v5162 = vld [vmem:[%s641 + $0x1c] sm:$0xf]
        %v5163 = vld [vmem:[%s641 + $0x20] sm:$0xf]
        %v5164 = vld [vmem:[%s641 + $0x24] sm:$0xf]
        %v5165 = vld [vmem:[%s641 + $0x28] sm:$0xf]
        %v5166 = vld [vmem:[%s641 + $0x2c] sm:$0xf]
        %v5167 = vld [vmem:[%s641 + $0x30] sm:$0xf]
        %v5168 = vld [vmem:[%s641 + $0x34] sm:$0xf]
        %v5169 = vld [vmem:[%s641 + $0x38] sm:$0xf]
        %v5170 = vld [vmem:[%s641 + $0x3c] sm:$0xf]
        %v5171 = vld [vmem:[%s641 + $0x40] sm:$0xf]
        %v5172 = vld [vmem:[%s641 + $0x44] sm:$0xf]
        %v5173 = vld [vmem:[%s641 + $0x48] sm:$0xf]
        %v5174 = vld [vmem:[%s641 + $0x4c] sm:$0xf]
        %v5175 = vld [vmem:[%s641 + $0x50] sm:$0xf]
        %v5176 = vld [vmem:[%s641 + $0x54] sm:$0xf]
        %v5177 = vld [vmem:[%s641 + $0x58] sm:$0xf]
        %v5178 = vld [vmem:[%s641 + $0x5c] sm:$0xf]
        %v5179 = vld [vmem:[%s641 + $0x60] sm:$0xf]
        %v5180 = vld [vmem:[%s641 + $0x64] sm:$0xf]
        %v5181 = vld [vmem:[%s641 + $0x68] sm:$0xf]
        %v5182 = vld [vmem:[%s641 + $0x6c] sm:$0xf]
        %v5183 = vld [vmem:[%s641 + $0x70] sm:$0xf]
        %v5184 = vld [vmem:[%s641 + $0x74] sm:$0xf]
        %v5185 = vld [vmem:[%s641 + $0x78] sm:$0xf]
        %v5186 = vld [vmem:[%s641 + $0x7c] sm:$0xf]
        %v5187 = vld [vmem:[%s641 + $0x80] sm:$0xf]
        %v5188 = vld [vmem:[%s641 + $0x84] sm:$0xf]
        %v5189 = vld [vmem:[%s641 + $0x88] sm:$0xf]
        %v5190 = vld [vmem:[%s641 + $0x8c] sm:$0xf]
        %v5191 = vld [vmem:[%s641 + $0x90] sm:$0xf]
        %v5192 = vld [vmem:[%s641 + $0x94] sm:$0xf]
        %v5193 = vld [vmem:[%s641 + $0x98] sm:$0xf]
        %v5194 = vld [vmem:[%s641 + $0x9c] sm:$0xf]
        %v5195 = vld [vmem:[%s641 + $0xa0] sm:$0xf]
        %v5196 = vld [vmem:[%s641 + $0xa4] sm:$0xf]
        %v5197 = vld [vmem:[%s641 + $0xa8] sm:$0xf]
        %v5198 = vld [vmem:[%s641 + $0xac] sm:$0xf]
        %v5199 = vld [vmem:[%s641 + $0xb0] sm:$0xf]
        %v5200 = vld [vmem:[%s641 + $0xb4] sm:$0xf]
        %v5201 = vld [vmem:[%s641 + $0xb8] sm:$0xf]
        %v5202 = vld [vmem:[%s641 + $0xbc] sm:$0xf]
        %v5203 = vld [vmem:[%s641 + $0xc0] sm:$0xf]
        %v5204 = vld [vmem:[%s641 + $0xc4] sm:$0xf]
        %v5205 = vld [vmem:[%s641 + $0xc8] sm:$0xf]
        %v5206 = vld [vmem:[%s641 + $0xcc] sm:$0xf]
        %v5207 = vld [vmem:[%s641 + $0xd0] sm:$0xf]
        %v5208 = vld [vmem:[%s641 + $0xd4] sm:$0xf]
        %v5209 = vld [vmem:[%s641 + $0xd8] sm:$0xf]
        %v5210 = vld [vmem:[%s641 + $0xdc] sm:$0xf]
        %v5211 = vld [vmem:[%s641 + $0xe0] sm:$0xf]
        %v5212 = vld [vmem:[%s641 + $0xe4] sm:$0xf]
        %v5213 = vld [vmem:[%s641 + $0xe8] sm:$0xf]
        %v5214 = vld [vmem:[%s641 + $0xec] sm:$0xf]
        %v5215 = vld [vmem:[%s641 + $0xf0] sm:$0xf]
        %v5216 = vld [vmem:[%s641 + $0xf4] sm:$0xf]
        %v5217 = vld [vmem:[%s641 + $0xf8] sm:$0xf]
        %v5218 = vld [vmem:[%s641 + $0xfc] sm:$0xf]
        %v5219 = vld [vmem:[%s749] sm:$0x1]
        %v5221 = vlaneseq
        %v5222 = vshrl.u32 %v5221, 7
        %v5223 = vsub.s32 0, %v5222
        %v5224 = vrot.slane %v5219, %v5223
        %v5290 = vunpack.c.l.b16 %v5155
        %v5291 = vunpack.c.l.b16 %v5156
        %v5292 = vunpack.c.l.b16 %v5157
        %v5293 = vunpack.c.l.b16 %v5158
        %v5294 = vunpack.c.l.b16 %v5159
        %v5295 = vunpack.c.l.b16 %v5160
        %v5296 = vunpack.c.l.b16 %v5161
        %v5297 = vunpack.c.l.b16 %v5162
        %v5298 = vunpack.c.l.b16 %v5163
        %v5299 = vunpack.c.l.b16 %v5164
        %v5300 = vunpack.c.l.b16 %v5165
        %v5301 = vunpack.c.l.b16 %v5166
        %v5302 = vunpack.c.l.b16 %v5167
        %v5303 = vunpack.c.l.b16 %v5168
        %v5304 = vunpack.c.l.b16 %v5169
        %v5305 = vunpack.c.l.b16 %v5170
        %v5306 = vunpack.c.l.b16 %v5171
        %v5307 = vunpack.c.l.b16 %v5172
        %v5308 = vunpack.c.l.b16 %v5173
        %v5309 = vunpack.c.l.b16 %v5174
        %v5310 = vunpack.c.l.b16 %v5175
        %v5311 = vunpack.c.l.b16 %v5176
        %v5312 = vunpack.c.l.b16 %v5177
        %v5313 = vunpack.c.l.b16 %v5178
        %v5314 = vunpack.c.l.b16 %v5179
        %v5315 = vunpack.c.l.b16 %v5180
        %v5316 = vunpack.c.l.b16 %v5181
        %v5317 = vunpack.c.l.b16 %v5182
        %v5318 = vunpack.c.l.b16 %v5183
        %v5319 = vunpack.c.l.b16 %v5184
        %v5320 = vunpack.c.l.b16 %v5185
        %v5321 = vunpack.c.l.b16 %v5186
        %v5322 = vunpack.c.l.b16 %v5187
        %v5323 = vunpack.c.l.b16 %v5188
        %v5324 = vunpack.c.l.b16 %v5189
        %v5325 = vunpack.c.l.b16 %v5190
        %v5326 = vunpack.c.l.b16 %v5191
        %v5327 = vunpack.c.l.b16 %v5192
        %v5328 = vunpack.c.l.b16 %v5193
        %v5329 = vunpack.c.l.b16 %v5194
        %v5330 = vunpack.c.l.b16 %v5195
        %v5331 = vunpack.c.l.b16 %v5196
        %v5332 = vunpack.c.l.b16 %v5197
        %v5333 = vunpack.c.l.b16 %v5198
        %v5334 = vunpack.c.l.b16 %v5199
        %v5335 = vunpack.c.l.b16 %v5200
        %v5336 = vunpack.c.l.b16 %v5201
        %v5337 = vunpack.c.l.b16 %v5202
        %v5338 = vunpack.c.l.b16 %v5203
        %v5339 = vunpack.c.l.b16 %v5204
        %v5340 = vunpack.c.l.b16 %v5205
        %v5341 = vunpack.c.l.b16 %v5206
        %v5342 = vunpack.c.l.b16 %v5207
        %v5343 = vunpack.c.l.b16 %v5208
        %v5344 = vunpack.c.l.b16 %v5209
        %v5345 = vunpack.c.l.b16 %v5210
        %v5346 = vunpack.c.l.b16 %v5211
        %v5347 = vunpack.c.l.b16 %v5212
        %v5348 = vunpack.c.l.b16 %v5213
        %v5349 = vunpack.c.l.b16 %v5214
        %v5350 = vunpack.c.l.b16 %v5215
        %v5351 = vunpack.c.l.b16 %v5216
        %v5352 = vunpack.c.l.b16 %v5217
        %v5353 = vunpack.c.l.b16 %v5218
        %v5354 = vpack.c.b16 %v5291, %v5290
        %v5355 = vpack.c.b16 %v5293, %v5292
        %v5356 = vpack.c.b16 %v5295, %v5294
        %v5357 = vpack.c.b16 %v5297, %v5296
        %v5358 = vpack.c.b16 %v5299, %v5298
        %v5359 = vpack.c.b16 %v5301, %v5300
        %v5360 = vpack.c.b16 %v5303, %v5302
        %v5361 = vpack.c.b16 %v5305, %v5304
        %v5362 = vpack.c.b16 %v5307, %v5306
        %v5363 = vpack.c.b16 %v5309, %v5308
        %v5364 = vpack.c.b16 %v5311, %v5310
        %v5365 = vpack.c.b16 %v5313, %v5312
        %v5366 = vpack.c.b16 %v5315, %v5314
        %v5367 = vpack.c.b16 %v5317, %v5316
        %v5368 = vpack.c.b16 %v5319, %v5318
        %v5369 = vpack.c.b16 %v5321, %v5320
        %v5370 = vpack.c.b16 %v5323, %v5322
        %v5371 = vpack.c.b16 %v5325, %v5324
        %v5372 = vpack.c.b16 %v5327, %v5326
        %v5373 = vpack.c.b16 %v5329, %v5328
        %v5374 = vpack.c.b16 %v5331, %v5330
        %v5375 = vpack.c.b16 %v5333, %v5332
        %v5376 = vpack.c.b16 %v5335, %v5334
        %v5377 = vpack.c.b16 %v5337, %v5336
        %v5378 = vpack.c.b16 %v5339, %v5338
        %v5379 = vpack.c.b16 %v5341, %v5340
        %v5380 = vpack.c.b16 %v5343, %v5342
        %v5381 = vpack.c.b16 %v5345, %v5344
        %v5382 = vpack.c.b16 %v5347, %v5346
        %v5383 = vpack.c.b16 %v5349, %v5348
        %v5384 = vpack.c.b16 %v5351, %v5350
        %v5385 = vpack.c.b16 %v5353, %v5352
        %5418 = vmatprep.subr.bf16.mxu0 0
        %5419 = vmatpush1.bf16.msra.mxu0 %v5354
        %5420 = vmatprep.subr.bf16.mxu0 0
        %5421 = vmatpush1.bf16.msra.mxu0 %v5355
        %5422 = vmatprep.subr.bf16.mxu0 0
        %5423 = vmatpush1.bf16.msra.mxu0 %v5356
        %5424 = vmatprep.subr.bf16.mxu0 0
        %5425 = vmatpush1.bf16.msra.mxu0 %v5357
        %5426 = vmatprep.subr.bf16.mxu0 0
        %5427 = vmatpush1.bf16.msra.mxu0 %v5358
        %5428 = vmatprep.subr.bf16.mxu0 0
        %5429 = vmatpush1.bf16.msra.mxu0 %v5359
        %5430 = vmatprep.subr.bf16.mxu0 0
        %5431 = vmatpush1.bf16.msra.mxu0 %v5360
        %5432 = vmatprep.subr.bf16.mxu0 0
        %5433 = vmatpush1.bf16.msra.mxu0 %v5361
        %5434 = vmatprep.subr.bf16.mxu0 0
        %5435 = vmatpush1.bf16.msra.mxu0 %v5362
        %5436 = vmatprep.subr.bf16.mxu0 0
        %5437 = vmatpush1.bf16.msra.mxu0 %v5363
        %5438 = vmatprep.subr.bf16.mxu0 0
        %5439 = vmatpush1.bf16.msra.mxu0 %v5364
        %5440 = vmatprep.subr.bf16.mxu0 0
        %5441 = vmatpush1.bf16.msra.mxu0 %v5365
        %5442 = vmatprep.subr.bf16.mxu0 0
        %5443 = vmatpush1.bf16.msra.mxu0 %v5366
        %5444 = vmatprep.subr.bf16.mxu0 0
        %5445 = vmatpush1.bf16.msra.mxu0 %v5367
        %5446 = vmatprep.subr.bf16.mxu0 0
        %5447 = vmatpush1.bf16.msra.mxu0 %v5368
        %5448 = vmatprep.subr.bf16.mxu0 0
        %5449 = vmatpush1.bf16.msra.mxu0 %v5369
        %5450 = vmatprep.mubr.bf16.mxu0 %v5152
        %5451 = vmatmul.mubr.bf16.gmra.mrb[0].mxu0 %v5151
        %v5452 = vpop.f32.mrb[0].mxu0
        %v5453 = vadd.f32 %v5224, %v5452
        %v5454 = vpop.f32.mrb[0].mxu0
        %v5455 = vpop.f32.mrb[0].mxu0
        %v5456 = vpop.f32.mrb[0].mxu0
        %5457 = vdwg.mxu0
        %5458 = vmatprep.subr.bf16.mxu0 0
        %5459 = vmatpush1.bf16.msra.mxu0 %v5370
        %5460 = vmatprep.subr.bf16.mxu0 0
        %5461 = vmatpush1.bf16.msra.mxu0 %v5371
        %5462 = vmatprep.subr.bf16.mxu0 0
        %5463 = vmatpush1.bf16.msra.mxu0 %v5372
        %5464 = vmatprep.subr.bf16.mxu0 0
        %5465 = vmatpush1.bf16.msra.mxu0 %v5373
        %5466 = vmatprep.subr.bf16.mxu0 0
        %5467 = vmatpush1.bf16.msra.mxu0 %v5374
        %5468 = vmatprep.subr.bf16.mxu0 0
        %5469 = vmatpush1.bf16.msra.mxu0 %v5375
        %5470 = vmatprep.subr.bf16.mxu0 0
        %5471 = vmatpush1.bf16.msra.mxu0 %v5376
        %5472 = vmatprep.subr.bf16.mxu0 0
        %5473 = vmatpush1.bf16.msra.mxu0 %v5377
        %5474 = vmatprep.subr.bf16.mxu0 0
        %5475 = vmatpush1.bf16.msra.mxu0 %v5378
        %5476 = vmatprep.subr.bf16.mxu0 0
        %5477 = vmatpush1.bf16.msra.mxu0 %v5379
        %5478 = vmatprep.subr.bf16.mxu0 0
        %5479 = vmatpush1.bf16.msra.mxu0 %v5380
        %5480 = vmatprep.subr.bf16.mxu0 0
        %5481 = vmatpush1.bf16.msra.mxu0 %v5381
        %5482 = vmatprep.subr.bf16.mxu0 0
        %5483 = vmatpush1.bf16.msra.mxu0 %v5382
        %5484 = vmatprep.subr.bf16.mxu0 0
        %5485 = vmatpush1.bf16.msra.mxu0 %v5383
        %5486 = vmatprep.subr.bf16.mxu0 0
        %5487 = vmatpush1.bf16.msra.mxu0 %v5384
        %5488 = vmatprep.subr.bf16.mxu0 0
        %5489 = vmatpush1.bf16.msra.mxu0 %v5385
        %5490 = vmatprep.mubr.bf16.mxu0 %v5154
        %5491 = vmatmul.mubr.bf16.gmra.mrb[0].mxu0 %v5153
        %v5492 = vpop.f32.mrb[0].mxu0
        %v5493 = vadd.f32 %v5453, %v5492
        %v5494 = vpop.f32.mrb[0].mxu0
        %v5495 = vpop.f32.mrb[0].mxu0
        %v5496 = vpop.f32.mrb[0].mxu0
        %5497 = vdwg.mxu0
        %v5498 = vadd.f32 %v4790, %v5493
        %5499 = vst [vmem:[#allocation2] sm:$0xff] %v5498
        %p5500 = scmp.eq.s32.totalorder %s42, 1
        // Predicated region
        $region101: #{tpu_custom_call.1} parent=75 // pred_check
          %p5501 = pneg %p5500
        $region102: #{tpu_custom_call.1} parent=75 // pred_check_branch
          %5503 = sbr.rel (%p5501) target = $region104
        $region103: #{tpu_custom_call.1} parent=75 // pred_region
          %v5504 = vld [vmem:[%s12] sm:$0x1]
          %v5505 = vld [vmem:[%s13] sm:$0x1]
          %5506 = vadd.xlane.f32.xlu0 %v5498
          %v5507 = vpop.xlane.xlu0 %5506
          %v5508 = vmul.f32 %v5507, %v762
          %v5509 = vsub.f32 %v5498, %v5508
          %v5510 = vmul.f32 %v5509, %v5509
          %5511 = vadd.xlane.f32.xlu0 %v5510
          %v5512 = vpop.xlane.xlu0 %5511
          %v5513 = vmul.f32 %v5512, %v762
          %v5514 = vadd.f32 %v5513, 1e-05
          %v5515 = vrsqrt.pop %v5514
          %v5516 = vmul.f32 %v5509, %v5515
          %v5518 = vlaneseq
          %v5519 = vshrl.u32 %v5518, 7
          %v5520 = vsub.s32 0, %v5519
          %v5521 = vrot.slane %v5504, %v5520
          %v5523 = vmul.f32 %v5516, %v5521
          %v5525 = vlaneseq
          %v5526 = vshrl.u32 %v5525, 7
          %v5527 = vsub.s32 0, %v5526
          %v5528 = vrot.slane %v5505, %v5527
          %v5530 = vadd.f32 %v5523, %v5528
          %5531 = vst [vmem:[%s727] sm:$0xff] %v5530
        $region104: #{tpu_custom_call.1} parent=75 // pred_fallthru
          _
        %s5532 = sand.u32 %s411, 1
        %s5533 = scalar_lea.sflag [#allocation5], %s5532
        %s5534 = sand.u32 %s411, 1
        %s5535 = smul.addr %s5534, 8
        %s5536 = scalar_lea.vmem [#allocation12], %s5535
        // Predicated region
        $region105: #{tpu_custom_call.1} parent=75 // pred_check
          %p5537 = pneg %p421
        $region106: #{tpu_custom_call.1} parent=75 // pred_check_branch
          %5539 = sbr.rel (%p5537) target = $region108
        $region107: #{tpu_custom_call.1} parent=75 // pred_region
          %s5541 = ssub.s32 128, 128
          %5542 = vsyncadd %s5533, %s5541
          %s5543 = smul.addr %s41, 128
          %s5544 = scalar_lea.hbm %s14, %s5543
          %s5546 = sshll.u32 %s5536, 4
          %s5547 = int_to_ptr.vmem [resolvable:$true] %s5546
          %5549 = dma.vmem_to_hbm [thread:$0]  %s5547, 128, %s5544, %s5533
        $region108: #{tpu_custom_call.1} parent=75 // pred_fallthru
          _
      $region76: #{tpu_custom_call.1} parent=5 // pred_fallthru
        _
      %p5550 = scmp.le.s32.totalorder 2, %s32
      // Predicated region
      $region109: #{tpu_custom_call.1} parent=5 // pred_check
        %p5551 = pneg %p5550
      $region110: #{tpu_custom_call.1} parent=5 // pred_check_branch
        %5553 = sbr.rel (%p5551) target = $region112
      $region111: #{tpu_custom_call.1} parent=5 // pred_region
        %s5554 = ssub.s32 %s32, 2
        // Predicated region
        $region113: #{tpu_custom_call.1} parent=111 // pred_check
          %p5555 = pneg %p427
        $region114: #{tpu_custom_call.1} parent=111 // pred_check_branch
          %5557 = sbr.rel (%p5555) target = $region116
        $region115: #{tpu_custom_call.1} parent=111 // pred_region
          %s5558 = sand.u32 %s412, 1
          %s5559 = scalar_lea.sflag [#allocation5], %s5558
          %s5560 = sand.u32 %s412, 1
          %s5561 = smul.addr %s5560, 8
          %s5562 = scalar_lea.vmem [#allocation12], %s5561
          %5563 = dma.done %s5559, 128
        $region116: #{tpu_custom_call.1} parent=111 // pred_fallthru
          _
      $region112: #{tpu_custom_call.1} parent=5 // pred_fallthru
        _
    $region6: #{tpu_custom_call.1} parent=1 // loop_footer
      %s36 = sadd.s32 1, %s32
    $region7: #{tpu_custom_call.1} parent=1 // loop_footer_branch
      %31 = sbr.rel target = $region3
    $region8: #{tpu_custom_call.1} parent=1 // loop_exit
      _
    %5564 = vsyncpa [#allocation4], 1
    %s5565 = scalar_lea.sflag [#allocation4], 1
    %5566 = vsyncpa %s5565, 1
    %5567 = vsyncpa [#allocation7], 1
    %s5568 = scalar_lea.sflag [#allocation7], 1
    %5569 = vsyncpa %s5568, 1
    %5570 = vsyncpa [#allocation10], 1
    %s5571 = scalar_lea.sflag [#allocation10], 1
    %5572 = vsyncpa %s5571, 1
    %5573 = vsyncpa [#allocation5], 1
    %s5574 = scalar_lea.sflag [#allocation5], 1
    %5575 = vsyncpa %s5574, 1

</llo_original>
